<compile_context>
chip_gen: v7x
topology: tpu7x:2x2x1
jax: 0.10.0
libtpu: 0.0.40
codegen_flags: <defaults>
</compile_context>

<pallas_src>
import functools
import math

import numpy as np
import jax
import jax.numpy as jnp
from jax.experimental import pallas as pl
from jax.experimental.pallas import tpu as pltpu


def _layernorm(x, gamma, beta, eps=1e-5):
    mean = jnp.mean(x, axis=-1, keepdims=True)
    var = jnp.mean((x - mean) ** 2, axis=-1, keepdims=True)
    return (x - mean) * jax.lax.rsqrt(var + eps) * gamma + beta


def _gelu_exact(x):
    # PyTorch nn.GELU() default = exact erf formulation.
    return 0.5 * x * (1.0 + jax.lax.erf(x * (1.0 / np.sqrt(2.0))))


def transformer_block_kernel(
    x_full_ref,                 # (1, S, D) f32   full sequence (only read at qi == 0)
    x_tile_ref,                 # (1, tq, D) f32  residual tile for this grid step
    ln1_g_ref, ln1_b_ref,       # (1, D) f32
    wqkv_ref, bqkv_ref,         # (D, 3D) bf16, (1, 3D) f32
    wo_ref, bo_ref,             # (D, D) bf16,  (1, D) f32
    ln2_g_ref, ln2_b_ref,       # (1, D) f32
    w1_ref, b1_ref,             # (D, H) bf16,  (1, H) f32
    w2_ref, b2_ref,             # (H, D) bf16,  (1, D) f32
    ln3_g_ref, ln3_b_ref,       # (1, D) f32
    o_ref,                      # (1, tq, D)
    q_s, k_s, v_s,              # (heads, S, hd) bf16 VMEM scratch (persist across q tiles)
    ctx_s,                      # (tq, D) bf16 VMEM scratch (concat of head contexts)
    *, heads, tq, mlp_chunk,
):
    S = x_full_ref.shape[1]
    D = x_full_ref.shape[2]
    hidden = w1_ref.shape[1]
    hd = D // heads
    scale = float(1.0 / np.sqrt(hd))
    qi = pl.program_id(1)

    # ---- fused QKV projection: computed once per batch element, cached head-major ----
    @pl.when(qi == 0)
    def _():
        xn = _layernorm(x_full_ref[0], ln1_g_ref[...], ln1_b_ref[...])         # (S, D) f32
        qkv = jnp.dot(xn.astype(jnp.bfloat16), wqkv_ref[...],
                      preferred_element_type=jnp.float32) + bqkv_ref[...]      # (S, 3D) f32
        for h in range(heads):                                                 # static
            q_s[h] = (qkv[:, h * hd:(h + 1) * hd] * scale).astype(jnp.bfloat16)
            k_s[h] = qkv[:, D + h * hd:D + (h + 1) * hd].astype(jnp.bfloat16)
            v_s[h] = qkv[:, 2 * D + h * hd:2 * D + (h + 1) * hd].astype(jnp.bfloat16)

    q_off = pl.multiple_of(qi * tq, tq)
    x_t = x_tile_ref[0]                                                        # (tq, D) f32

    # ---- attention: per-head scores/softmax/context; contexts concatenated in VMEM,
    # ---- then ONE (tq, D) @ (D, D) output projection.
    # TODO(synk): for large head counts switch to lax.fori_loop(..., unroll=2) over heads.
    for h in range(heads):                                                     # static, unrolled
        q_h = q_s[h, pl.ds(q_off, tq), :]                                      # (tq, hd) bf16
        k_h = k_s[h]                                                           # (S, hd)  bf16
        v_h = v_s[h]                                                           # (S, hd)  bf16
        s_h = jax.lax.dot_general(q_h, k_h, (((1,), (1,)), ((), ())),
                                  preferred_element_type=jnp.float32)          # (tq, S)
        s_h = s_h - jnp.max(s_h, axis=-1, keepdims=True)
        p_h = jnp.exp(s_h)
        p_h = p_h * pl.reciprocal(jnp.sum(p_h, axis=-1, keepdims=True), approx=True)
        ctx_h = jnp.dot(p_h.astype(jnp.bfloat16), v_h,
                        preferred_element_type=jnp.float32)                    # (tq, hd)
        ctx_s[:, h * hd:(h + 1) * hd] = ctx_h.astype(jnp.bfloat16)

    attn = jnp.dot(ctx_s[...], wo_ref[...],
                   preferred_element_type=jnp.float32) + bo_ref[...]           # (tq, D) f32

    x1 = x_t + attn                     # dropout(attn_output) is identity in eval mode

    # ---- MLP: de-chunked by default (full (tq, hidden) intermediate), chunked only
    # ---- when the intermediate would not fit VMEM headroom.
    xn2 = _layernorm(x1, ln2_g_ref[...], ln2_b_ref[...]).astype(jnp.bfloat16)
    if mlp_chunk >= hidden:
        h_act = jnp.dot(xn2, w1_ref[...],
                        preferred_element_type=jnp.float32) + b1_ref[...]      # (tq, hidden)
        h_act = _gelu_exact(h_act)
        mlp = jnp.dot(h_act.astype(jnp.bfloat16), w2_ref[...],
                      preferred_element_type=jnp.float32) + b2_ref[...]
    else:
        mlp = jnp.zeros((tq, D), jnp.float32)
        for c0 in range(0, hidden, mlp_chunk):                                 # static, unrolled
            cw = min(mlp_chunk, hidden - c0)
            h_c = jnp.dot(xn2, w1_ref[:, c0:c0 + cw],
                          preferred_element_type=jnp.float32) + b1_ref[:, c0:c0 + cw]
            h_c = _gelu_exact(h_c)
            mlp = mlp + jnp.dot(h_c.astype(jnp.bfloat16), w2_ref[c0:c0 + cw, :],
                                preferred_element_type=jnp.float32)
        mlp = mlp + b2_ref[...]

    x2 = x1 + mlp
    o_ref[0] = _layernorm(x2, ln3_g_ref[...], ln3_b_ref[...]).astype(o_ref.dtype)


def transformer_block(x, params, heads, *, tq=None, mlp_chunk=None):
    """x: (B, S, D) f32. params: list from pack_params() (bf16 matmul weights, f32 rest)."""
    B, S, D = x.shape
    assert D % heads == 0
    hd = D // heads
    hidden = params[8].shape[1]

    # Generation-aware VMEM limit (leave headroom for Mosaic scratch / pipeline buffers).
    try:
        vmem_cap = pltpu.get_tpu_info().vmem_capacity_bytes
    except Exception:
        vmem_cap = 128 * 1024 * 1024
    vmem_limit = max(32 * 1024 * 1024,
                     min(vmem_cap - 16 * 1024 * 1024, 100 * 1024 * 1024))

    # Generation-aware query tile: v6e MXU is 2x256x256 -> M=256; keep 128 on v5e/v7x.
    if tq is None:
        try:
            kind = jax.devices()[0].device_kind.lower()
        except Exception:
            kind = ""
        tq = 256 if "v6" in kind else 128
    tq = min(tq, S)
    if S % tq != 0:
        tq = math.gcd(S, tq)

    if mlp_chunk is None:
        # Full (tq, hidden) f32 intermediate unless it would exceed ~8 MiB of VMEM.
        mlp_chunk = hidden if tq * hidden * 4 <= 8 * 1024 * 1024 else 2048
    mlp_chunk = min(mlp_chunk, hidden)

    kernel = functools.partial(transformer_block_kernel,
                               heads=heads, tq=tq, mlp_chunk=mlp_chunk)

    # Advisory cost estimate for XLA scheduling around the custom call.
    flops = (2 * B * S * D * 3 * D          # fused QKV projection
             + 4 * B * S * S * D            # scores + context over all heads
             + 2 * B * S * D * D            # output projection
             + 4 * B * S * D * hidden)      # MLP
    transcendentals = B * heads * S * S + B * S * hidden
    bytes_accessed = (2 * B * S * D * 4
                      + sum(int(np.prod(p.shape)) * p.dtype.itemsize for p in params))

    def build(single_buffer_invariants):
        pmode = pl.Buffered(1) if single_buffer_invariants else None

        def rep_spec(shape):
            zeros = (0,) * len(shape)
            if pmode is None:
                return pl.BlockSpec(shape, lambda b, qi: zeros)
            return pl.BlockSpec(shape, lambda b, qi: zeros, pipeline_mode=pmode)

        if pmode is None:
            x_full_spec = pl.BlockSpec((1, S, D), lambda b, qi: (b, 0, 0))
        else:
            # Only re-fetched when b changes; single-buffer to save S*D*4 bytes of VMEM.
            x_full_spec = pl.BlockSpec((1, S, D), lambda b, qi: (b, 0, 0),
                                       pipeline_mode=pmode)

        in_specs = [x_full_spec,
                    pl.BlockSpec((1, tq, D), lambda b, qi: (b, qi, 0))]
        in_specs += [rep_spec(p.shape) for p in params]
        out_specs = pl.BlockSpec((1, tq, D), lambda b, qi: (b, qi, 0))

        return pl.pallas_call(
            kernel,
            out_shape=jax.ShapeDtypeStruct((B, S, D), x.dtype),
            grid_spec=pltpu.PrefetchScalarGridSpec(
                num_scalar_prefetch=0,
                grid=(B, S // tq),
                in_specs=in_specs,
                out_specs=out_specs,
                scratch_shapes=[
                    pltpu.VMEM((heads, S, hd), jnp.bfloat16),   # Q (scaled), head-major
                    pltpu.VMEM((heads, S, hd), jnp.bfloat16),   # K, head-major
                    pltpu.VMEM((heads, S, hd), jnp.bfloat16),   # V, head-major
                    pltpu.VMEM((tq, D), jnp.bfloat16),          # concatenated head contexts
                ],
            ),
            compiler_params=pltpu.CompilerParams(
                dimension_semantics=("parallel", "arbitrary"),
                vmem_limit_bytes=int(vmem_limit),
            ),
            cost_estimate=pl.CostEstimate(flops=flops,
                                          transcendentals=transcendentals,
                                          bytes_accessed=bytes_accessed),
        )

    try:
        return build(True)(x, x, *params)
    except Exception:
        # Fallback if this JAX build rejects pl.Buffered(1) on pallas_call BlockSpecs.
        return build(False)(x, x, *params)


def make_weights(key, dim, heads, mlp_ratio=4):
    """Deterministic synthetic weights (PyTorch-equivalent, pre-transposed: y = x @ W_t + b).
    Matmul weights are rounded to bf16-representable values so kernel and reference agree."""
    hidden = dim * mlp_ratio
    ks = jax.random.split(key, 12)
    s = 0.1

    def mat(k, shape):
        w = s * jax.random.normal(k, shape, jnp.float32)
        return w.astype(jnp.bfloat16).astype(jnp.float32)

    return {
        "ln1_g": jnp.ones((1, dim), jnp.float32), "ln1_b": jnp.zeros((1, dim), jnp.float32),
        "wq": mat(ks[0], (dim, dim)), "wk": mat(ks[1], (dim, dim)), "wv": mat(ks[2], (dim, dim)),
        "bq": s * jax.random.normal(ks[3], (1, dim), jnp.float32),
        "bk": s * jax.random.normal(ks[4], (1, dim), jnp.float32),
        "bv": s * jax.random.normal(ks[5], (1, dim), jnp.float32),
        "wo": mat(ks[6], (dim, dim)),
        "bo": s * jax.random.normal(ks[7], (1, dim), jnp.float32),
        "ln2_g": jnp.ones((1, dim), jnp.float32), "ln2_b": jnp.zeros((1, dim), jnp.float32),
        "w1": mat(ks[8], (dim, hidden)),
        "b1": s * jax.random.normal(ks[9], (1, hidden), jnp.float32),
        "w2": mat(ks[10], (hidden, dim)),
        "b2": s * jax.random.normal(ks[11], (1, dim), jnp.float32),
        "ln3_g": jnp.ones((1, dim), jnp.float32), "ln3_b": jnp.zeros((1, dim), jnp.float32),
    }


def pack_params(w):
    """Kernel parameter list: fused QKV weight/bias, bf16 matmul weights, f32 biases/LN."""
    wqkv = jnp.concatenate([w["wq"], w["wk"], w["wv"]], axis=1).astype(jnp.bfloat16)
    bqkv = jnp.concatenate([w["bq"], w["bk"], w["bv"]], axis=1)
    return [
        w["ln1_g"], w["ln1_b"],
        wqkv, bqkv,
        w["wo"].astype(jnp.bfloat16), w["bo"],
        w["ln2_g"], w["ln2_b"],
        w["w1"].astype(jnp.bfloat16), w["b1"],
        w["w2"].astype(jnp.bfloat16), w["b2"],
        w["ln3_g"], w["ln3_b"],
    ]


def reference(x, w, heads):
    """Pure-JAX f32 reference matching the PyTorch module (eval mode)."""
    B, S, D = x.shape
    hd = D // heads

    def ln(y, g, b):
        mu = y.mean(-1, keepdims=True)
        var = ((y - mu) ** 2).mean(-1, keepdims=True)
        return (y - mu) / jnp.sqrt(var + 1e-5) * g + b

    xn = ln(x, w["ln1_g"], w["ln1_b"])
    q = xn @ w["wq"] + w["bq"]
    k = xn @ w["wk"] + w["bk"]
    v = xn @ w["wv"] + w["bv"]
    qh = q.reshape(B, S, heads, hd)
    kh = k.reshape(B, S, heads, hd)
    vh = v.reshape(B, S, heads, hd)
    scores = jnp.einsum("bqhd,bkhd->bhqk", qh, kh) / np.sqrt(hd)
    p = jax.nn.softmax(scores, axis=-1)
    ctx = jnp.einsum("bhqk,bkhd->bqhd", p, vh).reshape(B, S, D)
    attn = ctx @ w["wo"] + w["bo"]
    x1 = x + attn
    xn2 = ln(x1, w["ln2_g"], w["ln2_b"])
    h = jax.nn.gelu(xn2 @ w["w1"] + w["b1"], approximate=False)
    mlp = h @ w["w2"] + w["b2"]
    x2 = x1 + mlp
    return ln(x2, w["ln3_g"], w["ln3_b"])


if __name__ == "__main__":
    B, S, D, HEADS = 2, 8, 32, 4
    key = jax.random.PRNGKey(0)
    kx, kw = jax.random.split(key)
    x = jax.random.normal(kx, (B, S, D), jnp.float32)
    w = make_weights(kw, D, HEADS, mlp_ratio=4)
    params = pack_params(w)

    out = transformer_block(x, params, HEADS)
    out = jax.block_until_ready(out)

    ref = reference(x, w, HEADS)
    assert out.shape == (B, S, D)
    # bf16 matmul operands (f32 accumulation) -> allow bf16-level tolerance.
    np.testing.assert_allclose(np.asarray(out), np.asarray(ref), rtol=5e-2, atol=5e-2)
    print("KERNEL_OK")
</pallas_src>

<mosaic_0001>
module attributes {stable_mosaic.version = 11 : i64} {
  func.func @transformer_block_kernel(%arg0: i32, %arg1: i32, %arg2: memref<1x8x32xf32, #tpu.memory_space<vmem>>, %arg3: memref<1x8x32xf32, #tpu.memory_space<vmem>>, %arg4: memref<1x32xf32, #tpu.memory_space<vmem>>, %arg5: memref<1x32xf32, #tpu.memory_space<vmem>>, %arg6: memref<32x96xbf16, #tpu.memory_space<vmem>>, %arg7: memref<1x96xf32, #tpu.memory_space<vmem>>, %arg8: memref<32x32xbf16, #tpu.memory_space<vmem>>, %arg9: memref<1x32xf32, #tpu.memory_space<vmem>>, %arg10: memref<1x32xf32, #tpu.memory_space<vmem>>, %arg11: memref<1x32xf32, #tpu.memory_space<vmem>>, %arg12: memref<32x128xbf16, #tpu.memory_space<vmem>>, %arg13: memref<1x128xf32, #tpu.memory_space<vmem>>, %arg14: memref<128x32xbf16, #tpu.memory_space<vmem>>, %arg15: memref<1x32xf32, #tpu.memory_space<vmem>>, %arg16: memref<1x32xf32, #tpu.memory_space<vmem>>, %arg17: memref<1x32xf32, #tpu.memory_space<vmem>>, %arg18: memref<1x8x32xf32, #tpu.memory_space<vmem>>, %arg19: memref<4x8x8xbf16, #tpu.memory_space<vmem>>, %arg20: memref<4x8x8xbf16, #tpu.memory_space<vmem>>, %arg21: memref<4x8x8xbf16, #tpu.memory_space<vmem>>, %arg22: memref<8x32xbf16, #tpu.memory_space<vmem>>) attributes {dimension_semantics = [#tpu.dimension_semantics<parallel>, #tpu.dimension_semantics<arbitrary>], iteration_bounds = array<i64: 2, 1>, scalar_prefetch = 0 : i64, scratch_operands = 4 : i64, tpu.core_type = #tpu.core_type<tc>, window_params = [{pipeline_mode = #tpu.pipeline_mode<synchronous>, transform_indices = @transform_0, window_bounds = array<i64: 1, 8, 32>}, {transform_indices = @transform_1, window_bounds = array<i64: 1, 8, 32>}, {pipeline_mode = #tpu.pipeline_mode<synchronous>, transform_indices = @transform_2, window_bounds = array<i64: 1, 32>}, {pipeline_mode = #tpu.pipeline_mode<synchronous>, transform_indices = @transform_3, window_bounds = array<i64: 1, 32>}, {pipeline_mode = #tpu.pipeline_mode<synchronous>, transform_indices = @transform_4, window_bounds = array<i64: 32, 96>}, {pipeline_mode = #tpu.pipeline_mode<synchronous>, transform_indices = @transform_5, window_bounds = array<i64: 1, 96>}, {pipeline_mode = #tpu.pipeline_mode<synchronous>, transform_indices = @transform_6, window_bounds = array<i64: 32, 32>}, {pipeline_mode = #tpu.pipeline_mode<synchronous>, transform_indices = @transform_7, window_bounds = array<i64: 1, 32>}, {pipeline_mode = #tpu.pipeline_mode<synchronous>, transform_indices = @transform_8, window_bounds = array<i64: 1, 32>}, {pipeline_mode = #tpu.pipeline_mode<synchronous>, transform_indices = @transform_9, window_bounds = array<i64: 1, 32>}, {pipeline_mode = #tpu.pipeline_mode<synchronous>, transform_indices = @transform_10, window_bounds = array<i64: 32, 128>}, {pipeline_mode = #tpu.pipeline_mode<synchronous>, transform_indices = @transform_11, window_bounds = array<i64: 1, 128>}, {pipeline_mode = #tpu.pipeline_mode<synchronous>, transform_indices = @transform_12, window_bounds = array<i64: 128, 32>}, {pipeline_mode = #tpu.pipeline_mode<synchronous>, transform_indices = @transform_13, window_bounds = array<i64: 1, 32>}, {pipeline_mode = #tpu.pipeline_mode<synchronous>, transform_indices = @transform_14, window_bounds = array<i64: 1, 32>}, {pipeline_mode = #tpu.pipeline_mode<synchronous>, transform_indices = @transform_15, window_bounds = array<i64: 1, 32>}, {transform_indices = @transform_16, window_bounds = array<i64: 1, 8, 32>}]} {
    %c0_i32 = arith.constant 0 : i32
    %0 = arith.cmpi eq, %arg1, %c0_i32 : i32
    %1 = arith.extui %0 : i1 to i32
    %c0_i32_0 = arith.constant 0 : i32
    %2 = arith.cmpi ne, %1, %c0_i32_0 : i32
    scf.if %2 {
      %c0_93 = arith.constant 0 : index
      %c0_94 = arith.constant 0 : index
      %c0_95 = arith.constant 0 : index
      %174 = vector.load %arg2[%c0_93, %c0_94, %c0_95] : memref<1x8x32xf32, #tpu.memory_space<vmem>>, vector<1x8x32xf32>
      %175 = vector.shape_cast %174 : vector<1x8x32xf32> to vector<8x32xf32>
      %c0_96 = arith.constant 0 : index
      %c0_97 = arith.constant 0 : index
      %176 = vector.load %arg4[%c0_96, %c0_97] : memref<1x32xf32, #tpu.memory_space<vmem>>, vector<1x32xf32>
      %c0_98 = arith.constant 0 : index
      %c0_99 = arith.constant 0 : index
      %177 = vector.load %arg5[%c0_98, %c0_99] : memref<1x32xf32, #tpu.memory_space<vmem>>, vector<1x32xf32>
      %cst_100 = arith.constant dense<0.000000e+00> : vector<8xf32>
      %178 = vector.multi_reduction <add>, %175, %cst_100 [1] : vector<8x32xf32> to vector<8xf32>
      %179 = vector.shape_cast %178 : vector<8xf32> to vector<8x1xf32>
      %cst_101 = arith.constant 3.200000e+01 : f32
      %180 = vector.broadcast %cst_101 : f32 to vector<8x1xf32>
      %181 = arith.divf %179, %180 : vector<8x1xf32>
      %182 = vector.broadcast %181 : vector<8x1xf32> to vector<8x32xf32>
      %183 = arith.subf %175, %182 : vector<8x32xf32>
      %184 = arith.mulf %183, %183 : vector<8x32xf32>
      %cst_102 = arith.constant dense<0.000000e+00> : vector<8xf32>
      %185 = vector.multi_reduction <add>, %184, %cst_102 [1] : vector<8x32xf32> to vector<8xf32>
      %186 = vector.shape_cast %185 : vector<8xf32> to vector<8x1xf32>
      %cst_103 = arith.constant 3.200000e+01 : f32
      %187 = vector.broadcast %cst_103 : f32 to vector<8x1xf32>
      %188 = arith.divf %186, %187 : vector<8x1xf32>
      %189 = vector.broadcast %181 : vector<8x1xf32> to vector<8x32xf32>
      %190 = arith.subf %175, %189 : vector<8x32xf32>
      %cst_104 = arith.constant 9.99999974E-6 : f32
      %191 = vector.broadcast %cst_104 : f32 to vector<8x1xf32>
      %192 = arith.addf %188, %191 : vector<8x1xf32>
      %193 = math.rsqrt %192 : vector<8x1xf32>
      %194 = vector.broadcast %193 : vector<8x1xf32> to vector<8x32xf32>
      %195 = arith.mulf %190, %194 : vector<8x32xf32>
      %196 = vector.broadcast %176 : vector<1x32xf32> to vector<8x32xf32>
      %197 = arith.mulf %195, %196 : vector<8x32xf32>
      %198 = vector.broadcast %177 : vector<1x32xf32> to vector<8x32xf32>
      %199 = arith.addf %197, %198 : vector<8x32xf32>
      %200 = arith.truncf %199 : vector<8x32xf32> to vector<8x32xbf16>
      %c0_105 = arith.constant 0 : index
      %c0_106 = arith.constant 0 : index
      %201 = vector.load %arg6[%c0_105, %c0_106] : memref<32x96xbf16, #tpu.memory_space<vmem>>, vector<32x96xbf16>
      %cst_107 = arith.constant dense<0.000000e+00> : vector<8x96xf32>
      %202 = tpu.matmul %200, %201, %cst_107 {dimension_numbers = #tpu.dot_dimension_numbers<[1], [0], [0], [1], [0, 0, 1, 1], [], []>} : vector<8x32xbf16>, vector<32x96xbf16>, vector<8x96xf32> -> vector<8x96xf32>
      %c0_108 = arith.constant 0 : index
      %c0_109 = arith.constant 0 : index
      %203 = vector.load %arg7[%c0_108, %c0_109] : memref<1x96xf32, #tpu.memory_space<vmem>>, vector<1x96xf32>
      %204 = vector.broadcast %203 : vector<1x96xf32> to vector<8x96xf32>
      %205 = arith.addf %202, %204 : vector<8x96xf32>
      %206 = vector.extract_strided_slice %205 {offsets = [0, 0], sizes = [8, 8], strides = [1, 1]} : vector<8x96xf32> to vector<8x8xf32>
      %cst_110 = arith.constant 0.353553385 : f32
      %207 = vector.broadcast %cst_110 : f32 to vector<8x8xf32>
      %208 = arith.mulf %206, %207 : vector<8x8xf32>
      %209 = arith.truncf %208 : vector<8x8xf32> to vector<8x8xbf16>
      %c0_111 = arith.constant 0 : index
      %c0_112 = arith.constant 0 : index
      %c0_113 = arith.constant 0 : index
      %210 = vector.load %arg19[%c0_111, %c0_112, %c0_113] : memref<4x8x8xbf16, #tpu.memory_space<vmem>>, vector<1x8x8xbf16>
      %211 = vector.shape_cast %210 : vector<1x8x8xbf16> to vector<8x8xbf16>
      %212 = vector.shape_cast %209 : vector<8x8xbf16> to vector<1x8x8xbf16>
      tpu.vector_store %arg19[%c0_111, %c0_112, %c0_113], %212 {strides = array<i32>} : memref<4x8x8xbf16, #tpu.memory_space<vmem>>, vector<1x8x8xbf16>,
      %213 = vector.extract_strided_slice %205 {offsets = [0, 32], sizes = [8, 8], strides = [1, 1]} : vector<8x96xf32> to vector<8x8xf32>
      %214 = arith.truncf %213 : vector<8x8xf32> to vector<8x8xbf16>
      %c0_114 = arith.constant 0 : index
      %c0_115 = arith.constant 0 : index
      %c0_116 = arith.constant 0 : index
      %215 = vector.load %arg20[%c0_114, %c0_115, %c0_116] : memref<4x8x8xbf16, #tpu.memory_space<vmem>>, vector<1x8x8xbf16>
      %216 = vector.shape_cast %215 : vector<1x8x8xbf16> to vector<8x8xbf16>
      %217 = vector.shape_cast %214 : vector<8x8xbf16> to vector<1x8x8xbf16>
      tpu.vector_store %arg20[%c0_114, %c0_115, %c0_116], %217 {strides = array<i32>} : memref<4x8x8xbf16, #tpu.memory_space<vmem>>, vector<1x8x8xbf16>,
      %218 = vector.extract_strided_slice %205 {offsets = [0, 64], sizes = [8, 8], strides = [1, 1]} : vector<8x96xf32> to vector<8x8xf32>
      %219 = arith.truncf %218 : vector<8x8xf32> to vector<8x8xbf16>
      %c0_117 = arith.constant 0 : index
      %c0_118 = arith.constant 0 : index
      %c0_119 = arith.constant 0 : index
      %220 = vector.load %arg21[%c0_117, %c0_118, %c0_119] : memref<4x8x8xbf16, #tpu.memory_space<vmem>>, vector<1x8x8xbf16>
      %221 = vector.shape_cast %220 : vector<1x8x8xbf16> to vector<8x8xbf16>
      %222 = vector.shape_cast %219 : vector<8x8xbf16> to vector<1x8x8xbf16>
      tpu.vector_store %arg21[%c0_117, %c0_118, %c0_119], %222 {strides = array<i32>} : memref<4x8x8xbf16, #tpu.memory_space<vmem>>, vector<1x8x8xbf16>,
      %223 = vector.extract_strided_slice %205 {offsets = [0, 8], sizes = [8, 8], strides = [1, 1]} : vector<8x96xf32> to vector<8x8xf32>
      %cst_120 = arith.constant 0.353553385 : f32
      %224 = vector.broadcast %cst_120 : f32 to vector<8x8xf32>
      %225 = arith.mulf %223, %224 : vector<8x8xf32>
      %226 = arith.truncf %225 : vector<8x8xf32> to vector<8x8xbf16>
      %c1_121 = arith.constant 1 : index
      %c0_122 = arith.constant 0 : index
      %c0_123 = arith.constant 0 : index
      %227 = vector.load %arg19[%c1_121, %c0_122, %c0_123] : memref<4x8x8xbf16, #tpu.memory_space<vmem>>, vector<1x8x8xbf16>
      %228 = vector.shape_cast %227 : vector<1x8x8xbf16> to vector<8x8xbf16>
      %229 = vector.shape_cast %226 : vector<8x8xbf16> to vector<1x8x8xbf16>
      tpu.vector_store %arg19[%c1_121, %c0_122, %c0_123], %229 {strides = array<i32>} : memref<4x8x8xbf16, #tpu.memory_space<vmem>>, vector<1x8x8xbf16>,
      %230 = vector.extract_strided_slice %205 {offsets = [0, 40], sizes = [8, 8], strides = [1, 1]} : vector<8x96xf32> to vector<8x8xf32>
      %231 = arith.truncf %230 : vector<8x8xf32> to vector<8x8xbf16>
      %c1_124 = arith.constant 1 : index
      %c0_125 = arith.constant 0 : index
      %c0_126 = arith.constant 0 : index
      %232 = vector.load %arg20[%c1_124, %c0_125, %c0_126] : memref<4x8x8xbf16, #tpu.memory_space<vmem>>, vector<1x8x8xbf16>
      %233 = vector.shape_cast %232 : vector<1x8x8xbf16> to vector<8x8xbf16>
      %234 = vector.shape_cast %231 : vector<8x8xbf16> to vector<1x8x8xbf16>
      tpu.vector_store %arg20[%c1_124, %c0_125, %c0_126], %234 {strides = array<i32>} : memref<4x8x8xbf16, #tpu.memory_space<vmem>>, vector<1x8x8xbf16>,
      %235 = vector.extract_strided_slice %205 {offsets = [0, 72], sizes = [8, 8], strides = [1, 1]} : vector<8x96xf32> to vector<8x8xf32>
      %236 = arith.truncf %235 : vector<8x8xf32> to vector<8x8xbf16>
      %c1_127 = arith.constant 1 : index
      %c0_128 = arith.constant 0 : index
      %c0_129 = arith.constant 0 : index
      %237 = vector.load %arg21[%c1_127, %c0_128, %c0_129] : memref<4x8x8xbf16, #tpu.memory_space<vmem>>, vector<1x8x8xbf16>
      %238 = vector.shape_cast %237 : vector<1x8x8xbf16> to vector<8x8xbf16>
      %239 = vector.shape_cast %236 : vector<8x8xbf16> to vector<1x8x8xbf16>
      tpu.vector_store %arg21[%c1_127, %c0_128, %c0_129], %239 {strides = array<i32>} : memref<4x8x8xbf16, #tpu.memory_space<vmem>>, vector<1x8x8xbf16>,
      %240 = vector.extract_strided_slice %205 {offsets = [0, 16], sizes = [8, 8], strides = [1, 1]} : vector<8x96xf32> to vector<8x8xf32>
      %cst_130 = arith.constant 0.353553385 : f32
      %241 = vector.broadcast %cst_130 : f32 to vector<8x8xf32>
      %242 = arith.mulf %240, %241 : vector<8x8xf32>
      %243 = arith.truncf %242 : vector<8x8xf32> to vector<8x8xbf16>
      %c2_131 = arith.constant 2 : index
      %c0_132 = arith.constant 0 : index
      %c0_133 = arith.constant 0 : index
      %244 = vector.load %arg19[%c2_131, %c0_132, %c0_133] : memref<4x8x8xbf16, #tpu.memory_space<vmem>>, vector<1x8x8xbf16>
      %245 = vector.shape_cast %244 : vector<1x8x8xbf16> to vector<8x8xbf16>
      %246 = vector.shape_cast %243 : vector<8x8xbf16> to vector<1x8x8xbf16>
      tpu.vector_store %arg19[%c2_131, %c0_132, %c0_133], %246 {strides = array<i32>} : memref<4x8x8xbf16, #tpu.memory_space<vmem>>, vector<1x8x8xbf16>,
      %247 = vector.extract_strided_slice %205 {offsets = [0, 48], sizes = [8, 8], strides = [1, 1]} : vector<8x96xf32> to vector<8x8xf32>
      %248 = arith.truncf %247 : vector<8x8xf32> to vector<8x8xbf16>
      %c2_134 = arith.constant 2 : index
      %c0_135 = arith.constant 0 : index
      %c0_136 = arith.constant 0 : index
      %249 = vector.load %arg20[%c2_134, %c0_135, %c0_136] : memref<4x8x8xbf16, #tpu.memory_space<vmem>>, vector<1x8x8xbf16>
      %250 = vector.shape_cast %249 : vector<1x8x8xbf16> to vector<8x8xbf16>
      %251 = vector.shape_cast %248 : vector<8x8xbf16> to vector<1x8x8xbf16>
      tpu.vector_store %arg20[%c2_134, %c0_135, %c0_136], %251 {strides = array<i32>} : memref<4x8x8xbf16, #tpu.memory_space<vmem>>, vector<1x8x8xbf16>,
      %252 = vector.extract_strided_slice %205 {offsets = [0, 80], sizes = [8, 8], strides = [1, 1]} : vector<8x96xf32> to vector<8x8xf32>
      %253 = arith.truncf %252 : vector<8x8xf32> to vector<8x8xbf16>
      %c2_137 = arith.constant 2 : index
      %c0_138 = arith.constant 0 : index
      %c0_139 = arith.constant 0 : index
      %254 = vector.load %arg21[%c2_137, %c0_138, %c0_139] : memref<4x8x8xbf16, #tpu.memory_space<vmem>>, vector<1x8x8xbf16>
      %255 = vector.shape_cast %254 : vector<1x8x8xbf16> to vector<8x8xbf16>
      %256 = vector.shape_cast %253 : vector<8x8xbf16> to vector<1x8x8xbf16>
      tpu.vector_store %arg21[%c2_137, %c0_138, %c0_139], %256 {strides = array<i32>} : memref<4x8x8xbf16, #tpu.memory_space<vmem>>, vector<1x8x8xbf16>,
      %257 = vector.extract_strided_slice %205 {offsets = [0, 24], sizes = [8, 8], strides = [1, 1]} : vector<8x96xf32> to vector<8x8xf32>
      %cst_140 = arith.constant 0.353553385 : f32
      %258 = vector.broadcast %cst_140 : f32 to vector<8x8xf32>
      %259 = arith.mulf %257, %258 : vector<8x8xf32>
      %260 = arith.truncf %259 : vector<8x8xf32> to vector<8x8xbf16>
      %c3_141 = arith.constant 3 : index
      %c0_142 = arith.constant 0 : index
      %c0_143 = arith.constant 0 : index
      %261 = vector.load %arg19[%c3_141, %c0_142, %c0_143] : memref<4x8x8xbf16, #tpu.memory_space<vmem>>, vector<1x8x8xbf16>
      %262 = vector.shape_cast %261 : vector<1x8x8xbf16> to vector<8x8xbf16>
      %263 = vector.shape_cast %260 : vector<8x8xbf16> to vector<1x8x8xbf16>
      tpu.vector_store %arg19[%c3_141, %c0_142, %c0_143], %263 {strides = array<i32>} : memref<4x8x8xbf16, #tpu.memory_space<vmem>>, vector<1x8x8xbf16>,
      %264 = vector.extract_strided_slice %205 {offsets = [0, 56], sizes = [8, 8], strides = [1, 1]} : vector<8x96xf32> to vector<8x8xf32>
      %265 = arith.truncf %264 : vector<8x8xf32> to vector<8x8xbf16>
      %c3_144 = arith.constant 3 : index
      %c0_145 = arith.constant 0 : index
      %c0_146 = arith.constant 0 : index
      %266 = vector.load %arg20[%c3_144, %c0_145, %c0_146] : memref<4x8x8xbf16, #tpu.memory_space<vmem>>, vector<1x8x8xbf16>
      %267 = vector.shape_cast %266 : vector<1x8x8xbf16> to vector<8x8xbf16>
      %268 = vector.shape_cast %265 : vector<8x8xbf16> to vector<1x8x8xbf16>
      tpu.vector_store %arg20[%c3_144, %c0_145, %c0_146], %268 {strides = array<i32>} : memref<4x8x8xbf16, #tpu.memory_space<vmem>>, vector<1x8x8xbf16>,
      %269 = vector.extract_strided_slice %205 {offsets = [0, 88], sizes = [8, 8], strides = [1, 1]} : vector<8x96xf32> to vector<8x8xf32>
      %270 = arith.truncf %269 : vector<8x8xf32> to vector<8x8xbf16>
      %c3_147 = arith.constant 3 : index
      %c0_148 = arith.constant 0 : index
      %c0_149 = arith.constant 0 : index
      %271 = vector.load %arg21[%c3_147, %c0_148, %c0_149] : memref<4x8x8xbf16, #tpu.memory_space<vmem>>, vector<1x8x8xbf16>
      %272 = vector.shape_cast %271 : vector<1x8x8xbf16> to vector<8x8xbf16>
      %273 = vector.shape_cast %270 : vector<8x8xbf16> to vector<1x8x8xbf16>
      tpu.vector_store %arg21[%c3_147, %c0_148, %c0_149], %273 {strides = array<i32>} : memref<4x8x8xbf16, #tpu.memory_space<vmem>>, vector<1x8x8xbf16>,
    } else {
    }
    %c8_i32 = arith.constant 8 : i32
    %3 = arith.muli %arg1, %c8_i32 : i32
    %4 = tpu.assume_multiple %3, 8 : i32
    %c0 = arith.constant 0 : index
    %c0_1 = arith.constant 0 : index
    %c0_2 = arith.constant 0 : index
    %5 = vector.load %arg3[%c0, %c0_1, %c0_2] : memref<1x8x32xf32, #tpu.memory_space<vmem>>, vector<1x8x32xf32>
    %6 = vector.shape_cast %5 : vector<1x8x32xf32> to vector<8x32xf32>
    %c0_3 = arith.constant 0 : index
    %7 = arith.index_cast %4 : i32 to index
    %c0_4 = arith.constant 0 : index
    %8 = vector.load %arg19[%c0_3, %7, %c0_4] : memref<4x8x8xbf16, #tpu.memory_space<vmem>>, vector<1x8x8xbf16>
    %9 = vector.shape_cast %8 : vector<1x8x8xbf16> to vector<8x8xbf16>
    %c0_5 = arith.constant 0 : index
    %c0_6 = arith.constant 0 : index
    %c0_7 = arith.constant 0 : index
    %10 = vector.load %arg20[%c0_5, %c0_6, %c0_7] : memref<4x8x8xbf16, #tpu.memory_space<vmem>>, vector<1x8x8xbf16>
    %11 = vector.shape_cast %10 : vector<1x8x8xbf16> to vector<8x8xbf16>
    %c0_8 = arith.constant 0 : index
    %c0_9 = arith.constant 0 : index
    %c0_10 = arith.constant 0 : index
    %12 = vector.load %arg21[%c0_8, %c0_9, %c0_10] : memref<4x8x8xbf16, #tpu.memory_space<vmem>>, vector<1x8x8xbf16>
    %13 = vector.shape_cast %12 : vector<1x8x8xbf16> to vector<8x8xbf16>
    %cst = arith.constant dense<0.000000e+00> : vector<8x8xf32>
    %14 = tpu.matmul %9, %11, %cst {dimension_numbers = #tpu.dot_dimension_numbers<[1], [1], [0], [0], [0, 0, 1, 0], [], []>} : vector<8x8xbf16>, vector<8x8xbf16>, vector<8x8xf32> -> vector<8x8xf32>
    %cst_11 = arith.constant dense<0xFF800000> : vector<8xf32>
    %15 = vector.multi_reduction <maximumf>, %14, %cst_11 [1] : vector<8x8xf32> to vector<8xf32>
    %16 = vector.shape_cast %15 : vector<8xf32> to vector<8x1xf32>
    %17 = vector.broadcast %16 : vector<8x1xf32> to vector<8x8xf32>
    %18 = arith.subf %14, %17 : vector<8x8xf32>
    %19 = math.exp %18 : vector<8x8xf32>
    %cst_12 = arith.constant dense<0.000000e+00> : vector<8xf32>
    %20 = vector.multi_reduction <add>, %19, %cst_12 [1] : vector<8x8xf32> to vector<8xf32>
    %21 = vector.shape_cast %20 : vector<8xf32> to vector<8x1xf32>
    %22 = tpu.reciprocal %21 {approx = true} : vector<8x1xf32> -> vector<8x1xf32>
    %23 = vector.broadcast %22 : vector<8x1xf32> to vector<8x8xf32>
    %24 = arith.mulf %19, %23 : vector<8x8xf32>
    %25 = arith.truncf %24 : vector<8x8xf32> to vector<8x8xbf16>
    %cst_13 = arith.constant dense<0.000000e+00> : vector<8x8xf32>
    %26 = tpu.matmul %25, %13, %cst_13 {dimension_numbers = #tpu.dot_dimension_numbers<[1], [0], [0], [1], [0, 0, 1, 1], [], []>} : vector<8x8xbf16>, vector<8x8xbf16>, vector<8x8xf32> -> vector<8x8xf32>
    %27 = arith.truncf %26 : vector<8x8xf32> to vector<8x8xbf16>
    %c0_14 = arith.constant 0 : index
    %c0_15 = arith.constant 0 : index
    %28 = vector.load %arg22[%c0_14, %c0_15] : memref<8x32xbf16, #tpu.memory_space<vmem>>, vector<8x8xbf16>
    tpu.vector_store %arg22[%c0_14, %c0_15], %27 {strides = array<i32>} : memref<8x32xbf16, #tpu.memory_space<vmem>>, vector<8x8xbf16>,
    %c1 = arith.constant 1 : index
    %29 = arith.index_cast %4 : i32 to index
    %c0_16 = arith.constant 0 : index
    %30 = vector.load %arg19[%c1, %29, %c0_16] : memref<4x8x8xbf16, #tpu.memory_space<vmem>>, vector<1x8x8xbf16>
    %31 = vector.shape_cast %30 : vector<1x8x8xbf16> to vector<8x8xbf16>
    %c1_17 = arith.constant 1 : index
    %c0_18 = arith.constant 0 : index
    %c0_19 = arith.constant 0 : index
    %32 = vector.load %arg20[%c1_17, %c0_18, %c0_19] : memref<4x8x8xbf16, #tpu.memory_space<vmem>>, vector<1x8x8xbf16>
    %33 = vector.shape_cast %32 : vector<1x8x8xbf16> to vector<8x8xbf16>
    %c1_20 = arith.constant 1 : index
    %c0_21 = arith.constant 0 : index
    %c0_22 = arith.constant 0 : index
    %34 = vector.load %arg21[%c1_20, %c0_21, %c0_22] : memref<4x8x8xbf16, #tpu.memory_space<vmem>>, vector<1x8x8xbf16>
    %35 = vector.shape_cast %34 : vector<1x8x8xbf16> to vector<8x8xbf16>
    %cst_23 = arith.constant dense<0.000000e+00> : vector<8x8xf32>
    %36 = tpu.matmul %31, %33, %cst_23 {dimension_numbers = #tpu.dot_dimension_numbers<[1], [1], [0], [0], [0, 0, 1, 0], [], []>} : vector<8x8xbf16>, vector<8x8xbf16>, vector<8x8xf32> -> vector<8x8xf32>
    %cst_24 = arith.constant dense<0xFF800000> : vector<8xf32>
    %37 = vector.multi_reduction <maximumf>, %36, %cst_24 [1] : vector<8x8xf32> to vector<8xf32>
    %38 = vector.shape_cast %37 : vector<8xf32> to vector<8x1xf32>
    %39 = vector.broadcast %38 : vector<8x1xf32> to vector<8x8xf32>
    %40 = arith.subf %36, %39 : vector<8x8xf32>
    %41 = math.exp %40 : vector<8x8xf32>
    %cst_25 = arith.constant dense<0.000000e+00> : vector<8xf32>
    %42 = vector.multi_reduction <add>, %41, %cst_25 [1] : vector<8x8xf32> to vector<8xf32>
    %43 = vector.shape_cast %42 : vector<8xf32> to vector<8x1xf32>
    %44 = tpu.reciprocal %43 {approx = true} : vector<8x1xf32> -> vector<8x1xf32>
    %45 = vector.broadcast %44 : vector<8x1xf32> to vector<8x8xf32>
    %46 = arith.mulf %41, %45 : vector<8x8xf32>
    %47 = arith.truncf %46 : vector<8x8xf32> to vector<8x8xbf16>
    %cst_26 = arith.constant dense<0.000000e+00> : vector<8x8xf32>
    %48 = tpu.matmul %47, %35, %cst_26 {dimension_numbers = #tpu.dot_dimension_numbers<[1], [0], [0], [1], [0, 0, 1, 1], [], []>} : vector<8x8xbf16>, vector<8x8xbf16>, vector<8x8xf32> -> vector<8x8xf32>
    %49 = arith.truncf %48 : vector<8x8xf32> to vector<8x8xbf16>
    %c0_27 = arith.constant 0 : index
    %c8 = arith.constant 8 : index
    %50 = vector.load %arg22[%c0_27, %c8] : memref<8x32xbf16, #tpu.memory_space<vmem>>, vector<8x8xbf16>
    tpu.vector_store %arg22[%c0_27, %c8], %49 {strides = array<i32>} : memref<8x32xbf16, #tpu.memory_space<vmem>>, vector<8x8xbf16>,
    %c2 = arith.constant 2 : index
    %51 = arith.index_cast %4 : i32 to index
    %c0_28 = arith.constant 0 : index
    %52 = vector.load %arg19[%c2, %51, %c0_28] : memref<4x8x8xbf16, #tpu.memory_space<vmem>>, vector<1x8x8xbf16>
    %53 = vector.shape_cast %52 : vector<1x8x8xbf16> to vector<8x8xbf16>
    %c2_29 = arith.constant 2 : index
    %c0_30 = arith.constant 0 : index
    %c0_31 = arith.constant 0 : index
    %54 = vector.load %arg20[%c2_29, %c0_30, %c0_31] : memref<4x8x8xbf16, #tpu.memory_space<vmem>>, vector<1x8x8xbf16>
    %55 = vector.shape_cast %54 : vector<1x8x8xbf16> to vector<8x8xbf16>
    %c2_32 = arith.constant 2 : index
    %c0_33 = arith.constant 0 : index
    %c0_34 = arith.constant 0 : index
    %56 = vector.load %arg21[%c2_32, %c0_33, %c0_34] : memref<4x8x8xbf16, #tpu.memory_space<vmem>>, vector<1x8x8xbf16>
    %57 = vector.shape_cast %56 : vector<1x8x8xbf16> to vector<8x8xbf16>
    %cst_35 = arith.constant dense<0.000000e+00> : vector<8x8xf32>
    %58 = tpu.matmul %53, %55, %cst_35 {dimension_numbers = #tpu.dot_dimension_numbers<[1], [1], [0], [0], [0, 0, 1, 0], [], []>} : vector<8x8xbf16>, vector<8x8xbf16>, vector<8x8xf32> -> vector<8x8xf32>
    %cst_36 = arith.constant dense<0xFF800000> : vector<8xf32>
    %59 = vector.multi_reduction <maximumf>, %58, %cst_36 [1] : vector<8x8xf32> to vector<8xf32>
    %60 = vector.shape_cast %59 : vector<8xf32> to vector<8x1xf32>
    %61 = vector.broadcast %60 : vector<8x1xf32> to vector<8x8xf32>
    %62 = arith.subf %58, %61 : vector<8x8xf32>
    %63 = math.exp %62 : vector<8x8xf32>
    %cst_37 = arith.constant dense<0.000000e+00> : vector<8xf32>
    %64 = vector.multi_reduction <add>, %63, %cst_37 [1] : vector<8x8xf32> to vector<8xf32>
    %65 = vector.shape_cast %64 : vector<8xf32> to vector<8x1xf32>
    %66 = tpu.reciprocal %65 {approx = true} : vector<8x1xf32> -> vector<8x1xf32>
    %67 = vector.broadcast %66 : vector<8x1xf32> to vector<8x8xf32>
    %68 = arith.mulf %63, %67 : vector<8x8xf32>
    %69 = arith.truncf %68 : vector<8x8xf32> to vector<8x8xbf16>
    %cst_38 = arith.constant dense<0.000000e+00> : vector<8x8xf32>
    %70 = tpu.matmul %69, %57, %cst_38 {dimension_numbers = #tpu.dot_dimension_numbers<[1], [0], [0], [1], [0, 0, 1, 1], [], []>} : vector<8x8xbf16>, vector<8x8xbf16>, vector<8x8xf32> -> vector<8x8xf32>
    %71 = arith.truncf %70 : vector<8x8xf32> to vector<8x8xbf16>
    %c0_39 = arith.constant 0 : index
    %c16 = arith.constant 16 : index
    %72 = vector.load %arg22[%c0_39, %c16] : memref<8x32xbf16, #tpu.memory_space<vmem>>, vector<8x8xbf16>
    tpu.vector_store %arg22[%c0_39, %c16], %71 {strides = array<i32>} : memref<8x32xbf16, #tpu.memory_space<vmem>>, vector<8x8xbf16>,
    %c3 = arith.constant 3 : index
    %73 = arith.index_cast %4 : i32 to index
    %c0_40 = arith.constant 0 : index
    %74 = vector.load %arg19[%c3, %73, %c0_40] : memref<4x8x8xbf16, #tpu.memory_space<vmem>>, vector<1x8x8xbf16>
    %75 = vector.shape_cast %74 : vector<1x8x8xbf16> to vector<8x8xbf16>
    %c3_41 = arith.constant 3 : index
    %c0_42 = arith.constant 0 : index
    %c0_43 = arith.constant 0 : index
    %76 = vector.load %arg20[%c3_41, %c0_42, %c0_43] : memref<4x8x8xbf16, #tpu.memory_space<vmem>>, vector<1x8x8xbf16>
    %77 = vector.shape_cast %76 : vector<1x8x8xbf16> to vector<8x8xbf16>
    %c3_44 = arith.constant 3 : index
    %c0_45 = arith.constant 0 : index
    %c0_46 = arith.constant 0 : index
    %78 = vector.load %arg21[%c3_44, %c0_45, %c0_46] : memref<4x8x8xbf16, #tpu.memory_space<vmem>>, vector<1x8x8xbf16>
    %79 = vector.shape_cast %78 : vector<1x8x8xbf16> to vector<8x8xbf16>
    %cst_47 = arith.constant dense<0.000000e+00> : vector<8x8xf32>
    %80 = tpu.matmul %75, %77, %cst_47 {dimension_numbers = #tpu.dot_dimension_numbers<[1], [1], [0], [0], [0, 0, 1, 0], [], []>} : vector<8x8xbf16>, vector<8x8xbf16>, vector<8x8xf32> -> vector<8x8xf32>
    %cst_48 = arith.constant dense<0xFF800000> : vector<8xf32>
    %81 = vector.multi_reduction <maximumf>, %80, %cst_48 [1] : vector<8x8xf32> to vector<8xf32>
    %82 = vector.shape_cast %81 : vector<8xf32> to vector<8x1xf32>
    %83 = vector.broadcast %82 : vector<8x1xf32> to vector<8x8xf32>
    %84 = arith.subf %80, %83 : vector<8x8xf32>
    %85 = math.exp %84 : vector<8x8xf32>
    %cst_49 = arith.constant dense<0.000000e+00> : vector<8xf32>
    %86 = vector.multi_reduction <add>, %85, %cst_49 [1] : vector<8x8xf32> to vector<8xf32>
    %87 = vector.shape_cast %86 : vector<8xf32> to vector<8x1xf32>
    %88 = tpu.reciprocal %87 {approx = true} : vector<8x1xf32> -> vector<8x1xf32>
    %89 = vector.broadcast %88 : vector<8x1xf32> to vector<8x8xf32>
    %90 = arith.mulf %85, %89 : vector<8x8xf32>
    %91 = arith.truncf %90 : vector<8x8xf32> to vector<8x8xbf16>
    %cst_50 = arith.constant dense<0.000000e+00> : vector<8x8xf32>
    %92 = tpu.matmul %91, %79, %cst_50 {dimension_numbers = #tpu.dot_dimension_numbers<[1], [0], [0], [1], [0, 0, 1, 1], [], []>} : vector<8x8xbf16>, vector<8x8xbf16>, vector<8x8xf32> -> vector<8x8xf32>
    %93 = arith.truncf %92 : vector<8x8xf32> to vector<8x8xbf16>
    %c0_51 = arith.constant 0 : index
    %c24 = arith.constant 24 : index
    %94 = vector.load %arg22[%c0_51, %c24] : memref<8x32xbf16, #tpu.memory_space<vmem>>, vector<8x8xbf16>
    tpu.vector_store %arg22[%c0_51, %c24], %93 {strides = array<i32>} : memref<8x32xbf16, #tpu.memory_space<vmem>>, vector<8x8xbf16>,
    %c0_52 = arith.constant 0 : index
    %c0_53 = arith.constant 0 : index
    %95 = vector.load %arg22[%c0_52, %c0_53] : memref<8x32xbf16, #tpu.memory_space<vmem>>, vector<8x32xbf16>
    %c0_54 = arith.constant 0 : index
    %c0_55 = arith.constant 0 : index
    %96 = vector.load %arg8[%c0_54, %c0_55] : memref<32x32xbf16, #tpu.memory_space<vmem>>, vector<32x32xbf16>
    %cst_56 = arith.constant dense<0.000000e+00> : vector<8x32xf32>
    %97 = tpu.matmul %95, %96, %cst_56 {dimension_numbers = #tpu.dot_dimension_numbers<[1], [0], [0], [1], [0, 0, 1, 1], [], []>} : vector<8x32xbf16>, vector<32x32xbf16>, vector<8x32xf32> -> vector<8x32xf32>
    %c0_57 = arith.constant 0 : index
    %c0_58 = arith.constant 0 : index
    %98 = vector.load %arg9[%c0_57, %c0_58] : memref<1x32xf32, #tpu.memory_space<vmem>>, vector<1x32xf32>
    %99 = vector.broadcast %98 : vector<1x32xf32> to vector<8x32xf32>
    %100 = arith.addf %97, %99 : vector<8x32xf32>
    %101 = arith.addf %6, %100 : vector<8x32xf32>
    %c0_59 = arith.constant 0 : index
    %c0_60 = arith.constant 0 : index
    %102 = vector.load %arg10[%c0_59, %c0_60] : memref<1x32xf32, #tpu.memory_space<vmem>>, vector<1x32xf32>
    %c0_61 = arith.constant 0 : index
    %c0_62 = arith.constant 0 : index
    %103 = vector.load %arg11[%c0_61, %c0_62] : memref<1x32xf32, #tpu.memory_space<vmem>>, vector<1x32xf32>
    %cst_63 = arith.constant dense<0.000000e+00> : vector<8xf32>
    %104 = vector.multi_reduction <add>, %101, %cst_63 [1] : vector<8x32xf32> to vector<8xf32>
    %105 = vector.shape_cast %104 : vector<8xf32> to vector<8x1xf32>
    %cst_64 = arith.constant 3.200000e+01 : f32
    %106 = vector.broadcast %cst_64 : f32 to vector<8x1xf32>
    %107 = arith.divf %105, %106 : vector<8x1xf32>
    %108 = vector.broadcast %107 : vector<8x1xf32> to vector<8x32xf32>
    %109 = arith.subf %101, %108 : vector<8x32xf32>
    %110 = arith.mulf %109, %109 : vector<8x32xf32>
    %cst_65 = arith.constant dense<0.000000e+00> : vector<8xf32>
    %111 = vector.multi_reduction <add>, %110, %cst_65 [1] : vector<8x32xf32> to vector<8xf32>
    %112 = vector.shape_cast %111 : vector<8xf32> to vector<8x1xf32>
    %cst_66 = arith.constant 3.200000e+01 : f32
    %113 = vector.broadcast %cst_66 : f32 to vector<8x1xf32>
    %114 = arith.divf %112, %113 : vector<8x1xf32>
    %115 = vector.broadcast %107 : vector<8x1xf32> to vector<8x32xf32>
    %116 = arith.subf %101, %115 : vector<8x32xf32>
    %cst_67 = arith.constant 9.99999974E-6 : f32
    %117 = vector.broadcast %cst_67 : f32 to vector<8x1xf32>
    %118 = arith.addf %114, %117 : vector<8x1xf32>
    %119 = math.rsqrt %118 : vector<8x1xf32>
    %120 = vector.broadcast %119 : vector<8x1xf32> to vector<8x32xf32>
    %121 = arith.mulf %116, %120 : vector<8x32xf32>
    %122 = vector.broadcast %102 : vector<1x32xf32> to vector<8x32xf32>
    %123 = arith.mulf %121, %122 : vector<8x32xf32>
    %124 = vector.broadcast %103 : vector<1x32xf32> to vector<8x32xf32>
    %125 = arith.addf %123, %124 : vector<8x32xf32>
    %126 = arith.truncf %125 : vector<8x32xf32> to vector<8x32xbf16>
    %c0_68 = arith.constant 0 : index
    %c0_69 = arith.constant 0 : index
    %127 = vector.load %arg12[%c0_68, %c0_69] : memref<32x128xbf16, #tpu.memory_space<vmem>>, vector<32x128xbf16>
    %cst_70 = arith.constant dense<0.000000e+00> : vector<8x128xf32>
    %128 = tpu.matmul %126, %127, %cst_70 {dimension_numbers = #tpu.dot_dimension_numbers<[1], [0], [0], [1], [0, 0, 1, 1], [], []>} : vector<8x32xbf16>, vector<32x128xbf16>, vector<8x128xf32> -> vector<8x128xf32>
    %c0_71 = arith.constant 0 : index
    %c0_72 = arith.constant 0 : index
    %129 = vector.load %arg13[%c0_71, %c0_72] : memref<1x128xf32, #tpu.memory_space<vmem>>, vector<1x128xf32>
    %130 = vector.broadcast %129 : vector<1x128xf32> to vector<8x128xf32>
    %131 = arith.addf %128, %130 : vector<8x128xf32>
    %cst_73 = arith.constant 5.000000e-01 : f32
    %132 = vector.broadcast %cst_73 : f32 to vector<8x128xf32>
    %133 = arith.mulf %132, %131 : vector<8x128xf32>
    %cst_74 = arith.constant 0.707106769 : f32
    %134 = vector.broadcast %cst_74 : f32 to vector<8x128xf32>
    %135 = arith.mulf %131, %134 : vector<8x128xf32>
    %136 = math.erf %135 : vector<8x128xf32>
    %cst_75 = arith.constant 1.000000e+00 : f32
    %137 = vector.broadcast %cst_75 : f32 to vector<8x128xf32>
    %138 = arith.addf %137, %136 : vector<8x128xf32>
    %139 = arith.mulf %133, %138 : vector<8x128xf32>
    %140 = arith.truncf %139 : vector<8x128xf32> to vector<8x128xbf16>
    %c0_76 = arith.constant 0 : index
    %c0_77 = arith.constant 0 : index
    %141 = vector.load %arg14[%c0_76, %c0_77] : memref<128x32xbf16, #tpu.memory_space<vmem>>, vector<128x32xbf16>
    %cst_78 = arith.constant dense<0.000000e+00> : vector<8x32xf32>
    %142 = tpu.matmul %140, %141, %cst_78 {dimension_numbers = #tpu.dot_dimension_numbers<[1], [0], [0], [1], [0, 0, 1, 1], [], []>} : vector<8x128xbf16>, vector<128x32xbf16>, vector<8x32xf32> -> vector<8x32xf32>
    %c0_79 = arith.constant 0 : index
    %c0_80 = arith.constant 0 : index
    %143 = vector.load %arg15[%c0_79, %c0_80] : memref<1x32xf32, #tpu.memory_space<vmem>>, vector<1x32xf32>
    %144 = vector.broadcast %143 : vector<1x32xf32> to vector<8x32xf32>
    %145 = arith.addf %142, %144 : vector<8x32xf32>
    %146 = arith.addf %101, %145 : vector<8x32xf32>
    %c0_81 = arith.constant 0 : index
    %c0_82 = arith.constant 0 : index
    %147 = vector.load %arg16[%c0_81, %c0_82] : memref<1x32xf32, #tpu.memory_space<vmem>>, vector<1x32xf32>
    %c0_83 = arith.constant 0 : index
    %c0_84 = arith.constant 0 : index
    %148 = vector.load %arg17[%c0_83, %c0_84] : memref<1x32xf32, #tpu.memory_space<vmem>>, vector<1x32xf32>
    %cst_85 = arith.constant dense<0.000000e+00> : vector<8xf32>
    %149 = vector.multi_reduction <add>, %146, %cst_85 [1] : vector<8x32xf32> to vector<8xf32>
    %150 = vector.shape_cast %149 : vector<8xf32> to vector<8x1xf32>
    %cst_86 = arith.constant 3.200000e+01 : f32
    %151 = vector.broadcast %cst_86 : f32 to vector<8x1xf32>
    %152 = arith.divf %150, %151 : vector<8x1xf32>
    %153 = vector.broadcast %152 : vector<8x1xf32> to vector<8x32xf32>
    %154 = arith.subf %146, %153 : vector<8x32xf32>
    %155 = arith.mulf %154, %154 : vector<8x32xf32>
    %cst_87 = arith.constant dense<0.000000e+00> : vector<8xf32>
    %156 = vector.multi_reduction <add>, %155, %cst_87 [1] : vector<8x32xf32> to vector<8xf32>
    %157 = vector.shape_cast %156 : vector<8xf32> to vector<8x1xf32>
    %cst_88 = arith.constant 3.200000e+01 : f32
    %158 = vector.broadcast %cst_88 : f32 to vector<8x1xf32>
    %159 = arith.divf %157, %158 : vector<8x1xf32>
    %160 = vector.broadcast %152 : vector<8x1xf32> to vector<8x32xf32>
    %161 = arith.subf %146, %160 : vector<8x32xf32>
    %cst_89 = arith.constant 9.99999974E-6 : f32
    %162 = vector.broadcast %cst_89 : f32 to vector<8x1xf32>
    %163 = arith.addf %159, %162 : vector<8x1xf32>
    %164 = math.rsqrt %163 : vector<8x1xf32>
    %165 = vector.broadcast %164 : vector<8x1xf32> to vector<8x32xf32>
    %166 = arith.mulf %161, %165 : vector<8x32xf32>
    %167 = vector.broadcast %147 : vector<1x32xf32> to vector<8x32xf32>
    %168 = arith.mulf %166, %167 : vector<8x32xf32>
    %169 = vector.broadcast %148 : vector<1x32xf32> to vector<8x32xf32>
    %170 = arith.addf %168, %169 : vector<8x32xf32>
    %c0_90 = arith.constant 0 : index
    %c0_91 = arith.constant 0 : index
    %c0_92 = arith.constant 0 : index
    %171 = vector.load %arg18[%c0_90, %c0_91, %c0_92] : memref<1x8x32xf32, #tpu.memory_space<vmem>>, vector<1x8x32xf32>
    %172 = vector.shape_cast %171 : vector<1x8x32xf32> to vector<8x32xf32>
    %173 = vector.shape_cast %170 : vector<8x32xf32> to vector<1x8x32xf32>
    tpu.vector_store %arg18[%c0_90, %c0_91, %c0_92], %173 {strides = array<i32>} : memref<1x8x32xf32, #tpu.memory_space<vmem>>, vector<1x8x32xf32>,
    return
  }
  func.func @transform_0(%arg0: i32, %arg1: i32) -> (i32, i32, i32) {
    %c0_i32 = arith.constant 0 : i32
    %c0_i32_0 = arith.constant 0 : i32
    %c0_i32_1 = arith.constant 0 : i32
    return %arg0, %c0_i32, %c0_i32_0 : i32, i32, i32
  }
  func.func @transform_1(%arg0: i32, %arg1: i32) -> (i32, i32, i32) {
    %c0_i32 = arith.constant 0 : i32
    %c0_i32_0 = arith.constant 0 : i32
    return %arg0, %arg1, %c0_i32 : i32, i32, i32
  }
  func.func @transform_2(%arg0: i32, %arg1: i32) -> (i32, i32) {
    %c0_i32 = arith.constant 0 : i32
    %c0_i32_0 = arith.constant 0 : i32
    %c0_i32_1 = arith.constant 0 : i32
    return %c0_i32, %c0_i32_0 : i32, i32
  }
  func.func @transform_3(%arg0: i32, %arg1: i32) -> (i32, i32) {
    %c0_i32 = arith.constant 0 : i32
    %c0_i32_0 = arith.constant 0 : i32
    %c0_i32_1 = arith.constant 0 : i32
    return %c0_i32, %c0_i32_0 : i32, i32
  }
  func.func @transform_4(%arg0: i32, %arg1: i32) -> (i32, i32) {
    %c0_i32 = arith.constant 0 : i32
    %c0_i32_0 = arith.constant 0 : i32
    %c0_i32_1 = arith.constant 0 : i32
    return %c0_i32, %c0_i32_0 : i32, i32
  }
  func.func @transform_5(%arg0: i32, %arg1: i32) -> (i32, i32) {
    %c0_i32 = arith.constant 0 : i32
    %c0_i32_0 = arith.constant 0 : i32
    %c0_i32_1 = arith.constant 0 : i32
    return %c0_i32, %c0_i32_0 : i32, i32
  }
  func.func @transform_6(%arg0: i32, %arg1: i32) -> (i32, i32) {
    %c0_i32 = arith.constant 0 : i32
    %c0_i32_0 = arith.constant 0 : i32
    %c0_i32_1 = arith.constant 0 : i32
    return %c0_i32, %c0_i32_0 : i32, i32
  }
  func.func @transform_7(%arg0: i32, %arg1: i32) -> (i32, i32) {
    %c0_i32 = arith.constant 0 : i32
    %c0_i32_0 = arith.constant 0 : i32
    %c0_i32_1 = arith.constant 0 : i32
    return %c0_i32, %c0_i32_0 : i32, i32
  }
  func.func @transform_8(%arg0: i32, %arg1: i32) -> (i32, i32) {
    %c0_i32 = arith.constant 0 : i32
    %c0_i32_0 = arith.constant 0 : i32
    %c0_i32_1 = arith.constant 0 : i32
    return %c0_i32, %c0_i32_0 : i32, i32
  }
  func.func @transform_9(%arg0: i32, %arg1: i32) -> (i32, i32) {
    %c0_i32 = arith.constant 0 : i32
    %c0_i32_0 = arith.constant 0 : i32
    %c0_i32_1 = arith.constant 0 : i32
    return %c0_i32, %c0_i32_0 : i32, i32
  }
  func.func @transform_10(%arg0: i32, %arg1: i32) -> (i32, i32) {
    %c0_i32 = arith.constant 0 : i32
    %c0_i32_0 = arith.constant 0 : i32
    %c0_i32_1 = arith.constant 0 : i32
    return %c0_i32, %c0_i32_0 : i32, i32
  }
  func.func @transform_11(%arg0: i32, %arg1: i32) -> (i32, i32) {
    %c0_i32 = arith.constant 0 : i32
    %c0_i32_0 = arith.constant 0 : i32
    %c0_i32_1 = arith.constant 0 : i32
    return %c0_i32, %c0_i32_0 : i32, i32
  }
  func.func @transform_12(%arg0: i32, %arg1: i32) -> (i32, i32) {
    %c0_i32 = arith.constant 0 : i32
    %c0_i32_0 = arith.constant 0 : i32
    %c0_i32_1 = arith.constant 0 : i32
    return %c0_i32, %c0_i32_0 : i32, i32
  }
  func.func @transform_13(%arg0: i32, %arg1: i32) -> (i32, i32) {
    %c0_i32 = arith.constant 0 : i32
    %c0_i32_0 = arith.constant 0 : i32
    %c0_i32_1 = arith.constant 0 : i32
    return %c0_i32, %c0_i32_0 : i32, i32
  }
  func.func @transform_14(%arg0: i32, %arg1: i32) -> (i32, i32) {
    %c0_i32 = arith.constant 0 : i32
    %c0_i32_0 = arith.constant 0 : i32
    %c0_i32_1 = arith.constant 0 : i32
    return %c0_i32, %c0_i32_0 : i32, i32
  }
  func.func @transform_15(%arg0: i32, %arg1: i32) -> (i32, i32) {
    %c0_i32 = arith.constant 0 : i32
    %c0_i32_0 = arith.constant 0 : i32
    %c0_i32_1 = arith.constant 0 : i32
    return %c0_i32, %c0_i32_0 : i32, i32
  }
  func.func @transform_16(%arg0: i32, %arg1: i32) -> (i32, i32, i32) {
    %c0_i32 = arith.constant 0 : i32
    %c0_i32_0 = arith.constant 0 : i32
    return %arg0, %arg1, %c0_i32 : i32, i32, i32
  }
}

module attributes {stable_mosaic.version = 11 : i64} {
  func.func @transformer_block_kernel(%arg0: i32, %arg1: i32, %arg2: memref<1x8x32xf32, #tpu.memory_space<vmem>>, %arg3: memref<1x8x32xf32, #tpu.memory_space<vmem>>, %arg4: memref<1x32xf32, #tpu.memory_space<vmem>>, %arg5: memref<1x32xf32, #tpu.memory_space<vmem>>, %arg6: memref<32x96xbf16, #tpu.memory_space<vmem>>, %arg7: memref<1x96xf32, #tpu.memory_space<vmem>>, %arg8: memref<32x32xbf16, #tpu.memory_space<vmem>>, %arg9: memref<1x32xf32, #tpu.memory_space<vmem>>, %arg10: memref<1x32xf32, #tpu.memory_space<vmem>>, %arg11: memref<1x32xf32, #tpu.memory_space<vmem>>, %arg12: memref<32x128xbf16, #tpu.memory_space<vmem>>, %arg13: memref<1x128xf32, #tpu.memory_space<vmem>>, %arg14: memref<128x32xbf16, #tpu.memory_space<vmem>>, %arg15: memref<1x32xf32, #tpu.memory_space<vmem>>, %arg16: memref<1x32xf32, #tpu.memory_space<vmem>>, %arg17: memref<1x32xf32, #tpu.memory_space<vmem>>, %arg18: memref<1x8x32xf32, #tpu.memory_space<vmem>>, %arg19: memref<4x8x8xbf16, #tpu.memory_space<vmem>>, %arg20: memref<4x8x8xbf16, #tpu.memory_space<vmem>>, %arg21: memref<4x8x8xbf16, #tpu.memory_space<vmem>>, %arg22: memref<8x32xbf16, #tpu.memory_space<vmem>>) attributes {dimension_semantics = [#tpu.dimension_semantics<parallel>, #tpu.dimension_semantics<arbitrary>], iteration_bounds = array<i64: 2, 1>, scalar_prefetch = 0 : i64, scratch_operands = 4 : i64, tpu.core_type = #tpu.core_type<tc>, window_params = [{transform_indices = @transform_0, window_bounds = array<i64: 1, 8, 32>}, {transform_indices = @transform_1, window_bounds = array<i64: 1, 8, 32>}, {pipeline_mode = #tpu.pipeline_mode<synchronous>, transform_indices = @transform_2, window_bounds = array<i64: 1, 32>}, {pipeline_mode = #tpu.pipeline_mode<synchronous>, transform_indices = @transform_3, window_bounds = array<i64: 1, 32>}, {pipeline_mode = #tpu.pipeline_mode<synchronous>, transform_indices = @transform_4, window_bounds = array<i64: 32, 96>}, {pipeline_mode = #tpu.pipeline_mode<synchronous>, transform_indices = @transform_5, window_bounds = array<i64: 1, 96>}, {pipeline_mode = #tpu.pipeline_mode<synchronous>, transform_indices = @transform_6, window_bounds = array<i64: 32, 32>}, {pipeline_mode = #tpu.pipeline_mode<synchronous>, transform_indices = @transform_7, window_bounds = array<i64: 1, 32>}, {pipeline_mode = #tpu.pipeline_mode<synchronous>, transform_indices = @transform_8, window_bounds = array<i64: 1, 32>}, {pipeline_mode = #tpu.pipeline_mode<synchronous>, transform_indices = @transform_9, window_bounds = array<i64: 1, 32>}, {pipeline_mode = #tpu.pipeline_mode<synchronous>, transform_indices = @transform_10, window_bounds = array<i64: 32, 128>}, {pipeline_mode = #tpu.pipeline_mode<synchronous>, transform_indices = @transform_11, window_bounds = array<i64: 1, 128>}, {pipeline_mode = #tpu.pipeline_mode<synchronous>, transform_indices = @transform_12, window_bounds = array<i64: 128, 32>}, {pipeline_mode = #tpu.pipeline_mode<synchronous>, transform_indices = @transform_13, window_bounds = array<i64: 1, 32>}, {pipeline_mode = #tpu.pipeline_mode<synchronous>, transform_indices = @transform_14, window_bounds = array<i64: 1, 32>}, {pipeline_mode = #tpu.pipeline_mode<synchronous>, transform_indices = @transform_15, window_bounds = array<i64: 1, 32>}, {transform_indices = @transform_16, window_bounds = array<i64: 1, 8, 32>}]} {
    %c0_i32 = arith.constant 0 : i32
    %0 = arith.cmpi eq, %arg1, %c0_i32 : i32
    %1 = arith.extui %0 : i1 to i32
    %c0_i32_0 = arith.constant 0 : i32
    %2 = arith.cmpi ne, %1, %c0_i32_0 : i32
    scf.if %2 {
      %c0_93 = arith.constant 0 : index
      %c0_94 = arith.constant 0 : index
      %c0_95 = arith.constant 0 : index
      %174 = vector.load %arg2[%c0_93, %c0_94, %c0_95] : memref<1x8x32xf32, #tpu.memory_space<vmem>>, vector<1x8x32xf32>
      %175 = vector.shape_cast %174 : vector<1x8x32xf32> to vector<8x32xf32>
      %c0_96 = arith.constant 0 : index
      %c0_97 = arith.constant 0 : index
      %176 = vector.load %arg4[%c0_96, %c0_97] : memref<1x32xf32, #tpu.memory_space<vmem>>, vector<1x32xf32>
      %c0_98 = arith.constant 0 : index
      %c0_99 = arith.constant 0 : index
      %177 = vector.load %arg5[%c0_98, %c0_99] : memref<1x32xf32, #tpu.memory_space<vmem>>, vector<1x32xf32>
      %cst_100 = arith.constant dense<0.000000e+00> : vector<8xf32>
      %178 = vector.multi_reduction <add>, %175, %cst_100 [1] : vector<8x32xf32> to vector<8xf32>
      %179 = vector.shape_cast %178 : vector<8xf32> to vector<8x1xf32>
      %cst_101 = arith.constant 3.200000e+01 : f32
      %180 = vector.broadcast %cst_101 : f32 to vector<8x1xf32>
      %181 = arith.divf %179, %180 : vector<8x1xf32>
      %182 = vector.broadcast %181 : vector<8x1xf32> to vector<8x32xf32>
      %183 = arith.subf %175, %182 : vector<8x32xf32>
      %184 = arith.mulf %183, %183 : vector<8x32xf32>
      %cst_102 = arith.constant dense<0.000000e+00> : vector<8xf32>
      %185 = vector.multi_reduction <add>, %184, %cst_102 [1] : vector<8x32xf32> to vector<8xf32>
      %186 = vector.shape_cast %185 : vector<8xf32> to vector<8x1xf32>
      %cst_103 = arith.constant 3.200000e+01 : f32
      %187 = vector.broadcast %cst_103 : f32 to vector<8x1xf32>
      %188 = arith.divf %186, %187 : vector<8x1xf32>
      %189 = vector.broadcast %181 : vector<8x1xf32> to vector<8x32xf32>
      %190 = arith.subf %175, %189 : vector<8x32xf32>
      %cst_104 = arith.constant 9.99999974E-6 : f32
      %191 = vector.broadcast %cst_104 : f32 to vector<8x1xf32>
      %192 = arith.addf %188, %191 : vector<8x1xf32>
      %193 = math.rsqrt %192 : vector<8x1xf32>
      %194 = vector.broadcast %193 : vector<8x1xf32> to vector<8x32xf32>
      %195 = arith.mulf %190, %194 : vector<8x32xf32>
      %196 = vector.broadcast %176 : vector<1x32xf32> to vector<8x32xf32>
      %197 = arith.mulf %195, %196 : vector<8x32xf32>
      %198 = vector.broadcast %177 : vector<1x32xf32> to vector<8x32xf32>
      %199 = arith.addf %197, %198 : vector<8x32xf32>
      %200 = arith.truncf %199 : vector<8x32xf32> to vector<8x32xbf16>
      %c0_105 = arith.constant 0 : index
      %c0_106 = arith.constant 0 : index
      %201 = vector.load %arg6[%c0_105, %c0_106] : memref<32x96xbf16, #tpu.memory_space<vmem>>, vector<32x96xbf16>
      %cst_107 = arith.constant dense<0.000000e+00> : vector<8x96xf32>
      %202 = tpu.matmul %200, %201, %cst_107 {dimension_numbers = #tpu.dot_dimension_numbers<[1], [0], [0], [1], [0, 0, 1, 1], [], []>} : vector<8x32xbf16>, vector<32x96xbf16>, vector<8x96xf32> -> vector<8x96xf32>
      %c0_108 = arith.constant 0 : index
      %c0_109 = arith.constant 0 : index
      %203 = vector.load %arg7[%c0_108, %c0_109] : memref<1x96xf32, #tpu.memory_space<vmem>>, vector<1x96xf32>
      %204 = vector.broadcast %203 : vector<1x96xf32> to vector<8x96xf32>
      %205 = arith.addf %202, %204 : vector<8x96xf32>
      %206 = vector.extract_strided_slice %205 {offsets = [0, 0], sizes = [8, 8], strides = [1, 1]} : vector<8x96xf32> to vector<8x8xf32>
      %cst_110 = arith.constant 0.353553385 : f32
      %207 = vector.broadcast %cst_110 : f32 to vector<8x8xf32>
      %208 = arith.mulf %206, %207 : vector<8x8xf32>
      %209 = arith.truncf %208 : vector<8x8xf32> to vector<8x8xbf16>
      %c0_111 = arith.constant 0 : index
      %c0_112 = arith.constant 0 : index
      %c0_113 = arith.constant 0 : index
      %210 = vector.load %arg19[%c0_111, %c0_112, %c0_113] : memref<4x8x8xbf16, #tpu.memory_space<vmem>>, vector<1x8x8xbf16>
      %211 = vector.shape_cast %210 : vector<1x8x8xbf16> to vector<8x8xbf16>
      %212 = vector.shape_cast %209 : vector<8x8xbf16> to vector<1x8x8xbf16>
      tpu.vector_store %arg19[%c0_111, %c0_112, %c0_113], %212 {strides = array<i32>} : memref<4x8x8xbf16, #tpu.memory_space<vmem>>, vector<1x8x8xbf16>,
      %213 = vector.extract_strided_slice %205 {offsets = [0, 32], sizes = [8, 8], strides = [1, 1]} : vector<8x96xf32> to vector<8x8xf32>
      %214 = arith.truncf %213 : vector<8x8xf32> to vector<8x8xbf16>
      %c0_114 = arith.constant 0 : index
      %c0_115 = arith.constant 0 : index
      %c0_116 = arith.constant 0 : index
      %215 = vector.load %arg20[%c0_114, %c0_115, %c0_116] : memref<4x8x8xbf16, #tpu.memory_space<vmem>>, vector<1x8x8xbf16>
      %216 = vector.shape_cast %215 : vector<1x8x8xbf16> to vector<8x8xbf16>
      %217 = vector.shape_cast %214 : vector<8x8xbf16> to vector<1x8x8xbf16>
      tpu.vector_store %arg20[%c0_114, %c0_115, %c0_116], %217 {strides = array<i32>} : memref<4x8x8xbf16, #tpu.memory_space<vmem>>, vector<1x8x8xbf16>,
      %218 = vector.extract_strided_slice %205 {offsets = [0, 64], sizes = [8, 8], strides = [1, 1]} : vector<8x96xf32> to vector<8x8xf32>
      %219 = arith.truncf %218 : vector<8x8xf32> to vector<8x8xbf16>
      %c0_117 = arith.constant 0 : index
      %c0_118 = arith.constant 0 : index
      %c0_119 = arith.constant 0 : index
      %220 = vector.load %arg21[%c0_117, %c0_118, %c0_119] : memref<4x8x8xbf16, #tpu.memory_space<vmem>>, vector<1x8x8xbf16>
      %221 = vector.shape_cast %220 : vector<1x8x8xbf16> to vector<8x8xbf16>
      %222 = vector.shape_cast %219 : vector<8x8xbf16> to vector<1x8x8xbf16>
      tpu.vector_store %arg21[%c0_117, %c0_118, %c0_119], %222 {strides = array<i32>} : memref<4x8x8xbf16, #tpu.memory_space<vmem>>, vector<1x8x8xbf16>,
      %223 = vector.extract_strided_slice %205 {offsets = [0, 8], sizes = [8, 8], strides = [1, 1]} : vector<8x96xf32> to vector<8x8xf32>
      %cst_120 = arith.constant 0.353553385 : f32
      %224 = vector.broadcast %cst_120 : f32 to vector<8x8xf32>
      %225 = arith.mulf %223, %224 : vector<8x8xf32>
      %226 = arith.truncf %225 : vector<8x8xf32> to vector<8x8xbf16>
      %c1_121 = arith.constant 1 : index
      %c0_122 = arith.constant 0 : index
      %c0_123 = arith.constant 0 : index
      %227 = vector.load %arg19[%c1_121, %c0_122, %c0_123] : memref<4x8x8xbf16, #tpu.memory_space<vmem>>, vector<1x8x8xbf16>
      %228 = vector.shape_cast %227 : vector<1x8x8xbf16> to vector<8x8xbf16>
      %229 = vector.shape_cast %226 : vector<8x8xbf16> to vector<1x8x8xbf16>
      tpu.vector_store %arg19[%c1_121, %c0_122, %c0_123], %229 {strides = array<i32>} : memref<4x8x8xbf16, #tpu.memory_space<vmem>>, vector<1x8x8xbf16>,
      %230 = vector.extract_strided_slice %205 {offsets = [0, 40], sizes = [8, 8], strides = [1, 1]} : vector<8x96xf32> to vector<8x8xf32>
      %231 = arith.truncf %230 : vector<8x8xf32> to vector<8x8xbf16>
      %c1_124 = arith.constant 1 : index
      %c0_125 = arith.constant 0 : index
      %c0_126 = arith.constant 0 : index
      %232 = vector.load %arg20[%c1_124, %c0_125, %c0_126] : memref<4x8x8xbf16, #tpu.memory_space<vmem>>, vector<1x8x8xbf16>
      %233 = vector.shape_cast %232 : vector<1x8x8xbf16> to vector<8x8xbf16>
      %234 = vector.shape_cast %231 : vector<8x8xbf16> to vector<1x8x8xbf16>
      tpu.vector_store %arg20[%c1_124, %c0_125, %c0_126], %234 {strides = array<i32>} : memref<4x8x8xbf16, #tpu.memory_space<vmem>>, vector<1x8x8xbf16>,
      %235 = vector.extract_strided_slice %205 {offsets = [0, 72], sizes = [8, 8], strides = [1, 1]} : vector<8x96xf32> to vector<8x8xf32>
      %236 = arith.truncf %235 : vector<8x8xf32> to vector<8x8xbf16>
      %c1_127 = arith.constant 1 : index
      %c0_128 = arith.constant 0 : index
      %c0_129 = arith.constant 0 : index
      %237 = vector.load %arg21[%c1_127, %c0_128, %c0_129] : memref<4x8x8xbf16, #tpu.memory_space<vmem>>, vector<1x8x8xbf16>
      %238 = vector.shape_cast %237 : vector<1x8x8xbf16> to vector<8x8xbf16>
      %239 = vector.shape_cast %236 : vector<8x8xbf16> to vector<1x8x8xbf16>
      tpu.vector_store %arg21[%c1_127, %c0_128, %c0_129], %239 {strides = array<i32>} : memref<4x8x8xbf16, #tpu.memory_space<vmem>>, vector<1x8x8xbf16>,
      %240 = vector.extract_strided_slice %205 {offsets = [0, 16], sizes = [8, 8], strides = [1, 1]} : vector<8x96xf32> to vector<8x8xf32>
      %cst_130 = arith.constant 0.353553385 : f32
      %241 = vector.broadcast %cst_130 : f32 to vector<8x8xf32>
      %242 = arith.mulf %240, %241 : vector<8x8xf32>
      %243 = arith.truncf %242 : vector<8x8xf32> to vector<8x8xbf16>
      %c2_131 = arith.constant 2 : index
      %c0_132 = arith.constant 0 : index
      %c0_133 = arith.constant 0 : index
      %244 = vector.load %arg19[%c2_131, %c0_132, %c0_133] : memref<4x8x8xbf16, #tpu.memory_space<vmem>>, vector<1x8x8xbf16>
      %245 = vector.shape_cast %244 : vector<1x8x8xbf16> to vector<8x8xbf16>
      %246 = vector.shape_cast %243 : vector<8x8xbf16> to vector<1x8x8xbf16>
      tpu.vector_store %arg19[%c2_131, %c0_132, %c0_133], %246 {strides = array<i32>} : memref<4x8x8xbf16, #tpu.memory_space<vmem>>, vector<1x8x8xbf16>,
      %247 = vector.extract_strided_slice %205 {offsets = [0, 48], sizes = [8, 8], strides = [1, 1]} : vector<8x96xf32> to vector<8x8xf32>
      %248 = arith.truncf %247 : vector<8x8xf32> to vector<8x8xbf16>
      %c2_134 = arith.constant 2 : index
      %c0_135 = arith.constant 0 : index
      %c0_136 = arith.constant 0 : index
      %249 = vector.load %arg20[%c2_134, %c0_135, %c0_136] : memref<4x8x8xbf16, #tpu.memory_space<vmem>>, vector<1x8x8xbf16>
      %250 = vector.shape_cast %249 : vector<1x8x8xbf16> to vector<8x8xbf16>
      %251 = vector.shape_cast %248 : vector<8x8xbf16> to vector<1x8x8xbf16>
      tpu.vector_store %arg20[%c2_134, %c0_135, %c0_136], %251 {strides = array<i32>} : memref<4x8x8xbf16, #tpu.memory_space<vmem>>, vector<1x8x8xbf16>,
      %252 = vector.extract_strided_slice %205 {offsets = [0, 80], sizes = [8, 8], strides = [1, 1]} : vector<8x96xf32> to vector<8x8xf32>
      %253 = arith.truncf %252 : vector<8x8xf32> to vector<8x8xbf16>
      %c2_137 = arith.constant 2 : index
      %c0_138 = arith.constant 0 : index
      %c0_139 = arith.constant 0 : index
      %254 = vector.load %arg21[%c2_137, %c0_138, %c0_139] : memref<4x8x8xbf16, #tpu.memory_space<vmem>>, vector<1x8x8xbf16>
      %255 = vector.shape_cast %254 : vector<1x8x8xbf16> to vector<8x8xbf16>
      %256 = vector.shape_cast %253 : vector<8x8xbf16> to vector<1x8x8xbf16>
      tpu.vector_store %arg21[%c2_137, %c0_138, %c0_139], %256 {strides = array<i32>} : memref<4x8x8xbf16, #tpu.memory_space<vmem>>, vector<1x8x8xbf16>,
      %257 = vector.extract_strided_slice %205 {offsets = [0, 24], sizes = [8, 8], strides = [1, 1]} : vector<8x96xf32> to vector<8x8xf32>
      %cst_140 = arith.constant 0.353553385 : f32
      %258 = vector.broadcast %cst_140 : f32 to vector<8x8xf32>
      %259 = arith.mulf %257, %258 : vector<8x8xf32>
      %260 = arith.truncf %259 : vector<8x8xf32> to vector<8x8xbf16>
      %c3_141 = arith.constant 3 : index
      %c0_142 = arith.constant 0 : index
      %c0_143 = arith.constant 0 : index
      %261 = vector.load %arg19[%c3_141, %c0_142, %c0_143] : memref<4x8x8xbf16, #tpu.memory_space<vmem>>, vector<1x8x8xbf16>
      %262 = vector.shape_cast %261 : vector<1x8x8xbf16> to vector<8x8xbf16>
      %263 = vector.shape_cast %260 : vector<8x8xbf16> to vector<1x8x8xbf16>
      tpu.vector_store %arg19[%c3_141, %c0_142, %c0_143], %263 {strides = array<i32>} : memref<4x8x8xbf16, #tpu.memory_space<vmem>>, vector<1x8x8xbf16>,
      %264 = vector.extract_strided_slice %205 {offsets = [0, 56], sizes = [8, 8], strides = [1, 1]} : vector<8x96xf32> to vector<8x8xf32>
      %265 = arith.truncf %264 : vector<8x8xf32> to vector<8x8xbf16>
      %c3_144 = arith.constant 3 : index
      %c0_145 = arith.constant 0 : index
      %c0_146 = arith.constant 0 : index
      %266 = vector.load %arg20[%c3_144, %c0_145, %c0_146] : memref<4x8x8xbf16, #tpu.memory_space<vmem>>, vector<1x8x8xbf16>
      %267 = vector.shape_cast %266 : vector<1x8x8xbf16> to vector<8x8xbf16>
      %268 = vector.shape_cast %265 : vector<8x8xbf16> to vector<1x8x8xbf16>
      tpu.vector_store %arg20[%c3_144, %c0_145, %c0_146], %268 {strides = array<i32>} : memref<4x8x8xbf16, #tpu.memory_space<vmem>>, vector<1x8x8xbf16>,
      %269 = vector.extract_strided_slice %205 {offsets = [0, 88], sizes = [8, 8], strides = [1, 1]} : vector<8x96xf32> to vector<8x8xf32>
      %270 = arith.truncf %269 : vector<8x8xf32> to vector<8x8xbf16>
      %c3_147 = arith.constant 3 : index
      %c0_148 = arith.constant 0 : index
      %c0_149 = arith.constant 0 : index
      %271 = vector.load %arg21[%c3_147, %c0_148, %c0_149] : memref<4x8x8xbf16, #tpu.memory_space<vmem>>, vector<1x8x8xbf16>
      %272 = vector.shape_cast %271 : vector<1x8x8xbf16> to vector<8x8xbf16>
      %273 = vector.shape_cast %270 : vector<8x8xbf16> to vector<1x8x8xbf16>
      tpu.vector_store %arg21[%c3_147, %c0_148, %c0_149], %273 {strides = array<i32>} : memref<4x8x8xbf16, #tpu.memory_space<vmem>>, vector<1x8x8xbf16>,
    } else {
    }
    %c8_i32 = arith.constant 8 : i32
    %3 = arith.muli %arg1, %c8_i32 : i32
    %4 = tpu.assume_multiple %3, 8 : i32
    %c0 = arith.constant 0 : index
    %c0_1 = arith.constant 0 : index
    %c0_2 = arith.constant 0 : index
    %5 = vector.load %arg3[%c0, %c0_1, %c0_2] : memref<1x8x32xf32, #tpu.memory_space<vmem>>, vector<1x8x32xf32>
    %6 = vector.shape_cast %5 : vector<1x8x32xf32> to vector<8x32xf32>
    %c0_3 = arith.constant 0 : index
    %7 = arith.index_cast %4 : i32 to index
    %c0_4 = arith.constant 0 : index
    %8 = vector.load %arg19[%c0_3, %7, %c0_4] : memref<4x8x8xbf16, #tpu.memory_space<vmem>>, vector<1x8x8xbf16>
    %9 = vector.shape_cast %8 : vector<1x8x8xbf16> to vector<8x8xbf16>
    %c0_5 = arith.constant 0 : index
    %c0_6 = arith.constant 0 : index
    %c0_7 = arith.constant 0 : index
    %10 = vector.load %arg20[%c0_5, %c0_6, %c0_7] : memref<4x8x8xbf16, #tpu.memory_space<vmem>>, vector<1x8x8xbf16>
    %11 = vector.shape_cast %10 : vector<1x8x8xbf16> to vector<8x8xbf16>
    %c0_8 = arith.constant 0 : index
    %c0_9 = arith.constant 0 : index
    %c0_10 = arith.constant 0 : index
    %12 = vector.load %arg21[%c0_8, %c0_9, %c0_10] : memref<4x8x8xbf16, #tpu.memory_space<vmem>>, vector<1x8x8xbf16>
    %13 = vector.shape_cast %12 : vector<1x8x8xbf16> to vector<8x8xbf16>
    %cst = arith.constant dense<0.000000e+00> : vector<8x8xf32>
    %14 = tpu.matmul %9, %11, %cst {dimension_numbers = #tpu.dot_dimension_numbers<[1], [1], [0], [0], [0, 0, 1, 0], [], []>} : vector<8x8xbf16>, vector<8x8xbf16>, vector<8x8xf32> -> vector<8x8xf32>
    %cst_11 = arith.constant dense<0xFF800000> : vector<8xf32>
    %15 = vector.multi_reduction <maximumf>, %14, %cst_11 [1] : vector<8x8xf32> to vector<8xf32>
    %16 = vector.shape_cast %15 : vector<8xf32> to vector<8x1xf32>
    %17 = vector.broadcast %16 : vector<8x1xf32> to vector<8x8xf32>
    %18 = arith.subf %14, %17 : vector<8x8xf32>
    %19 = math.exp %18 : vector<8x8xf32>
    %cst_12 = arith.constant dense<0.000000e+00> : vector<8xf32>
    %20 = vector.multi_reduction <add>, %19, %cst_12 [1] : vector<8x8xf32> to vector<8xf32>
    %21 = vector.shape_cast %20 : vector<8xf32> to vector<8x1xf32>
    %22 = tpu.reciprocal %21 {approx = true} : vector<8x1xf32> -> vector<8x1xf32>
    %23 = vector.broadcast %22 : vector<8x1xf32> to vector<8x8xf32>
    %24 = arith.mulf %19, %23 : vector<8x8xf32>
    %25 = arith.truncf %24 : vector<8x8xf32> to vector<8x8xbf16>
    %cst_13 = arith.constant dense<0.000000e+00> : vector<8x8xf32>
    %26 = tpu.matmul %25, %13, %cst_13 {dimension_numbers = #tpu.dot_dimension_numbers<[1], [0], [0], [1], [0, 0, 1, 1], [], []>} : vector<8x8xbf16>, vector<8x8xbf16>, vector<8x8xf32> -> vector<8x8xf32>
    %27 = arith.truncf %26 : vector<8x8xf32> to vector<8x8xbf16>
    %c0_14 = arith.constant 0 : index
    %c0_15 = arith.constant 0 : index
    %28 = vector.load %arg22[%c0_14, %c0_15] : memref<8x32xbf16, #tpu.memory_space<vmem>>, vector<8x8xbf16>
    tpu.vector_store %arg22[%c0_14, %c0_15], %27 {strides = array<i32>} : memref<8x32xbf16, #tpu.memory_space<vmem>>, vector<8x8xbf16>,
    %c1 = arith.constant 1 : index
    %29 = arith.index_cast %4 : i32 to index
    %c0_16 = arith.constant 0 : index
    %30 = vector.load %arg19[%c1, %29, %c0_16] : memref<4x8x8xbf16, #tpu.memory_space<vmem>>, vector<1x8x8xbf16>
    %31 = vector.shape_cast %30 : vector<1x8x8xbf16> to vector<8x8xbf16>
    %c1_17 = arith.constant 1 : index
    %c0_18 = arith.constant 0 : index
    %c0_19 = arith.constant 0 : index
    %32 = vector.load %arg20[%c1_17, %c0_18, %c0_19] : memref<4x8x8xbf16, #tpu.memory_space<vmem>>, vector<1x8x8xbf16>
    %33 = vector.shape_cast %32 : vector<1x8x8xbf16> to vector<8x8xbf16>
    %c1_20 = arith.constant 1 : index
    %c0_21 = arith.constant 0 : index
    %c0_22 = arith.constant 0 : index
    %34 = vector.load %arg21[%c1_20, %c0_21, %c0_22] : memref<4x8x8xbf16, #tpu.memory_space<vmem>>, vector<1x8x8xbf16>
    %35 = vector.shape_cast %34 : vector<1x8x8xbf16> to vector<8x8xbf16>
    %cst_23 = arith.constant dense<0.000000e+00> : vector<8x8xf32>
    %36 = tpu.matmul %31, %33, %cst_23 {dimension_numbers = #tpu.dot_dimension_numbers<[1], [1], [0], [0], [0, 0, 1, 0], [], []>} : vector<8x8xbf16>, vector<8x8xbf16>, vector<8x8xf32> -> vector<8x8xf32>
    %cst_24 = arith.constant dense<0xFF800000> : vector<8xf32>
    %37 = vector.multi_reduction <maximumf>, %36, %cst_24 [1] : vector<8x8xf32> to vector<8xf32>
    %38 = vector.shape_cast %37 : vector<8xf32> to vector<8x1xf32>
    %39 = vector.broadcast %38 : vector<8x1xf32> to vector<8x8xf32>
    %40 = arith.subf %36, %39 : vector<8x8xf32>
    %41 = math.exp %40 : vector<8x8xf32>
    %cst_25 = arith.constant dense<0.000000e+00> : vector<8xf32>
    %42 = vector.multi_reduction <add>, %41, %cst_25 [1] : vector<8x8xf32> to vector<8xf32>
    %43 = vector.shape_cast %42 : vector<8xf32> to vector<8x1xf32>
    %44 = tpu.reciprocal %43 {approx = true} : vector<8x1xf32> -> vector<8x1xf32>
    %45 = vector.broadcast %44 : vector<8x1xf32> to vector<8x8xf32>
    %46 = arith.mulf %41, %45 : vector<8x8xf32>
    %47 = arith.truncf %46 : vector<8x8xf32> to vector<8x8xbf16>
    %cst_26 = arith.constant dense<0.000000e+00> : vector<8x8xf32>
    %48 = tpu.matmul %47, %35, %cst_26 {dimension_numbers = #tpu.dot_dimension_numbers<[1], [0], [0], [1], [0, 0, 1, 1], [], []>} : vector<8x8xbf16>, vector<8x8xbf16>, vector<8x8xf32> -> vector<8x8xf32>
    %49 = arith.truncf %48 : vector<8x8xf32> to vector<8x8xbf16>
    %c0_27 = arith.constant 0 : index
    %c8 = arith.constant 8 : index
    %50 = vector.load %arg22[%c0_27, %c8] : memref<8x32xbf16, #tpu.memory_space<vmem>>, vector<8x8xbf16>
    tpu.vector_store %arg22[%c0_27, %c8], %49 {strides = array<i32>} : memref<8x32xbf16, #tpu.memory_space<vmem>>, vector<8x8xbf16>,
    %c2 = arith.constant 2 : index
    %51 = arith.index_cast %4 : i32 to index
    %c0_28 = arith.constant 0 : index
    %52 = vector.load %arg19[%c2, %51, %c0_28] : memref<4x8x8xbf16, #tpu.memory_space<vmem>>, vector<1x8x8xbf16>
    %53 = vector.shape_cast %52 : vector<1x8x8xbf16> to vector<8x8xbf16>
    %c2_29 = arith.constant 2 : index
    %c0_30 = arith.constant 0 : index
    %c0_31 = arith.constant 0 : index
    %54 = vector.load %arg20[%c2_29, %c0_30, %c0_31] : memref<4x8x8xbf16, #tpu.memory_space<vmem>>, vector<1x8x8xbf16>
    %55 = vector.shape_cast %54 : vector<1x8x8xbf16> to vector<8x8xbf16>
    %c2_32 = arith.constant 2 : index
    %c0_33 = arith.constant 0 : index
    %c0_34 = arith.constant 0 : index
    %56 = vector.load %arg21[%c2_32, %c0_33, %c0_34] : memref<4x8x8xbf16, #tpu.memory_space<vmem>>, vector<1x8x8xbf16>
    %57 = vector.shape_cast %56 : vector<1x8x8xbf16> to vector<8x8xbf16>
    %cst_35 = arith.constant dense<0.000000e+00> : vector<8x8xf32>
    %58 = tpu.matmul %53, %55, %cst_35 {dimension_numbers = #tpu.dot_dimension_numbers<[1], [1], [0], [0], [0, 0, 1, 0], [], []>} : vector<8x8xbf16>, vector<8x8xbf16>, vector<8x8xf32> -> vector<8x8xf32>
    %cst_36 = arith.constant dense<0xFF800000> : vector<8xf32>
    %59 = vector.multi_reduction <maximumf>, %58, %cst_36 [1] : vector<8x8xf32> to vector<8xf32>
    %60 = vector.shape_cast %59 : vector<8xf32> to vector<8x1xf32>
    %61 = vector.broadcast %60 : vector<8x1xf32> to vector<8x8xf32>
    %62 = arith.subf %58, %61 : vector<8x8xf32>
    %63 = math.exp %62 : vector<8x8xf32>
    %cst_37 = arith.constant dense<0.000000e+00> : vector<8xf32>
    %64 = vector.multi_reduction <add>, %63, %cst_37 [1] : vector<8x8xf32> to vector<8xf32>
    %65 = vector.shape_cast %64 : vector<8xf32> to vector<8x1xf32>
    %66 = tpu.reciprocal %65 {approx = true} : vector<8x1xf32> -> vector<8x1xf32>
    %67 = vector.broadcast %66 : vector<8x1xf32> to vector<8x8xf32>
    %68 = arith.mulf %63, %67 : vector<8x8xf32>
    %69 = arith.truncf %68 : vector<8x8xf32> to vector<8x8xbf16>
    %cst_38 = arith.constant dense<0.000000e+00> : vector<8x8xf32>
    %70 = tpu.matmul %69, %57, %cst_38 {dimension_numbers = #tpu.dot_dimension_numbers<[1], [0], [0], [1], [0, 0, 1, 1], [], []>} : vector<8x8xbf16>, vector<8x8xbf16>, vector<8x8xf32> -> vector<8x8xf32>
    %71 = arith.truncf %70 : vector<8x8xf32> to vector<8x8xbf16>
    %c0_39 = arith.constant 0 : index
    %c16 = arith.constant 16 : index
    %72 = vector.load %arg22[%c0_39, %c16] : memref<8x32xbf16, #tpu.memory_space<vmem>>, vector<8x8xbf16>
    tpu.vector_store %arg22[%c0_39, %c16], %71 {strides = array<i32>} : memref<8x32xbf16, #tpu.memory_space<vmem>>, vector<8x8xbf16>,
    %c3 = arith.constant 3 : index
    %73 = arith.index_cast %4 : i32 to index
    %c0_40 = arith.constant 0 : index
    %74 = vector.load %arg19[%c3, %73, %c0_40] : memref<4x8x8xbf16, #tpu.memory_space<vmem>>, vector<1x8x8xbf16>
    %75 = vector.shape_cast %74 : vector<1x8x8xbf16> to vector<8x8xbf16>
    %c3_41 = arith.constant 3 : index
    %c0_42 = arith.constant 0 : index
    %c0_43 = arith.constant 0 : index
    %76 = vector.load %arg20[%c3_41, %c0_42, %c0_43] : memref<4x8x8xbf16, #tpu.memory_space<vmem>>, vector<1x8x8xbf16>
    %77 = vector.shape_cast %76 : vector<1x8x8xbf16> to vector<8x8xbf16>
    %c3_44 = arith.constant 3 : index
    %c0_45 = arith.constant 0 : index
    %c0_46 = arith.constant 0 : index
    %78 = vector.load %arg21[%c3_44, %c0_45, %c0_46] : memref<4x8x8xbf16, #tpu.memory_space<vmem>>, vector<1x8x8xbf16>
    %79 = vector.shape_cast %78 : vector<1x8x8xbf16> to vector<8x8xbf16>
    %cst_47 = arith.constant dense<0.000000e+00> : vector<8x8xf32>
    %80 = tpu.matmul %75, %77, %cst_47 {dimension_numbers = #tpu.dot_dimension_numbers<[1], [1], [0], [0], [0, 0, 1, 0], [], []>} : vector<8x8xbf16>, vector<8x8xbf16>, vector<8x8xf32> -> vector<8x8xf32>
    %cst_48 = arith.constant dense<0xFF800000> : vector<8xf32>
    %81 = vector.multi_reduction <maximumf>, %80, %cst_48 [1] : vector<8x8xf32> to vector<8xf32>
    %82 = vector.shape_cast %81 : vector<8xf32> to vector<8x1xf32>
    %83 = vector.broadcast %82 : vector<8x1xf32> to vector<8x8xf32>
    %84 = arith.subf %80, %83 : vector<8x8xf32>
    %85 = math.exp %84 : vector<8x8xf32>
    %cst_49 = arith.constant dense<0.000000e+00> : vector<8xf32>
    %86 = vector.multi_reduction <add>, %85, %cst_49 [1] : vector<8x8xf32> to vector<8xf32>
    %87 = vector.shape_cast %86 : vector<8xf32> to vector<8x1xf32>
    %88 = tpu.reciprocal %87 {approx = true} : vector<8x1xf32> -> vector<8x1xf32>
    %89 = vector.broadcast %88 : vector<8x1xf32> to vector<8x8xf32>
    %90 = arith.mulf %85, %89 : vector<8x8xf32>
    %91 = arith.truncf %90 : vector<8x8xf32> to vector<8x8xbf16>
    %cst_50 = arith.constant dense<0.000000e+00> : vector<8x8xf32>
    %92 = tpu.matmul %91, %79, %cst_50 {dimension_numbers = #tpu.dot_dimension_numbers<[1], [0], [0], [1], [0, 0, 1, 1], [], []>} : vector<8x8xbf16>, vector<8x8xbf16>, vector<8x8xf32> -> vector<8x8xf32>
    %93 = arith.truncf %92 : vector<8x8xf32> to vector<8x8xbf16>
    %c0_51 = arith.constant 0 : index
    %c24 = arith.constant 24 : index
    %94 = vector.load %arg22[%c0_51, %c24] : memref<8x32xbf16, #tpu.memory_space<vmem>>, vector<8x8xbf16>
    tpu.vector_store %arg22[%c0_51, %c24], %93 {strides = array<i32>} : memref<8x32xbf16, #tpu.memory_space<vmem>>, vector<8x8xbf16>,
    %c0_52 = arith.constant 0 : index
    %c0_53 = arith.constant 0 : index
    %95 = vector.load %arg22[%c0_52, %c0_53] : memref<8x32xbf16, #tpu.memory_space<vmem>>, vector<8x32xbf16>
    %c0_54 = arith.constant 0 : index
    %c0_55 = arith.constant 0 : index
    %96 = vector.load %arg8[%c0_54, %c0_55] : memref<32x32xbf16, #tpu.memory_space<vmem>>, vector<32x32xbf16>
    %cst_56 = arith.constant dense<0.000000e+00> : vector<8x32xf32>
    %97 = tpu.matmul %95, %96, %cst_56 {dimension_numbers = #tpu.dot_dimension_numbers<[1], [0], [0], [1], [0, 0, 1, 1], [], []>} : vector<8x32xbf16>, vector<32x32xbf16>, vector<8x32xf32> -> vector<8x32xf32>
    %c0_57 = arith.constant 0 : index
    %c0_58 = arith.constant 0 : index
    %98 = vector.load %arg9[%c0_57, %c0_58] : memref<1x32xf32, #tpu.memory_space<vmem>>, vector<1x32xf32>
    %99 = vector.broadcast %98 : vector<1x32xf32> to vector<8x32xf32>
    %100 = arith.addf %97, %99 : vector<8x32xf32>
    %101 = arith.addf %6, %100 : vector<8x32xf32>
    %c0_59 = arith.constant 0 : index
    %c0_60 = arith.constant 0 : index
    %102 = vector.load %arg10[%c0_59, %c0_60] : memref<1x32xf32, #tpu.memory_space<vmem>>, vector<1x32xf32>
    %c0_61 = arith.constant 0 : index
    %c0_62 = arith.constant 0 : index
    %103 = vector.load %arg11[%c0_61, %c0_62] : memref<1x32xf32, #tpu.memory_space<vmem>>, vector<1x32xf32>
    %cst_63 = arith.constant dense<0.000000e+00> : vector<8xf32>
    %104 = vector.multi_reduction <add>, %101, %cst_63 [1] : vector<8x32xf32> to vector<8xf32>
    %105 = vector.shape_cast %104 : vector<8xf32> to vector<8x1xf32>
    %cst_64 = arith.constant 3.200000e+01 : f32
    %106 = vector.broadcast %cst_64 : f32 to vector<8x1xf32>
    %107 = arith.divf %105, %106 : vector<8x1xf32>
    %108 = vector.broadcast %107 : vector<8x1xf32> to vector<8x32xf32>
    %109 = arith.subf %101, %108 : vector<8x32xf32>
    %110 = arith.mulf %109, %109 : vector<8x32xf32>
    %cst_65 = arith.constant dense<0.000000e+00> : vector<8xf32>
    %111 = vector.multi_reduction <add>, %110, %cst_65 [1] : vector<8x32xf32> to vector<8xf32>
    %112 = vector.shape_cast %111 : vector<8xf32> to vector<8x1xf32>
    %cst_66 = arith.constant 3.200000e+01 : f32
    %113 = vector.broadcast %cst_66 : f32 to vector<8x1xf32>
    %114 = arith.divf %112, %113 : vector<8x1xf32>
    %115 = vector.broadcast %107 : vector<8x1xf32> to vector<8x32xf32>
    %116 = arith.subf %101, %115 : vector<8x32xf32>
    %cst_67 = arith.constant 9.99999974E-6 : f32
    %117 = vector.broadcast %cst_67 : f32 to vector<8x1xf32>
    %118 = arith.addf %114, %117 : vector<8x1xf32>
    %119 = math.rsqrt %118 : vector<8x1xf32>
    %120 = vector.broadcast %119 : vector<8x1xf32> to vector<8x32xf32>
    %121 = arith.mulf %116, %120 : vector<8x32xf32>
    %122 = vector.broadcast %102 : vector<1x32xf32> to vector<8x32xf32>
    %123 = arith.mulf %121, %122 : vector<8x32xf32>
    %124 = vector.broadcast %103 : vector<1x32xf32> to vector<8x32xf32>
    %125 = arith.addf %123, %124 : vector<8x32xf32>
    %126 = arith.truncf %125 : vector<8x32xf32> to vector<8x32xbf16>
    %c0_68 = arith.constant 0 : index
    %c0_69 = arith.constant 0 : index
    %127 = vector.load %arg12[%c0_68, %c0_69] : memref<32x128xbf16, #tpu.memory_space<vmem>>, vector<32x128xbf16>
    %cst_70 = arith.constant dense<0.000000e+00> : vector<8x128xf32>
    %128 = tpu.matmul %126, %127, %cst_70 {dimension_numbers = #tpu.dot_dimension_numbers<[1], [0], [0], [1], [0, 0, 1, 1], [], []>} : vector<8x32xbf16>, vector<32x128xbf16>, vector<8x128xf32> -> vector<8x128xf32>
    %c0_71 = arith.constant 0 : index
    %c0_72 = arith.constant 0 : index
    %129 = vector.load %arg13[%c0_71, %c0_72] : memref<1x128xf32, #tpu.memory_space<vmem>>, vector<1x128xf32>
    %130 = vector.broadcast %129 : vector<1x128xf32> to vector<8x128xf32>
    %131 = arith.addf %128, %130 : vector<8x128xf32>
    %cst_73 = arith.constant 5.000000e-01 : f32
    %132 = vector.broadcast %cst_73 : f32 to vector<8x128xf32>
    %133 = arith.mulf %132, %131 : vector<8x128xf32>
    %cst_74 = arith.constant 0.707106769 : f32
    %134 = vector.broadcast %cst_74 : f32 to vector<8x128xf32>
    %135 = arith.mulf %131, %134 : vector<8x128xf32>
    %136 = math.erf %135 : vector<8x128xf32>
    %cst_75 = arith.constant 1.000000e+00 : f32
    %137 = vector.broadcast %cst_75 : f32 to vector<8x128xf32>
    %138 = arith.addf %137, %136 : vector<8x128xf32>
    %139 = arith.mulf %133, %138 : vector<8x128xf32>
    %140 = arith.truncf %139 : vector<8x128xf32> to vector<8x128xbf16>
    %c0_76 = arith.constant 0 : index
    %c0_77 = arith.constant 0 : index
    %141 = vector.load %arg14[%c0_76, %c0_77] : memref<128x32xbf16, #tpu.memory_space<vmem>>, vector<128x32xbf16>
    %cst_78 = arith.constant dense<0.000000e+00> : vector<8x32xf32>
    %142 = tpu.matmul %140, %141, %cst_78 {dimension_numbers = #tpu.dot_dimension_numbers<[1], [0], [0], [1], [0, 0, 1, 1], [], []>} : vector<8x128xbf16>, vector<128x32xbf16>, vector<8x32xf32> -> vector<8x32xf32>
    %c0_79 = arith.constant 0 : index
    %c0_80 = arith.constant 0 : index
    %143 = vector.load %arg15[%c0_79, %c0_80] : memref<1x32xf32, #tpu.memory_space<vmem>>, vector<1x32xf32>
    %144 = vector.broadcast %143 : vector<1x32xf32> to vector<8x32xf32>
    %145 = arith.addf %142, %144 : vector<8x32xf32>
    %146 = arith.addf %101, %145 : vector<8x32xf32>
    %c0_81 = arith.constant 0 : index
    %c0_82 = arith.constant 0 : index
    %147 = vector.load %arg16[%c0_81, %c0_82] : memref<1x32xf32, #tpu.memory_space<vmem>>, vector<1x32xf32>
    %c0_83 = arith.constant 0 : index
    %c0_84 = arith.constant 0 : index
    %148 = vector.load %arg17[%c0_83, %c0_84] : memref<1x32xf32, #tpu.memory_space<vmem>>, vector<1x32xf32>
    %cst_85 = arith.constant dense<0.000000e+00> : vector<8xf32>
    %149 = vector.multi_reduction <add>, %146, %cst_85 [1] : vector<8x32xf32> to vector<8xf32>
    %150 = vector.shape_cast %149 : vector<8xf32> to vector<8x1xf32>
    %cst_86 = arith.constant 3.200000e+01 : f32
    %151 = vector.broadcast %cst_86 : f32 to vector<8x1xf32>
    %152 = arith.divf %150, %151 : vector<8x1xf32>
    %153 = vector.broadcast %152 : vector<8x1xf32> to vector<8x32xf32>
    %154 = arith.subf %146, %153 : vector<8x32xf32>
    %155 = arith.mulf %154, %154 : vector<8x32xf32>
    %cst_87 = arith.constant dense<0.000000e+00> : vector<8xf32>
    %156 = vector.multi_reduction <add>, %155, %cst_87 [1] : vector<8x32xf32> to vector<8xf32>
    %157 = vector.shape_cast %156 : vector<8xf32> to vector<8x1xf32>
    %cst_88 = arith.constant 3.200000e+01 : f32
    %158 = vector.broadcast %cst_88 : f32 to vector<8x1xf32>
    %159 = arith.divf %157, %158 : vector<8x1xf32>
    %160 = vector.broadcast %152 : vector<8x1xf32> to vector<8x32xf32>
    %161 = arith.subf %146, %160 : vector<8x32xf32>
    %cst_89 = arith.constant 9.99999974E-6 : f32
    %162 = vector.broadcast %cst_89 : f32 to vector<8x1xf32>
    %163 = arith.addf %159, %162 : vector<8x1xf32>
    %164 = math.rsqrt %163 : vector<8x1xf32>
    %165 = vector.broadcast %164 : vector<8x1xf32> to vector<8x32xf32>
    %166 = arith.mulf %161, %165 : vector<8x32xf32>
    %167 = vector.broadcast %147 : vector<1x32xf32> to vector<8x32xf32>
    %168 = arith.mulf %166, %167 : vector<8x32xf32>
    %169 = vector.broadcast %148 : vector<1x32xf32> to vector<8x32xf32>
    %170 = arith.addf %168, %169 : vector<8x32xf32>
    %c0_90 = arith.constant 0 : index
    %c0_91 = arith.constant 0 : index
    %c0_92 = arith.constant 0 : index
    %171 = vector.load %arg18[%c0_90, %c0_91, %c0_92] : memref<1x8x32xf32, #tpu.memory_space<vmem>>, vector<1x8x32xf32>
    %172 = vector.shape_cast %171 : vector<1x8x32xf32> to vector<8x32xf32>
    %173 = vector.shape_cast %170 : vector<8x32xf32> to vector<1x8x32xf32>
    tpu.vector_store %arg18[%c0_90, %c0_91, %c0_92], %173 {strides = array<i32>} : memref<1x8x32xf32, #tpu.memory_space<vmem>>, vector<1x8x32xf32>,
    return
  }
  func.func @transform_0(%arg0: i32, %arg1: i32) -> (i32, i32, i32) {
    %c0_i32 = arith.constant 0 : i32
    %c0_i32_0 = arith.constant 0 : i32
    %c0_i32_1 = arith.constant 0 : i32
    return %arg0, %c0_i32, %c0_i32_0 : i32, i32, i32
  }
  func.func @transform_1(%arg0: i32, %arg1: i32) -> (i32, i32, i32) {
    %c0_i32 = arith.constant 0 : i32
    %c0_i32_0 = arith.constant 0 : i32
    return %arg0, %arg1, %c0_i32 : i32, i32, i32
  }
  func.func @transform_2(%arg0: i32, %arg1: i32) -> (i32, i32) {
    %c0_i32 = arith.constant 0 : i32
    %c0_i32_0 = arith.constant 0 : i32
    %c0_i32_1 = arith.constant 0 : i32
    return %c0_i32, %c0_i32_0 : i32, i32
  }
  func.func @transform_3(%arg0: i32, %arg1: i32) -> (i32, i32) {
    %c0_i32 = arith.constant 0 : i32
    %c0_i32_0 = arith.constant 0 : i32
    %c0_i32_1 = arith.constant 0 : i32
    return %c0_i32, %c0_i32_0 : i32, i32
  }
  func.func @transform_4(%arg0: i32, %arg1: i32) -> (i32, i32) {
    %c0_i32 = arith.constant 0 : i32
    %c0_i32_0 = arith.constant 0 : i32
    %c0_i32_1 = arith.constant 0 : i32
    return %c0_i32, %c0_i32_0 : i32, i32
  }
  func.func @transform_5(%arg0: i32, %arg1: i32) -> (i32, i32) {
    %c0_i32 = arith.constant 0 : i32
    %c0_i32_0 = arith.constant 0 : i32
    %c0_i32_1 = arith.constant 0 : i32
    return %c0_i32, %c0_i32_0 : i32, i32
  }
  func.func @transform_6(%arg0: i32, %arg1: i32) -> (i32, i32) {
    %c0_i32 = arith.constant 0 : i32
    %c0_i32_0 = arith.constant 0 : i32
    %c0_i32_1 = arith.constant 0 : i32
    return %c0_i32, %c0_i32_0 : i32, i32
  }
  func.func @transform_7(%arg0: i32, %arg1: i32) -> (i32, i32) {
    %c0_i32 = arith.constant 0 : i32
    %c0_i32_0 = arith.constant 0 : i32
    %c0_i32_1 = arith.constant 0 : i32
    return %c0_i32, %c0_i32_0 : i32, i32
  }
  func.func @transform_8(%arg0: i32, %arg1: i32) -> (i32, i32) {
    %c0_i32 = arith.constant 0 : i32
    %c0_i32_0 = arith.constant 0 : i32
    %c0_i32_1 = arith.constant 0 : i32
    return %c0_i32, %c0_i32_0 : i32, i32
  }
  func.func @transform_9(%arg0: i32, %arg1: i32) -> (i32, i32) {
    %c0_i32 = arith.constant 0 : i32
    %c0_i32_0 = arith.constant 0 : i32
    %c0_i32_1 = arith.constant 0 : i32
    return %c0_i32, %c0_i32_0 : i32, i32
  }
  func.func @transform_10(%arg0: i32, %arg1: i32) -> (i32, i32) {
    %c0_i32 = arith.constant 0 : i32
    %c0_i32_0 = arith.constant 0 : i32
    %c0_i32_1 = arith.constant 0 : i32
    return %c0_i32, %c0_i32_0 : i32, i32
  }
  func.func @transform_11(%arg0: i32, %arg1: i32) -> (i32, i32) {
    %c0_i32 = arith.constant 0 : i32
    %c0_i32_0 = arith.constant 0 : i32
    %c0_i32_1 = arith.constant 0 : i32
    return %c0_i32, %c0_i32_0 : i32, i32
  }
  func.func @transform_12(%arg0: i32, %arg1: i32) -> (i32, i32) {
    %c0_i32 = arith.constant 0 : i32
    %c0_i32_0 = arith.constant 0 : i32
    %c0_i32_1 = arith.constant 0 : i32
    return %c0_i32, %c0_i32_0 : i32, i32
  }
  func.func @transform_13(%arg0: i32, %arg1: i32) -> (i32, i32) {
    %c0_i32 = arith.constant 0 : i32
    %c0_i32_0 = arith.constant 0 : i32
    %c0_i32_1 = arith.constant 0 : i32
    return %c0_i32, %c0_i32_0 : i32, i32
  }
  func.func @transform_14(%arg0: i32, %arg1: i32) -> (i32, i32) {
    %c0_i32 = arith.constant 0 : i32
    %c0_i32_0 = arith.constant 0 : i32
    %c0_i32_1 = arith.constant 0 : i32
    return %c0_i32, %c0_i32_0 : i32, i32
  }
  func.func @transform_15(%arg0: i32, %arg1: i32) -> (i32, i32) {
    %c0_i32 = arith.constant 0 : i32
    %c0_i32_0 = arith.constant 0 : i32
    %c0_i32_1 = arith.constant 0 : i32
    return %c0_i32, %c0_i32_0 : i32, i32
  }
  func.func @transform_16(%arg0: i32, %arg1: i32) -> (i32, i32, i32) {
    %c0_i32 = arith.constant 0 : i32
    %c0_i32_0 = arith.constant 0 : i32
    return %arg0, %arg1, %c0_i32 : i32, i32, i32
  }
}

</mosaic_0001>

<llo_original>
// kernel: tpu_custom_call.1
$region0: #{tpu_custom_call.1}
  #allocation0 [shape = 'u32[]', space=smem, size = 0x4, offset = 0x4, fixed_abs, tag = 'smem constant byte address 0x4 - core index']
  #allocation1 [shape = 'u32[144,128]{1,0:T(1,128)}', space=vmem, size = 0x12000, scoped, tag = 'internal scratch']
  #allocation2 [shape = 'bf16[4,8,8]{2,1,0:T(8,128)(2,1)}', space=vmem, size = 0x2000, scoped, tag = 'scratch operand']
  #allocation3 [shape = 'bf16[4,8,8]{2,1,0:T(8,128)(2,1)}', space=vmem, size = 0x2000, scoped, tag = 'scratch operand']
  #allocation4 [shape = 'bf16[4,8,8]{2,1,0:T(8,128)(2,1)}', space=vmem, size = 0x2000, scoped, tag = 'scratch operand']
  #allocation5 [shape = 'bf16[8,32]{1,0:T(8,128)(2,1)}', space=vmem, size = 0x800, scoped, tag = 'scratch operand']
  %s0 = inlined_call_operand.hbm [shape: f32[2,8,32], index: 0, kind: input, shape index: {}]
  %s1 = inlined_call_operand.hbm [shape: f32[2,8,32], index: 1, kind: input, shape index: {}]
  %s2 = inlined_call_operand.hbm [shape: f32[1,32], index: 2, kind: input, shape index: {}]
  %s3 = inlined_call_operand.hbm [shape: f32[1,32], index: 3, kind: input, shape index: {}]
  %s4 = inlined_call_operand.hbm [shape: bf16[32,96], index: 4, kind: input, shape index: {}]
  %s5 = inlined_call_operand.hbm [shape: f32[1,96], index: 5, kind: input, shape index: {}]
  %s6 = inlined_call_operand.hbm [shape: bf16[32,32], index: 6, kind: input, shape index: {}]
  %s7 = inlined_call_operand.hbm [shape: f32[1,32], index: 7, kind: input, shape index: {}]
  %s8 = inlined_call_operand.hbm [shape: f32[1,32], index: 8, kind: input, shape index: {}]
  %s9 = inlined_call_operand.hbm [shape: f32[1,32], index: 9, kind: input, shape index: {}]
  %s10 = inlined_call_operand.hbm [shape: bf16[32,128], index: 10, kind: input, shape index: {}]
  %s11 = inlined_call_operand.hbm [shape: f32[1,128], index: 11, kind: input, shape index: {}]
  %s12 = inlined_call_operand.hbm [shape: bf16[128,32], index: 12, kind: input, shape index: {}]
  %s13 = inlined_call_operand.hbm [shape: f32[1,32], index: 13, kind: input, shape index: {}]
  %s14 = inlined_call_operand.hbm [shape: f32[1,32], index: 14, kind: input, shape index: {}]
  %s15 = inlined_call_operand.hbm [shape: f32[1,32], index: 15, kind: input, shape index: {}]
  %s16 = inlined_call_operand.hbm [shape: f32[2,8,32], index: 16, kind: output, shape index: {}]
  %s17 = sld [smem:[#allocation0]]
  $region165: #{tpu_custom_call.1} parent=0
    _
  %s19 = ssub.s32 1, %s17
  %s20 = scalar_select 0, %s19, %s17
  $region1: #{tpu_custom_call.1} parent=0
    #allocation6 [shape = 'u8[4096]{0}', space=vmem, size = 0x1000, scoped, tag = 'input window, operand 0, single buffered']
    #allocation7 [shape = 's32[2]{0}', space=sflag, size = 0x8, scoped, tag = 'scoped memory for tpu_custom_call.1']
    #allocation8 [shape = 's32[2]{0}', space=sflag, size = 0x8, scoped, tag = 'scoped memory for tpu_custom_call.1']
    #allocation9 [shape = 'u8[8192]{0}', space=vmem, size = 0x2000, scoped, tag = 'input window, operand 1']
    #allocation10 [shape = 's32[2]{0}', space=sflag, size = 0x8, scoped, tag = 'scoped memory for tpu_custom_call.1']
    #allocation11 [shape = 'u8[512]{0}', space=vmem, size = 0x400, scoped, tag = 'input window, operand 2, single buffered']
    #allocation12 [shape = 'u8[512]{0}', space=vmem, size = 0x400, scoped, tag = 'input window, operand 3, single buffered']
    #allocation13 [shape = 's32[1]{0}', space=sflag, size = 0x4, scoped, tag = 'scoped memory for tpu_custom_call.1']
    #allocation14 [shape = 'u8[8192]{0}', space=vmem, size = 0x2000, scoped, tag = 'input window, operand 4, single buffered']
    #allocation15 [shape = 'u8[512]{0}', space=vmem, size = 0x400, scoped, tag = 'input window, operand 5, single buffered']
    #allocation16 [shape = 's32[1]{0}', space=sflag, size = 0x4, scoped, tag = 'scoped memory for tpu_custom_call.1']
    #allocation17 [shape = 'u8[8192]{0}', space=vmem, size = 0x2000, scoped, tag = 'input window, operand 6, single buffered']
    #allocation18 [shape = 'u8[512]{0}', space=vmem, size = 0x400, scoped, tag = 'input window, operand 7, single buffered']
    #allocation19 [shape = 's32[1]{0}', space=sflag, size = 0x4, scoped, tag = 'scoped memory for tpu_custom_call.1']
    #allocation20 [shape = 'u8[512]{0}', space=vmem, size = 0x400, scoped, tag = 'input window, operand 8, single buffered']
    #allocation21 [shape = 'u8[512]{0}', space=vmem, size = 0x400, scoped, tag = 'input window, operand 9, single buffered']
    #allocation22 [shape = 's32[1]{0}', space=sflag, size = 0x4, scoped, tag = 'scoped memory for tpu_custom_call.1']
    #allocation23 [shape = 'u8[8192]{0}', space=vmem, size = 0x2000, scoped, tag = 'input window, operand 10, single buffered']
    #allocation24 [shape = 'u8[512]{0}', space=vmem, size = 0x400, scoped, tag = 'input window, operand 11, single buffered']
    #allocation25 [shape = 's32[1]{0}', space=sflag, size = 0x4, scoped, tag = 'scoped memory for tpu_custom_call.1']
    #allocation26 [shape = 'u8[32768]{0}', space=vmem, size = 0x8000, scoped, tag = 'input window, operand 12, single buffered']
    #allocation27 [shape = 'u8[512]{0}', space=vmem, size = 0x400, scoped, tag = 'input window, operand 13, single buffered']
    #allocation28 [shape = 's32[1]{0}', space=sflag, size = 0x4, scoped, tag = 'scoped memory for tpu_custom_call.1']
    #allocation29 [shape = 'u8[512]{0}', space=vmem, size = 0x400, scoped, tag = 'input window, operand 14, single buffered']
    #allocation30 [shape = 'u8[512]{0}', space=vmem, size = 0x400, scoped, tag = 'input window, operand 15, single buffered']
    #allocation31 [shape = 's32[1]{0}', space=sflag, size = 0x4, scoped, tag = 'scoped memory for tpu_custom_call.1']
    #allocation32 [shape = 'u8[8192]{0}', space=vmem, size = 0x2000, scoped, tag = 'output window, operand 0']
    %21 = vsyncpa [#allocation7], 0
    %22 = vsyncpa [#allocation10], 0
    %s23 = scalar_lea.sflag [#allocation10], 1
    %24 = vsyncpa %s23, 0
    %25 = vsyncpa [#allocation13], 0
    %26 = vsyncpa [#allocation16], 0
    %27 = vsyncpa [#allocation19], 0
    %28 = vsyncpa [#allocation22], 0
    %29 = vsyncpa [#allocation25], 0
    %30 = vsyncpa [#allocation28], 0
    %31 = vsyncpa [#allocation31], 0
    %32 = vsyncpa [#allocation8], 0
    %s33 = scalar_lea.sflag [#allocation8], 1
    %34 = vsyncpa %s33, 0
    loop: start=0, step=1, limit=4
    $region2: #{tpu_custom_call.1} parent=1 // loop_pre_header
      _
    $region3: #{tpu_custom_call.1} parent=1 // loop_header
      %s36 = sphi 0, %s40
      %p37 = scmp.ge.s32.totalorder %s36, 4
      %s43 = sphi 0, %s55
      %s44 = sphi 0, %s51
      %s45 = sphi 0, %s43
      %s46 = sphi 0, %s44
      %s47 = sphi 0, %s45
      %s48 = sphi 0, %s46
      %s58 = sphi 0, %s60
      %s61 = sphi 0, %s58
      %s62 = sphi 0, %s61
      %s78 = sphi 0, %s62
      %s86 = sphi 0, %s88
      %s89 = sphi 0, %s86
      %s90 = sphi 0, %s89
      %s106 = sphi 0, %s90
      %s110 = sphi 0, %s110
      %s112 = sphi 0, %s110
      %s113 = sphi 0, %s112
      %s127 = sphi 0, %s113
      %s131 = sphi 0, %s131
      %s133 = sphi 0, %s131
      %s134 = sphi 0, %s133
      %s148 = sphi 0, %s134
      %s152 = sphi 0, %s152
      %s154 = sphi 0, %s152
      %s155 = sphi 0, %s154
      %s169 = sphi 0, %s155
      %s173 = sphi 0, %s173
      %s175 = sphi 0, %s173
      %s176 = sphi 0, %s175
      %s190 = sphi 0, %s176
      %s194 = sphi 0, %s194
      %s196 = sphi 0, %s194
      %s197 = sphi 0, %s196
      %s211 = sphi 0, %s197
      %s215 = sphi 0, %s215
      %s217 = sphi 0, %s215
      %s218 = sphi 0, %s217
      %s232 = sphi 0, %s218
      %s236 = sphi 0, %s236
      %s238 = sphi 0, %s236
      %s239 = sphi 0, %s238
      %s253 = sphi 0, %s239
      %s257 = sphi 0, %s257
      %s259 = sphi 0, %s257
      %s260 = sphi 0, %s259
      %s274 = sphi 0, %s260
      %s278 = sphi 0, %s278
      %s280 = sphi 0, %s278
      %s281 = sphi 0, %s280
      %s295 = sphi 0, %s281
      %s299 = sphi 0, %s299
      %s301 = sphi 0, %s299
      %s302 = sphi 0, %s301
      %s316 = sphi 0, %s302
      %s320 = sphi 0, %s320
      %s322 = sphi 0, %s320
      %s323 = sphi 0, %s322
      %s337 = sphi 0, %s323
      %s341 = sphi 0, %s341
      %s343 = sphi 0, %s341
      %s344 = sphi 0, %s343
      %s358 = sphi 0, %s344
      %s362 = sphi 0, %s362
      %s364 = sphi 0, %s362
      %s365 = sphi 0, %s364
      %s379 = sphi 0, %s365
      %s383 = sphi 0, %s383
      %s385 = sphi 0, %s383
      %s386 = sphi 0, %s385
      %s400 = sphi 0, %s386
      %s408 = sphi 0, %s410
      %s411 = sphi 0, %s408
      %s412 = sphi 0, %s411
      %s428 = sphi 0, %s412
    $region4: #{tpu_custom_call.1} parent=1 // loop_header_branch
      %39 = sbr.rel (%p37) target = $region8
    $region5: #{tpu_custom_call.1} parent=1 // loop_body
      %s41 = ssub.s32 %s36, 1
      %s42 = ssub.s32 %s36, 2
      %s49 = sadd.s32 1, %s44
      %p50 = scmp.ge.s32.totalorder %s49, 1
      %s51 = scalar_select %p50, 0, %s49
      %s52 = sadd.s32 1, %s43
      %s53 = scalar_select %p50, %s52, %s43
      %p54 = scmp.ge.s32.totalorder %s53, 2
      %s55 = scalar_select %p54, 0, %s53
      %s56 = ssub.s32 %s43, %s55
      %p57 = scmp.eq.s32.totalorder %s56, 0
      %s59 = sadd.s32 %s58, 1
      %s60 = scalar_select %p57, %s58, %s59
      %p63 = pneg %p57
      %p64 = scmp.eq.s32.totalorder %s36, 1
      %p65 = por %p63, %p64
      %p66 = scmp.ne.s32.totalorder %s58, %s61
      %p67 = scmp.eq.s32.totalorder %s36, 0
      %p68 = por %p66, %p67
      %p69 = scmp.ne.s32.totalorder %s58, %s61
      %p70 = scmp.eq.s32.totalorder %s41, 1
      %p71 = por %p69, %p70
      %p72 = scmp.ne.s32.totalorder %s61, %s62
      %p73 = scmp.eq.s32.totalorder %s41, 0
      %p74 = por %p72, %p73
      %p75 = scmp.ne.s32.totalorder %s61, %s62
      %p76 = scmp.eq.s32.totalorder %s42, 1
      %p77 = por %p75, %p76
      %p79 = scmp.ne.s32.totalorder %s62, %s78
      %p80 = scmp.eq.s32.totalorder %s42, 0
      %p81 = por %p79, %p80
      %s82 = ssub.s32 %s43, %s55
      %s83 = ssub.s32 %s44, %s51
      %s84 = sor.u32 %s82, %s83
      %p85 = scmp.eq.s32.totalorder %s84, 0
      %s87 = sadd.s32 %s86, 1
      %s88 = scalar_select %p85, %s86, %s87
      %p91 = pneg %p85
      %p92 = scmp.eq.s32.totalorder %s36, 1
      %p93 = por %p91, %p92
      %p94 = scmp.ne.s32.totalorder %s86, %s89
      %p95 = scmp.eq.s32.totalorder %s36, 0
      %p96 = por %p94, %p95
      %p97 = scmp.ne.s32.totalorder %s86, %s89
      %p98 = scmp.eq.s32.totalorder %s41, 1
      %p99 = por %p97, %p98
      %p100 = scmp.ne.s32.totalorder %s89, %s90
      %p101 = scmp.eq.s32.totalorder %s41, 0
      %p102 = por %p100, %p101
      %p103 = scmp.ne.s32.totalorder %s89, %s90
      %p104 = scmp.eq.s32.totalorder %s42, 1
      %p105 = por %p103, %p104
      %p107 = scmp.ne.s32.totalorder %s90, %s106
      %p108 = scmp.eq.s32.totalorder %s42, 0
      %p109 = por %p107, %p108
      %s111 = sadd.s32 %s110, 1
      %p114 = scmp.eq.s32.totalorder %s36, 1
      %p115 = scmp.ne.s32.totalorder %s110, %s112
      %p116 = scmp.eq.s32.totalorder %s36, 0
      %p117 = por %p115, %p116
      %p118 = scmp.ne.s32.totalorder %s110, %s112
      %p119 = scmp.eq.s32.totalorder %s41, 1
      %p120 = por %p118, %p119
      %p121 = scmp.ne.s32.totalorder %s112, %s113
      %p122 = scmp.eq.s32.totalorder %s41, 0
      %p123 = por %p121, %p122
      %p124 = scmp.ne.s32.totalorder %s112, %s113
      %p125 = scmp.eq.s32.totalorder %s42, 1
      %p126 = por %p124, %p125
      %p128 = scmp.ne.s32.totalorder %s113, %s127
      %p129 = scmp.eq.s32.totalorder %s42, 0
      %p130 = por %p128, %p129
      %s132 = sadd.s32 %s131, 1
      %p135 = scmp.eq.s32.totalorder %s36, 1
      %p136 = scmp.ne.s32.totalorder %s131, %s133
      %p137 = scmp.eq.s32.totalorder %s36, 0
      %p138 = por %p136, %p137
      %p139 = scmp.ne.s32.totalorder %s131, %s133
      %p140 = scmp.eq.s32.totalorder %s41, 1
      %p141 = por %p139, %p140
      %p142 = scmp.ne.s32.totalorder %s133, %s134
      %p143 = scmp.eq.s32.totalorder %s41, 0
      %p144 = por %p142, %p143
      %p145 = scmp.ne.s32.totalorder %s133, %s134
      %p146 = scmp.eq.s32.totalorder %s42, 1
      %p147 = por %p145, %p146
      %p149 = scmp.ne.s32.totalorder %s134, %s148
      %p150 = scmp.eq.s32.totalorder %s42, 0
      %p151 = por %p149, %p150
      %s153 = sadd.s32 %s152, 1
      %p156 = scmp.eq.s32.totalorder %s36, 1
      %p157 = scmp.ne.s32.totalorder %s152, %s154
      %p158 = scmp.eq.s32.totalorder %s36, 0
      %p159 = por %p157, %p158
      %p160 = scmp.ne.s32.totalorder %s152, %s154
      %p161 = scmp.eq.s32.totalorder %s41, 1
      %p162 = por %p160, %p161
      %p163 = scmp.ne.s32.totalorder %s154, %s155
      %p164 = scmp.eq.s32.totalorder %s41, 0
      %p165 = por %p163, %p164
      %p166 = scmp.ne.s32.totalorder %s154, %s155
      %p167 = scmp.eq.s32.totalorder %s42, 1
      %p168 = por %p166, %p167
      %p170 = scmp.ne.s32.totalorder %s155, %s169
      %p171 = scmp.eq.s32.totalorder %s42, 0
      %p172 = por %p170, %p171
      %s174 = sadd.s32 %s173, 1
      %p177 = scmp.eq.s32.totalorder %s36, 1
      %p178 = scmp.ne.s32.totalorder %s173, %s175
      %p179 = scmp.eq.s32.totalorder %s36, 0
      %p180 = por %p178, %p179
      %p181 = scmp.ne.s32.totalorder %s173, %s175
      %p182 = scmp.eq.s32.totalorder %s41, 1
      %p183 = por %p181, %p182
      %p184 = scmp.ne.s32.totalorder %s175, %s176
      %p185 = scmp.eq.s32.totalorder %s41, 0
      %p186 = por %p184, %p185
      %p187 = scmp.ne.s32.totalorder %s175, %s176
      %p188 = scmp.eq.s32.totalorder %s42, 1
      %p189 = por %p187, %p188
      %p191 = scmp.ne.s32.totalorder %s176, %s190
      %p192 = scmp.eq.s32.totalorder %s42, 0
      %p193 = por %p191, %p192
      %s195 = sadd.s32 %s194, 1
      %p198 = scmp.eq.s32.totalorder %s36, 1
      %p199 = scmp.ne.s32.totalorder %s194, %s196
      %p200 = scmp.eq.s32.totalorder %s36, 0
      %p201 = por %p199, %p200
      %p202 = scmp.ne.s32.totalorder %s194, %s196
      %p203 = scmp.eq.s32.totalorder %s41, 1
      %p204 = por %p202, %p203
      %p205 = scmp.ne.s32.totalorder %s196, %s197
      %p206 = scmp.eq.s32.totalorder %s41, 0
      %p207 = por %p205, %p206
      %p208 = scmp.ne.s32.totalorder %s196, %s197
      %p209 = scmp.eq.s32.totalorder %s42, 1
      %p210 = por %p208, %p209
      %p212 = scmp.ne.s32.totalorder %s197, %s211
      %p213 = scmp.eq.s32.totalorder %s42, 0
      %p214 = por %p212, %p213
      %s216 = sadd.s32 %s215, 1
      %p219 = scmp.eq.s32.totalorder %s36, 1
      %p220 = scmp.ne.s32.totalorder %s215, %s217
      %p221 = scmp.eq.s32.totalorder %s36, 0
      %p222 = por %p220, %p221
      %p223 = scmp.ne.s32.totalorder %s215, %s217
      %p224 = scmp.eq.s32.totalorder %s41, 1
      %p225 = por %p223, %p224
      %p226 = scmp.ne.s32.totalorder %s217, %s218
      %p227 = scmp.eq.s32.totalorder %s41, 0
      %p228 = por %p226, %p227
      %p229 = scmp.ne.s32.totalorder %s217, %s218
      %p230 = scmp.eq.s32.totalorder %s42, 1
      %p231 = por %p229, %p230
      %p233 = scmp.ne.s32.totalorder %s218, %s232
      %p234 = scmp.eq.s32.totalorder %s42, 0
      %p235 = por %p233, %p234
      %s237 = sadd.s32 %s236, 1
      %p240 = scmp.eq.s32.totalorder %s36, 1
      %p241 = scmp.ne.s32.totalorder %s236, %s238
      %p242 = scmp.eq.s32.totalorder %s36, 0
      %p243 = por %p241, %p242
      %p244 = scmp.ne.s32.totalorder %s236, %s238
      %p245 = scmp.eq.s32.totalorder %s41, 1
      %p246 = por %p244, %p245
      %p247 = scmp.ne.s32.totalorder %s238, %s239
      %p248 = scmp.eq.s32.totalorder %s41, 0
      %p249 = por %p247, %p248
      %p250 = scmp.ne.s32.totalorder %s238, %s239
      %p251 = scmp.eq.s32.totalorder %s42, 1
      %p252 = por %p250, %p251
      %p254 = scmp.ne.s32.totalorder %s239, %s253
      %p255 = scmp.eq.s32.totalorder %s42, 0
      %p256 = por %p254, %p255
      %s258 = sadd.s32 %s257, 1
      %p261 = scmp.eq.s32.totalorder %s36, 1
      %p262 = scmp.ne.s32.totalorder %s257, %s259
      %p263 = scmp.eq.s32.totalorder %s36, 0
      %p264 = por %p262, %p263
      %p265 = scmp.ne.s32.totalorder %s257, %s259
      %p266 = scmp.eq.s32.totalorder %s41, 1
      %p267 = por %p265, %p266
      %p268 = scmp.ne.s32.totalorder %s259, %s260
      %p269 = scmp.eq.s32.totalorder %s41, 0
      %p270 = por %p268, %p269
      %p271 = scmp.ne.s32.totalorder %s259, %s260
      %p272 = scmp.eq.s32.totalorder %s42, 1
      %p273 = por %p271, %p272
      %p275 = scmp.ne.s32.totalorder %s260, %s274
      %p276 = scmp.eq.s32.totalorder %s42, 0
      %p277 = por %p275, %p276
      %s279 = sadd.s32 %s278, 1
      %p282 = scmp.eq.s32.totalorder %s36, 1
      %p283 = scmp.ne.s32.totalorder %s278, %s280
      %p284 = scmp.eq.s32.totalorder %s36, 0
      %p285 = por %p283, %p284
      %p286 = scmp.ne.s32.totalorder %s278, %s280
      %p287 = scmp.eq.s32.totalorder %s41, 1
      %p288 = por %p286, %p287
      %p289 = scmp.ne.s32.totalorder %s280, %s281
      %p290 = scmp.eq.s32.totalorder %s41, 0
      %p291 = por %p289, %p290
      %p292 = scmp.ne.s32.totalorder %s280, %s281
      %p293 = scmp.eq.s32.totalorder %s42, 1
      %p294 = por %p292, %p293
      %p296 = scmp.ne.s32.totalorder %s281, %s295
      %p297 = scmp.eq.s32.totalorder %s42, 0
      %p298 = por %p296, %p297
      %s300 = sadd.s32 %s299, 1
      %p303 = scmp.eq.s32.totalorder %s36, 1
      %p304 = scmp.ne.s32.totalorder %s299, %s301
      %p305 = scmp.eq.s32.totalorder %s36, 0
      %p306 = por %p304, %p305
      %p307 = scmp.ne.s32.totalorder %s299, %s301
      %p308 = scmp.eq.s32.totalorder %s41, 1
      %p309 = por %p307, %p308
      %p310 = scmp.ne.s32.totalorder %s301, %s302
      %p311 = scmp.eq.s32.totalorder %s41, 0
      %p312 = por %p310, %p311
      %p313 = scmp.ne.s32.totalorder %s301, %s302
      %p314 = scmp.eq.s32.totalorder %s42, 1
      %p315 = por %p313, %p314
      %p317 = scmp.ne.s32.totalorder %s302, %s316
      %p318 = scmp.eq.s32.totalorder %s42, 0
      %p319 = por %p317, %p318
      %s321 = sadd.s32 %s320, 1
      %p324 = scmp.eq.s32.totalorder %s36, 1
      %p325 = scmp.ne.s32.totalorder %s320, %s322
      %p326 = scmp.eq.s32.totalorder %s36, 0
      %p327 = por %p325, %p326
      %p328 = scmp.ne.s32.totalorder %s320, %s322
      %p329 = scmp.eq.s32.totalorder %s41, 1
      %p330 = por %p328, %p329
      %p331 = scmp.ne.s32.totalorder %s322, %s323
      %p332 = scmp.eq.s32.totalorder %s41, 0
      %p333 = por %p331, %p332
      %p334 = scmp.ne.s32.totalorder %s322, %s323
      %p335 = scmp.eq.s32.totalorder %s42, 1
      %p336 = por %p334, %p335
      %p338 = scmp.ne.s32.totalorder %s323, %s337
      %p339 = scmp.eq.s32.totalorder %s42, 0
      %p340 = por %p338, %p339
      %s342 = sadd.s32 %s341, 1
      %p345 = scmp.eq.s32.totalorder %s36, 1
      %p346 = scmp.ne.s32.totalorder %s341, %s343
      %p347 = scmp.eq.s32.totalorder %s36, 0
      %p348 = por %p346, %p347
      %p349 = scmp.ne.s32.totalorder %s341, %s343
      %p350 = scmp.eq.s32.totalorder %s41, 1
      %p351 = por %p349, %p350
      %p352 = scmp.ne.s32.totalorder %s343, %s344
      %p353 = scmp.eq.s32.totalorder %s41, 0
      %p354 = por %p352, %p353
      %p355 = scmp.ne.s32.totalorder %s343, %s344
      %p356 = scmp.eq.s32.totalorder %s42, 1
      %p357 = por %p355, %p356
      %p359 = scmp.ne.s32.totalorder %s344, %s358
      %p360 = scmp.eq.s32.totalorder %s42, 0
      %p361 = por %p359, %p360
      %s363 = sadd.s32 %s362, 1
      %p366 = scmp.eq.s32.totalorder %s36, 1
      %p367 = scmp.ne.s32.totalorder %s362, %s364
      %p368 = scmp.eq.s32.totalorder %s36, 0
      %p369 = por %p367, %p368
      %p370 = scmp.ne.s32.totalorder %s362, %s364
      %p371 = scmp.eq.s32.totalorder %s41, 1
      %p372 = por %p370, %p371
      %p373 = scmp.ne.s32.totalorder %s364, %s365
      %p374 = scmp.eq.s32.totalorder %s41, 0
      %p375 = por %p373, %p374
      %p376 = scmp.ne.s32.totalorder %s364, %s365
      %p377 = scmp.eq.s32.totalorder %s42, 1
      %p378 = por %p376, %p377
      %p380 = scmp.ne.s32.totalorder %s365, %s379
      %p381 = scmp.eq.s32.totalorder %s42, 0
      %p382 = por %p380, %p381
      %s384 = sadd.s32 %s383, 1
      %p387 = scmp.eq.s32.totalorder %s36, 1
      %p388 = scmp.ne.s32.totalorder %s383, %s385
      %p389 = scmp.eq.s32.totalorder %s36, 0
      %p390 = por %p388, %p389
      %p391 = scmp.ne.s32.totalorder %s383, %s385
      %p392 = scmp.eq.s32.totalorder %s41, 1
      %p393 = por %p391, %p392
      %p394 = scmp.ne.s32.totalorder %s385, %s386
      %p395 = scmp.eq.s32.totalorder %s41, 0
      %p396 = por %p394, %p395
      %p397 = scmp.ne.s32.totalorder %s385, %s386
      %p398 = scmp.eq.s32.totalorder %s42, 1
      %p399 = por %p397, %p398
      %p401 = scmp.ne.s32.totalorder %s386, %s400
      %p402 = scmp.eq.s32.totalorder %s42, 0
      %p403 = por %p401, %p402
      %s404 = ssub.s32 %s43, %s55
      %s405 = ssub.s32 %s44, %s51
      %s406 = sor.u32 %s404, %s405
      %p407 = scmp.eq.s32.totalorder %s406, 0
      %s409 = sadd.s32 %s408, 1
      %s410 = scalar_select %p407, %s408, %s409
      %p413 = pneg %p407
      %p414 = scmp.eq.s32.totalorder %s36, 1
      %p415 = por %p413, %p414
      %p416 = scmp.ne.s32.totalorder %s408, %s411
      %p417 = scmp.eq.s32.totalorder %s36, 0
      %p418 = por %p416, %p417
      %p419 = scmp.ne.s32.totalorder %s408, %s411
      %p420 = scmp.eq.s32.totalorder %s41, 1
      %p421 = por %p419, %p420
      %p422 = scmp.ne.s32.totalorder %s411, %s412
      %p423 = scmp.eq.s32.totalorder %s41, 0
      %p424 = por %p422, %p423
      %p425 = scmp.ne.s32.totalorder %s411, %s412
      %p426 = scmp.eq.s32.totalorder %s42, 1
      %p427 = por %p425, %p426
      %p429 = scmp.ne.s32.totalorder %s412, %s428
      %p430 = scmp.eq.s32.totalorder %s42, 0
      %p431 = por %p429, %p430
      %p432 = scmp.le.s32.totalorder 1, %s36
      %p433 = scmp.lt.s32.totalorder %s36, 3
      %p434 = pnand %p432, %p433
      %p435 = pneg %p434
      // Predicated region
      $region9: #{tpu_custom_call.1} parent=5 // pred_check
        _
      $region10: #{tpu_custom_call.1} parent=5 // pred_check_branch
        %437 = sbr.rel (%p434) target = $region12
      $region11: #{tpu_custom_call.1} parent=5 // pred_region
        %s438 = ssub.s32 %s36, 1
        // Predicated region
        $region13: #{tpu_custom_call.1} parent=11 // pred_check
          %p439 = pneg %p74
        $region14: #{tpu_custom_call.1} parent=11 // pred_check_branch
          %441 = sbr.rel (%p439) target = $region16
        $region15: #{tpu_custom_call.1} parent=11 // pred_region
          %s443 = ssub.s32 128, 128
          %444 = vsyncadd [#allocation7], %s443
          %s445 = smul.addr %s45, 128
          %s446 = scalar_lea.hbm %s0, %s445
          %s448 = sshll.u32 [#allocation6], 4
          %s449 = int_to_ptr.vmem [resolvable:$true] %s448
          %451 = dma.hbm_to_vmem [thread:$0]  %s446, 128, %s449, [#allocation7]
        $region16: #{tpu_custom_call.1} parent=11 // pred_fallthru
          _
        // Predicated region
        $region17: #{tpu_custom_call.1} parent=11 // pred_check
          %p452 = pneg %p123
        $region18: #{tpu_custom_call.1} parent=11 // pred_check_branch
          %454 = sbr.rel (%p452) target = $region20
        $region19: #{tpu_custom_call.1} parent=11 // pred_region
          %s456 = ssub.s32 16, 16
          %457 = vsyncadd [#allocation10], %s456
          %s459 = sshll.u32 [#allocation11], 4
          %s460 = int_to_ptr.vmem [resolvable:$true] %s459
          %462 = dma.hbm_to_vmem [thread:$0]  %s2, 16, %s460, [#allocation10]
        $region20: #{tpu_custom_call.1} parent=11 // pred_fallthru
          _
        // Predicated region
        $region21: #{tpu_custom_call.1} parent=11 // pred_check
          %p463 = pneg %p144
        $region22: #{tpu_custom_call.1} parent=11 // pred_check_branch
          %465 = sbr.rel (%p463) target = $region24
        $region23: #{tpu_custom_call.1} parent=11 // pred_region
          %s467 = ssub.s32 16, 16
          %468 = vsyncadd [#allocation13], %s467
          %s470 = sshll.u32 [#allocation12], 4
          %s471 = int_to_ptr.vmem [resolvable:$true] %s470
          %473 = dma.hbm_to_vmem [thread:$0]  %s3, 16, %s471, [#allocation13]
        $region24: #{tpu_custom_call.1} parent=11 // pred_fallthru
          _
        // Predicated region
        $region25: #{tpu_custom_call.1} parent=11 // pred_check
          %p474 = pneg %p165
        $region26: #{tpu_custom_call.1} parent=11 // pred_check_branch
          %476 = sbr.rel (%p474) target = $region28
        $region27: #{tpu_custom_call.1} parent=11 // pred_region
          %s478 = ssub.s32 256, 256
          %479 = vsyncadd [#allocation13], %s478
          %s480 = sshll.u32 [#allocation14], 4
          %s481 = int_to_ptr.vmem [resolvable:$true] %s480
          %486 = dma.hbm_to_vmem [thread:$0]  %s4, 256, %s481, [#allocation13], 64, 64, 4
        $region28: #{tpu_custom_call.1} parent=11 // pred_fallthru
          _
        // Predicated region
        $region29: #{tpu_custom_call.1} parent=11 // pred_check
          %p487 = pneg %p186
        $region30: #{tpu_custom_call.1} parent=11 // pred_check_branch
          %489 = sbr.rel (%p487) target = $region32
        $region31: #{tpu_custom_call.1} parent=11 // pred_region
          %s491 = ssub.s32 16, 16
          %492 = vsyncadd [#allocation16], %s491
          %s494 = sshll.u32 [#allocation15], 4
          %s495 = int_to_ptr.vmem [resolvable:$true] %s494
          %497 = dma.hbm_to_vmem [thread:$0]  %s5, 16, %s495, [#allocation16]
        $region32: #{tpu_custom_call.1} parent=11 // pred_fallthru
          _
        // Predicated region
        $region33: #{tpu_custom_call.1} parent=11 // pred_check
          %p498 = pneg %p207
        $region34: #{tpu_custom_call.1} parent=11 // pred_check_branch
          %500 = sbr.rel (%p498) target = $region36
        $region35: #{tpu_custom_call.1} parent=11 // pred_region
          %s502 = ssub.s32 256, 256
          %503 = vsyncadd [#allocation16], %s502
          %s504 = sshll.u32 [#allocation17], 4
          %s505 = int_to_ptr.vmem [resolvable:$true] %s504
          %510 = dma.hbm_to_vmem [thread:$0]  %s6, 256, %s505, [#allocation16], 64, 64, 4
        $region36: #{tpu_custom_call.1} parent=11 // pred_fallthru
          _
        // Predicated region
        $region37: #{tpu_custom_call.1} parent=11 // pred_check
          %p511 = pneg %p228
        $region38: #{tpu_custom_call.1} parent=11 // pred_check_branch
          %513 = sbr.rel (%p511) target = $region40
        $region39: #{tpu_custom_call.1} parent=11 // pred_region
          %s515 = ssub.s32 16, 16
          %516 = vsyncadd [#allocation19], %s515
          %s518 = sshll.u32 [#allocation18], 4
          %s519 = int_to_ptr.vmem [resolvable:$true] %s518
          %521 = dma.hbm_to_vmem [thread:$0]  %s7, 16, %s519, [#allocation19]
        $region40: #{tpu_custom_call.1} parent=11 // pred_fallthru
          _
        // Predicated region
        $region41: #{tpu_custom_call.1} parent=11 // pred_check
          %p522 = pneg %p249
        $region42: #{tpu_custom_call.1} parent=11 // pred_check_branch
          %524 = sbr.rel (%p522) target = $region44
        $region43: #{tpu_custom_call.1} parent=11 // pred_region
          %s526 = ssub.s32 16, 16
          %527 = vsyncadd [#allocation19], %s526
          %s529 = sshll.u32 [#allocation20], 4
          %s530 = int_to_ptr.vmem [resolvable:$true] %s529
          %532 = dma.hbm_to_vmem [thread:$0]  %s8, 16, %s530, [#allocation19]
        $region44: #{tpu_custom_call.1} parent=11 // pred_fallthru
          _
        // Predicated region
        $region45: #{tpu_custom_call.1} parent=11 // pred_check
          %p533 = pneg %p270
        $region46: #{tpu_custom_call.1} parent=11 // pred_check_branch
          %535 = sbr.rel (%p533) target = $region48
        $region47: #{tpu_custom_call.1} parent=11 // pred_region
          %s537 = ssub.s32 16, 16
          %538 = vsyncadd [#allocation22], %s537
          %s540 = sshll.u32 [#allocation21], 4
          %s541 = int_to_ptr.vmem [resolvable:$true] %s540
          %543 = dma.hbm_to_vmem [thread:$0]  %s9, 16, %s541, [#allocation22]
        $region48: #{tpu_custom_call.1} parent=11 // pred_fallthru
          _
        // Predicated region
        $region49: #{tpu_custom_call.1} parent=11 // pred_check
          %p544 = pneg %p291
        $region50: #{tpu_custom_call.1} parent=11 // pred_check_branch
          %546 = sbr.rel (%p544) target = $region52
        $region51: #{tpu_custom_call.1} parent=11 // pred_region
          %s548 = ssub.s32 256, 256
          %549 = vsyncadd [#allocation22], %s548
          %s550 = sshll.u32 [#allocation23], 4
          %s551 = int_to_ptr.vmem [resolvable:$true] %s550
          %556 = dma.hbm_to_vmem [thread:$0]  %s10, 256, %s551, [#allocation22], 64, 64, 4
        $region52: #{tpu_custom_call.1} parent=11 // pred_fallthru
          _
        // Predicated region
        $region53: #{tpu_custom_call.1} parent=11 // pred_check
          %p557 = pneg %p312
        $region54: #{tpu_custom_call.1} parent=11 // pred_check_branch
          %559 = sbr.rel (%p557) target = $region56
        $region55: #{tpu_custom_call.1} parent=11 // pred_region
          %s561 = ssub.s32 16, 16
          %562 = vsyncadd [#allocation25], %s561
          %s564 = sshll.u32 [#allocation24], 4
          %s565 = int_to_ptr.vmem [resolvable:$true] %s564
          %567 = dma.hbm_to_vmem [thread:$0]  %s11, 16, %s565, [#allocation25]
        $region56: #{tpu_custom_call.1} parent=11 // pred_fallthru
          _
        // Predicated region
        $region57: #{tpu_custom_call.1} parent=11 // pred_check
          %p568 = pneg %p333
        $region58: #{tpu_custom_call.1} parent=11 // pred_check_branch
          %570 = sbr.rel (%p568) target = $region60
        $region59: #{tpu_custom_call.1} parent=11 // pred_region
          %s572 = ssub.s32 1024, 1024
          %573 = vsyncadd [#allocation25], %s572
          %s574 = sshll.u32 [#allocation26], 4
          %s575 = int_to_ptr.vmem [resolvable:$true] %s574
          %580 = dma.hbm_to_vmem [thread:$0]  %s12, 1024, %s575, [#allocation25], 64, 64, 4
        $region60: #{tpu_custom_call.1} parent=11 // pred_fallthru
          _
        // Predicated region
        $region61: #{tpu_custom_call.1} parent=11 // pred_check
          %p581 = pneg %p354
        $region62: #{tpu_custom_call.1} parent=11 // pred_check_branch
          %583 = sbr.rel (%p581) target = $region64
        $region63: #{tpu_custom_call.1} parent=11 // pred_region
          %s585 = ssub.s32 16, 16
          %586 = vsyncadd [#allocation28], %s585
          %s588 = sshll.u32 [#allocation27], 4
          %s589 = int_to_ptr.vmem [resolvable:$true] %s588
          %591 = dma.hbm_to_vmem [thread:$0]  %s13, 16, %s589, [#allocation28]
        $region64: #{tpu_custom_call.1} parent=11 // pred_fallthru
          _
        // Predicated region
        $region65: #{tpu_custom_call.1} parent=11 // pred_check
          %p592 = pneg %p375
        $region66: #{tpu_custom_call.1} parent=11 // pred_check_branch
          %594 = sbr.rel (%p592) target = $region68
        $region67: #{tpu_custom_call.1} parent=11 // pred_region
          %s596 = ssub.s32 16, 16
          %597 = vsyncadd [#allocation28], %s596
          %s599 = sshll.u32 [#allocation29], 4
          %s600 = int_to_ptr.vmem [resolvable:$true] %s599
          %602 = dma.hbm_to_vmem [thread:$0]  %s14, 16, %s600, [#allocation28]
        $region68: #{tpu_custom_call.1} parent=11 // pred_fallthru
          _
        // Predicated region
        $region69: #{tpu_custom_call.1} parent=11 // pred_check
          %p603 = pneg %p396
        $region70: #{tpu_custom_call.1} parent=11 // pred_check_branch
          %605 = sbr.rel (%p603) target = $region72
        $region71: #{tpu_custom_call.1} parent=11 // pred_region
          %s607 = ssub.s32 16, 16
          %608 = vsyncadd [#allocation31], %s607
          %s610 = sshll.u32 [#allocation30], 4
          %s611 = int_to_ptr.vmem [resolvable:$true] %s610
          %613 = dma.hbm_to_vmem [thread:$0]  %s15, 16, %s611, [#allocation31]
        $region72: #{tpu_custom_call.1} parent=11 // pred_fallthru
          _
      $region12: #{tpu_custom_call.1} parent=5 // pred_fallthru
        _
      %p614 = scmp.lt.s32.totalorder %s36, 2
      // Predicated region
      $region73: #{tpu_custom_call.1} parent=5 // pred_check
        %p615 = pneg %p614
      $region74: #{tpu_custom_call.1} parent=5 // pred_check_branch
        %617 = sbr.rel (%p615) target = $region76
      $region75: #{tpu_custom_call.1} parent=5 // pred_region
        // Predicated region
        $region77: #{tpu_custom_call.1} parent=75 // pred_check
          %p618 = pneg %p96
        $region78: #{tpu_custom_call.1} parent=75 // pred_check_branch
          %620 = sbr.rel (%p618) target = $region80
        $region79: #{tpu_custom_call.1} parent=75 // pred_region
          %s621 = sand.u32 %s36, 1
          %s622 = scalar_lea.sflag [#allocation10], %s621
          %s623 = sand.u32 %s86, 1
          %s624 = smul.addr %s623, 8
          %s625 = scalar_lea.vmem [#allocation9], %s624
          %s627 = ssub.s32 128, 128
          %628 = vsyncadd %s622, %s627
          %s629 = sadd.s32 %s44, %s43
          %s630 = smul.addr %s629, 128
          %s631 = scalar_lea.hbm %s1, %s630
          %s633 = sshll.u32 %s625, 4
          %s634 = int_to_ptr.vmem [resolvable:$true] %s633
          %636 = dma.hbm_to_vmem [thread:$0]  %s631, 128, %s634, %s622
        $region80: #{tpu_custom_call.1} parent=75 // pred_fallthru
          _
      $region76: #{tpu_custom_call.1} parent=5 // pred_fallthru
        _
      %p637 = scmp.le.s32.totalorder 1, %s36
      %p638 = scmp.lt.s32.totalorder %s36, 3
      %p639 = pnand %p637, %p638
      %p640 = pneg %p639
      // Predicated region
      $region81: #{tpu_custom_call.1} parent=5 // pred_check
        _
      $region82: #{tpu_custom_call.1} parent=5 // pred_check_branch
        %642 = sbr.rel (%p639) target = $region84
      $region83: #{tpu_custom_call.1} parent=5 // pred_region
        %s643 = ssub.s32 %s36, 1
        // Predicated region
        $region85: #{tpu_custom_call.1} parent=83 // pred_check
          %p644 = pneg %p74
        $region86: #{tpu_custom_call.1} parent=83 // pred_check_branch
          %646 = sbr.rel (%p644) target = $region88
        $region87: #{tpu_custom_call.1} parent=83 // pred_region
          %647 = dma.done [#allocation7], 128
        $region88: #{tpu_custom_call.1} parent=83 // pred_fallthru
          _
        %s648 = sand.u32 %s41, 1
        %s649 = scalar_lea.sflag [#allocation10], %s648
        %s650 = sand.u32 %s89, 1
        %s651 = smul.addr %s650, 8
        %s652 = scalar_lea.vmem [#allocation9], %s651
        // Predicated region
        $region89: #{tpu_custom_call.1} parent=83 // pred_check
          %p653 = pneg %p102
        $region90: #{tpu_custom_call.1} parent=83 // pred_check_branch
          %655 = sbr.rel (%p653) target = $region92
        $region91: #{tpu_custom_call.1} parent=83 // pred_region
          %656 = dma.done %s649, 128
        $region92: #{tpu_custom_call.1} parent=83 // pred_fallthru
          _
        // Predicated region
        $region93: #{tpu_custom_call.1} parent=83 // pred_check
          %p657 = pneg %p123
        $region94: #{tpu_custom_call.1} parent=83 // pred_check_branch
          %659 = sbr.rel (%p657) target = $region96
        $region95: #{tpu_custom_call.1} parent=83 // pred_region
          %660 = dma.done [#allocation10], 16
        $region96: #{tpu_custom_call.1} parent=83 // pred_fallthru
          _
        // Predicated region
        $region97: #{tpu_custom_call.1} parent=83 // pred_check
          %p661 = pneg %p144
        $region98: #{tpu_custom_call.1} parent=83 // pred_check_branch
          %663 = sbr.rel (%p661) target = $region100
        $region99: #{tpu_custom_call.1} parent=83 // pred_region
          %664 = dma.done [#allocation13], 16
        $region100: #{tpu_custom_call.1} parent=83 // pred_fallthru
          _
        // Predicated region
        $region101: #{tpu_custom_call.1} parent=83 // pred_check
          %p665 = pneg %p165
        $region102: #{tpu_custom_call.1} parent=83 // pred_check_branch
          %667 = sbr.rel (%p665) target = $region104
        $region103: #{tpu_custom_call.1} parent=83 // pred_region
          %668 = dma.done [#allocation13], 256
        $region104: #{tpu_custom_call.1} parent=83 // pred_fallthru
          _
        // Predicated region
        $region105: #{tpu_custom_call.1} parent=83 // pred_check
          %p669 = pneg %p186
        $region106: #{tpu_custom_call.1} parent=83 // pred_check_branch
          %671 = sbr.rel (%p669) target = $region108
        $region107: #{tpu_custom_call.1} parent=83 // pred_region
          %672 = dma.done [#allocation16], 16
        $region108: #{tpu_custom_call.1} parent=83 // pred_fallthru
          _
        // Predicated region
        $region109: #{tpu_custom_call.1} parent=83 // pred_check
          %p673 = pneg %p207
        $region110: #{tpu_custom_call.1} parent=83 // pred_check_branch
          %675 = sbr.rel (%p673) target = $region112
        $region111: #{tpu_custom_call.1} parent=83 // pred_region
          %676 = dma.done [#allocation16], 256
        $region112: #{tpu_custom_call.1} parent=83 // pred_fallthru
          _
        // Predicated region
        $region113: #{tpu_custom_call.1} parent=83 // pred_check
          %p677 = pneg %p228
        $region114: #{tpu_custom_call.1} parent=83 // pred_check_branch
          %679 = sbr.rel (%p677) target = $region116
        $region115: #{tpu_custom_call.1} parent=83 // pred_region
          %680 = dma.done [#allocation19], 16
        $region116: #{tpu_custom_call.1} parent=83 // pred_fallthru
          _
        // Predicated region
        $region117: #{tpu_custom_call.1} parent=83 // pred_check
          %p681 = pneg %p249
        $region118: #{tpu_custom_call.1} parent=83 // pred_check_branch
          %683 = sbr.rel (%p681) target = $region120
        $region119: #{tpu_custom_call.1} parent=83 // pred_region
          %684 = dma.done [#allocation19], 16
        $region120: #{tpu_custom_call.1} parent=83 // pred_fallthru
          _
        // Predicated region
        $region121: #{tpu_custom_call.1} parent=83 // pred_check
          %p685 = pneg %p270
        $region122: #{tpu_custom_call.1} parent=83 // pred_check_branch
          %687 = sbr.rel (%p685) target = $region124
        $region123: #{tpu_custom_call.1} parent=83 // pred_region
          %688 = dma.done [#allocation22], 16
        $region124: #{tpu_custom_call.1} parent=83 // pred_fallthru
          _
        // Predicated region
        $region125: #{tpu_custom_call.1} parent=83 // pred_check
          %p689 = pneg %p291
        $region126: #{tpu_custom_call.1} parent=83 // pred_check_branch
          %691 = sbr.rel (%p689) target = $region128
        $region127: #{tpu_custom_call.1} parent=83 // pred_region
          %692 = dma.done [#allocation22], 256
        $region128: #{tpu_custom_call.1} parent=83 // pred_fallthru
          _
        // Predicated region
        $region129: #{tpu_custom_call.1} parent=83 // pred_check
          %p693 = pneg %p312
        $region130: #{tpu_custom_call.1} parent=83 // pred_check_branch
          %695 = sbr.rel (%p693) target = $region132
        $region131: #{tpu_custom_call.1} parent=83 // pred_region
          %696 = dma.done [#allocation25], 16
        $region132: #{tpu_custom_call.1} parent=83 // pred_fallthru
          _
        // Predicated region
        $region133: #{tpu_custom_call.1} parent=83 // pred_check
          %p697 = pneg %p333
        $region134: #{tpu_custom_call.1} parent=83 // pred_check_branch
          %699 = sbr.rel (%p697) target = $region136
        $region135: #{tpu_custom_call.1} parent=83 // pred_region
          %700 = dma.done [#allocation25], 1024
        $region136: #{tpu_custom_call.1} parent=83 // pred_fallthru
          _
        // Predicated region
        $region137: #{tpu_custom_call.1} parent=83 // pred_check
          %p701 = pneg %p354
        $region138: #{tpu_custom_call.1} parent=83 // pred_check_branch
          %703 = sbr.rel (%p701) target = $region140
        $region139: #{tpu_custom_call.1} parent=83 // pred_region
          %704 = dma.done [#allocation28], 16
        $region140: #{tpu_custom_call.1} parent=83 // pred_fallthru
          _
        // Predicated region
        $region141: #{tpu_custom_call.1} parent=83 // pred_check
          %p705 = pneg %p375
        $region142: #{tpu_custom_call.1} parent=83 // pred_check_branch
          %707 = sbr.rel (%p705) target = $region144
        $region143: #{tpu_custom_call.1} parent=83 // pred_region
          %708 = dma.done [#allocation28], 16
        $region144: #{tpu_custom_call.1} parent=83 // pred_fallthru
          _
        // Predicated region
        $region145: #{tpu_custom_call.1} parent=83 // pred_check
          %p709 = pneg %p396
        $region146: #{tpu_custom_call.1} parent=83 // pred_check_branch
          %711 = sbr.rel (%p709) target = $region148
        $region147: #{tpu_custom_call.1} parent=83 // pred_region
          %712 = dma.done [#allocation31], 16
        $region148: #{tpu_custom_call.1} parent=83 // pred_fallthru
          _
        %p713 = pneg %p74
        %p714 = pneg %p71
        %s715 = sand.u32 %s41, 1
        %s716 = scalar_lea.sflag [#allocation10], %s715
        %s717 = sand.u32 %s89, 1
        %s718 = smul.addr %s717, 8
        %s719 = scalar_lea.vmem [#allocation9], %s718
        %p720 = pneg %p102
        %p721 = pneg %p99
        %p722 = pneg %p123
        %p723 = pneg %p120
        %p724 = pneg %p144
        %p725 = pneg %p141
        %p726 = pneg %p165
        %p727 = pneg %p162
        %p728 = pneg %p186
        %p729 = pneg %p183
        %p730 = pneg %p207
        %p731 = pneg %p204
        %p732 = pneg %p228
        %p733 = pneg %p225
        %p734 = pneg %p249
        %p735 = pneg %p246
        %p736 = pneg %p270
        %p737 = pneg %p267
        %p738 = pneg %p291
        %p739 = pneg %p288
        %p740 = pneg %p312
        %p741 = pneg %p309
        %p742 = pneg %p333
        %p743 = pneg %p330
        %p744 = pneg %p354
        %p745 = pneg %p351
        %p746 = pneg %p375
        %p747 = pneg %p372
        %p748 = pneg %p396
        %p749 = pneg %p393
        %p750 = pneg %p424
        %p751 = pneg %p421
        %s752 = sand.u32 %s411, 1
        %s753 = scalar_lea.sflag [#allocation8], %s752
        %s754 = sand.u32 %s411, 1
        %s755 = smul.addr %s754, 8
        %s756 = scalar_lea.vmem [#allocation32], %s755
        %p758 = scmp.eq.s32.totalorder %s46, 0
        // Predicated region
        $region149: #{tpu_custom_call.1} parent=83 // pred_check
          %p759 = pneg %p758
        $region150: #{tpu_custom_call.1} parent=83 // pred_check_branch
          %761 = sbr.rel (%p759) target = $region152
        $region151: #{tpu_custom_call.1} parent=83 // pred_region
          %v762 = vld [vmem:[#allocation6] sm:$0xff]
          %v763 = vld [vmem:[#allocation11] sm:$0x1]
          %v764 = vld [vmem:[#allocation12] sm:$0x1]
          %vm765 = vcmask 261120
          %v766 = vsel %vm765, %v762, 0.0
          %767 = vadd.xlane.f32.xlu0 %v766
          %v768 = vpop.xlane.xlu0 %767
          %v769 = vrcp.pop 32.0
          %v770 = vmul.f32 %v768, %v769
          %v771 = vsub.f32 %v762, %v770
          %v772 = vmul.f32 %v771, %v771
          %v773 = vsel %vm765, %v772, 0.0
          %774 = vadd.xlane.f32.xlu0 %v773
          %v775 = vpop.xlane.xlu0 %774
          %v776 = vmul.f32 %v775, %v769
          %v777 = vadd.f32 %v776, 1e-05
          %v778 = vrsqrt.pop %v777
          %v779 = vmul.f32 %v771, %v778
          %v781 = vlaneseq
          %v782 = vshrl.u32 %v781, 7
          %v783 = vsub.s32 0, %v782
          %v784 = vrot.slane %v763, %v783
          %v786 = vmul.f32 %v779, %v784
          %v788 = vlaneseq
          %v789 = vshrl.u32 %v788, 7
          %v790 = vsub.s32 0, %v789
          %v791 = vrot.slane %v764, %v790
          %v793 = vadd.f32 %v786, %v791
          %v794 = vpack.c.bf16 %v793, %v793
          %v795 = vld [vmem:[#allocation14] sm:$0xf]
          %v796 = vld [vmem:[#allocation14 + $0x4] sm:$0xf]
          %v797 = vld [vmem:[#allocation14 + $0x8] sm:$0xf]
          %v798 = vld [vmem:[#allocation14 + $0xc] sm:$0xf]
          %v799 = vld [vmem:[#allocation15] sm:$0x1]
          %v801 = vlaneseq
          %v802 = vshrl.u32 %v801, 7
          %v803 = vsub.s32 0, %v802
          %v804 = vrot.slane %v799, %v803
          %v810 = vunpack.c.l.b16 %v795
          %v811 = vunpack.c.l.b16 %v796
          %v812 = vunpack.c.l.b16 %v797
          %v813 = vunpack.c.l.b16 %v798
          %v814 = vpack.c.b16 %v811, %v810
          %v815 = vpack.c.b16 %v813, %v812
          %v819 = vsel %vm765, %v794, 0
          %821 = vmatprep.subr.bf16.mxu0 0
          %822 = vmatpush1.bf16.msra.mxu0 %v814
          %823 = vmatprep.subr.bf16.mxu0 0
          %824 = vmatpush1.bf16.msra.mxu0 %v815
          %825 = vmatprep.subr.bf16.mxu0 0
          %826 = vmatpush1.bf16.msra.mxu0 0
          %827 = vmatprep.subr.bf16.mxu0 0
          %828 = vmatpush1.bf16.msra.mxu0 0
          %829 = vmatprep.subr.bf16.mxu0 0
          %830 = vmatpush1.bf16.msra.mxu0 0
          %831 = vmatprep.subr.bf16.mxu0 0
          %832 = vmatpush1.bf16.msra.mxu0 0
          %833 = vmatprep.subr.bf16.mxu0 0
          %834 = vmatpush1.bf16.msra.mxu0 0
          %835 = vmatprep.subr.bf16.mxu0 0
          %836 = vmatpush1.bf16.msra.mxu0 0
          %837 = vmatprep.subr.bf16.mxu0 0
          %838 = vmatpush1.bf16.msra.mxu0 0
          %839 = vmatprep.subr.bf16.mxu0 0
          %840 = vmatpush1.bf16.msra.mxu0 0
          %841 = vmatprep.subr.bf16.mxu0 0
          %842 = vmatpush1.bf16.msra.mxu0 0
          %843 = vmatprep.subr.bf16.mxu0 0
          %844 = vmatpush1.bf16.msra.mxu0 0
          %845 = vmatprep.subr.bf16.mxu0 0
          %846 = vmatpush1.bf16.msra.mxu0 0
          %847 = vmatprep.subr.bf16.mxu0 0
          %848 = vmatpush1.bf16.msra.mxu0 0
          %849 = vmatprep.subr.bf16.mxu0 0
          %850 = vmatpush1.bf16.msra.mxu0 0
          %851 = vmatprep.subr.bf16.mxu0 0
          %852 = vmatpush1.bf16.msra.mxu0 0
          %853 = vmatprep.mubr.bf16.mxu0 0
          %854 = vmatmul.mubr.bf16.gmra.mrb[0].mxu0 %v819
          %v855 = vpop.f32.mrb[0].mxu0
          %v856 = vadd.f32 %v804, %v855
          %v857 = vpop.f32.mrb[0].mxu0
          %v858 = vpop.f32.mrb[0].mxu0
          %v859 = vpop.f32.mrb[0].mxu0
          %860 = vdwg.mxu0
          %v861 = vmul.f32 %v856, 0.35355338
          %v862 = vpack.c.bf16 %v861, %v861
          %vm863 = vcmask 60416
          %864 = vst.msk [vmem:[#allocation2] sm:$0xf] %vm863, %v862
          %v865 = vpack.c.bf16 %v856, %v856
          %v867 = vunpack.c.l.b16 %v865
          %v868 = vpack.c.b16 %v867, %v867
          %869 = vrot.lane.b32.xlu0 %v868, 96
          %v870 = vpop.permute.xlu0 %869
          %872 = vst.msk [vmem:[#allocation3] sm:$0xf] %vm863, %v870
          %873 = vrot.lane.b32.xlu0 %v868, 64
          %v874 = vpop.permute.xlu0 %873
          %876 = vst.msk [vmem:[#allocation4] sm:$0xf] %vm863, %v874
          %v878 = vunpack.c.l.b16 %v862
          %v879 = vpack.c.b16 %v878, %v878
          %880 = vrot.lane.b32.xlu0 %v879, 120
          %v881 = vpop.permute.xlu0 %880
          %s883 = scalar_lea.vmem [#allocation2], 4
          %884 = vst.msk [vmem:[%s883] sm:$0xf] %vm863, %v881
          %885 = vrot.lane.b32.xlu0 %v868, 88
          %v886 = vpop.permute.xlu0 %885
          %s888 = scalar_lea.vmem [#allocation3], 4
          %889 = vst.msk [vmem:[%s888] sm:$0xf] %vm863, %v886
          %890 = vrot.lane.b32.xlu0 %v868, 56
          %v891 = vpop.permute.xlu0 %890
          %s893 = scalar_lea.vmem [#allocation4], 4
          %894 = vst.msk [vmem:[%s893] sm:$0xf] %vm863, %v891
          %895 = vrot.lane.b32.xlu0 %v879, 112
          %v896 = vpop.permute.xlu0 %895
          %s898 = scalar_lea.vmem [#allocation2], 8
          %899 = vst.msk [vmem:[%s898] sm:$0xf] %vm863, %v896
          %900 = vrot.lane.b32.xlu0 %v868, 80
          %v901 = vpop.permute.xlu0 %900
          %s903 = scalar_lea.vmem [#allocation3], 8
          %904 = vst.msk [vmem:[%s903] sm:$0xf] %vm863, %v901
          %905 = vrot.lane.b32.xlu0 %v868, 48
          %v906 = vpop.permute.xlu0 %905
          %s908 = scalar_lea.vmem [#allocation4], 8
          %909 = vst.msk [vmem:[%s908] sm:$0xf] %vm863, %v906
          %910 = vrot.lane.b32.xlu0 %v879, 104
          %v911 = vpop.permute.xlu0 %910
          %s913 = scalar_lea.vmem [#allocation2], 12
          %914 = vst.msk [vmem:[%s913] sm:$0xf] %vm863, %v911
          %915 = vrot.lane.b32.xlu0 %v868, 72
          %v916 = vpop.permute.xlu0 %915
          %s918 = scalar_lea.vmem [#allocation3], 12
          %919 = vst.msk [vmem:[%s918] sm:$0xf] %vm863, %v916
          %920 = vrot.lane.b32.xlu0 %v868, 40
          %v921 = vpop.permute.xlu0 %920
          %s923 = scalar_lea.vmem [#allocation4], 12
          %924 = vst.msk [vmem:[%s923] sm:$0xf] %vm863, %v921
        $region152: #{tpu_custom_call.1} parent=83 // pred_fallthru
          _
        %s925 = smul.u32 %s46, 8
        %v926 = vld [vmem:[%s652] sm:$0xff]
        %s927 = sshra.s32 %s925, 3
        %s928 = sand.u32 %s925, 7
        %s929 = smul.addr %s927, 4
        %s930 = scalar_lea.vmem [#allocation2], %s929
        %v931 = vld [vmem:[%s930] sm:$0xf]
        %v932 = vld [vmem:[#allocation3] sm:$0xf]
        %v933 = vld [vmem:[#allocation4] sm:$0xf]
        %vm934 = vcmask 64512
        %v936 = vsel %vm934, %v931, 0
        %v939 = vsel %vm934, %v932, 0
        %941 = vmatprep.subr.bf16.mxu0 0
        %942 = vmatpush1.bf16.xpose.msra.mxu0 %v939
        %943 = vmatprep.subr.bf16.mxu0 0
        %944 = vmatpush1.bf16.xpose.msra.mxu0 0
        %945 = vmatprep.subr.bf16.mxu0 0
        %946 = vmatpush1.bf16.xpose.msra.mxu0 0
        %947 = vmatprep.subr.bf16.mxu0 0
        %948 = vmatpush1.bf16.xpose.msra.mxu0 0
        %949 = vmatprep.subr.bf16.mxu0 0
        %950 = vmatpush1.bf16.xpose.msra.mxu0 0
        %951 = vmatprep.subr.bf16.mxu0 0
        %952 = vmatpush1.bf16.xpose.msra.mxu0 0
        %953 = vmatprep.subr.bf16.mxu0 0
        %954 = vmatpush1.bf16.xpose.msra.mxu0 0
        %955 = vmatprep.subr.bf16.mxu0 0
        %956 = vmatpush1.bf16.xpose.msra.mxu0 0
        %957 = vmatprep.subr.bf16.mxu0 0
        %958 = vmatpush1.bf16.xpose.msra.mxu0 0
        %959 = vmatprep.subr.bf16.mxu0 0
        %960 = vmatpush1.bf16.xpose.msra.mxu0 0
        %961 = vmatprep.subr.bf16.mxu0 0
        %962 = vmatpush1.bf16.xpose.msra.mxu0 0
        %963 = vmatprep.subr.bf16.mxu0 0
        %964 = vmatpush1.bf16.xpose.msra.mxu0 0
        %965 = vmatprep.subr.bf16.mxu0 0
        %966 = vmatpush1.bf16.xpose.msra.mxu0 0
        %967 = vmatprep.subr.bf16.mxu0 0
        %968 = vmatpush1.bf16.xpose.msra.mxu0 0
        %969 = vmatprep.subr.bf16.mxu0 0
        %970 = vmatpush1.bf16.xpose.msra.mxu0 0
        %971 = vmatprep.subr.bf16.mxu0 0
        %972 = vmatpush1.bf16.xpose.msra.mxu0 0
        %973 = vmatprep.mubr.bf16.mxu0 0
        %974 = vmatmul.mubr.bf16.gmra.mrb[0].mxu0 %v936
        %v975 = vpop.f32.mrb[0].mxu0
        %v976 = vadd.f32 0.0, %v975
        %v977 = vpop.f32.mrb[0].mxu0
        %v978 = vpop.f32.mrb[0].mxu0
        %v979 = vpop.f32.mrb[0].mxu0
        %980 = vdwg.mxu0
        %v981 = vsel %vm934, %v976, -inf
        %982 = vmax.xlane.f32.xlu0 %v981
        %v983 = vpop.xlane.xlu0 %982
        %v984 = vsub.f32 %v976, %v983
        %v985 = vmul.f32 %v984, 1.442695
        %v986 = vpow.pop %v985
        %v987 = vsel %vm934, %v986, 0.0
        %988 = vadd.xlane.f32.xlu0 %v987
        %v989 = vpop.xlane.xlu0 %988
        %v990 = vrcp.pop %v989
        %v991 = vmul.f32 %v986, %v990
        %v992 = vpack.c.bf16 %v991, %v991
        %v994 = vsel %vm934, %v992, 0
        %vm996 = vcmask 1043456
        %v998 = vsel %vm996, %v933, 0
        %1000 = vmatprep.subr.bf16.mxu0 0
        %1001 = vmatpush1.bf16.msra.mxu0 %v998
        %1002 = vmatprep.subr.bf16.mxu0 0
        %1003 = vmatpush1.bf16.msra.mxu0 0
        %1004 = vmatprep.subr.bf16.mxu0 0
        %1005 = vmatpush1.bf16.msra.mxu0 0
        %1006 = vmatprep.subr.bf16.mxu0 0
        %1007 = vmatpush1.bf16.msra.mxu0 0
        %1008 = vmatprep.subr.bf16.mxu0 0
        %1009 = vmatpush1.bf16.msra.mxu0 0
        %1010 = vmatprep.subr.bf16.mxu0 0
        %1011 = vmatpush1.bf16.msra.mxu0 0
        %1012 = vmatprep.subr.bf16.mxu0 0
        %1013 = vmatpush1.bf16.msra.mxu0 0
        %1014 = vmatprep.subr.bf16.mxu0 0
        %1015 = vmatpush1.bf16.msra.mxu0 0
        %1016 = vmatprep.subr.bf16.mxu0 0
        %1017 = vmatpush1.bf16.msra.mxu0 0
        %1018 = vmatprep.subr.bf16.mxu0 0
        %1019 = vmatpush1.bf16.msra.mxu0 0
        %1020 = vmatprep.subr.bf16.mxu0 0
        %1021 = vmatpush1.bf16.msra.mxu0 0
        %1022 = vmatprep.subr.bf16.mxu0 0
        %1023 = vmatpush1.bf16.msra.mxu0 0
        %1024 = vmatprep.subr.bf16.mxu0 0
        %1025 = vmatpush1.bf16.msra.mxu0 0
        %1026 = vmatprep.subr.bf16.mxu0 0
        %1027 = vmatpush1.bf16.msra.mxu0 0
        %1028 = vmatprep.subr.bf16.mxu0 0
        %1029 = vmatpush1.bf16.msra.mxu0 0
        %1030 = vmatprep.subr.bf16.mxu0 0
        %1031 = vmatpush1.bf16.msra.mxu0 0
        %1032 = vmatprep.mubr.bf16.mxu0 0
        %1033 = vmatmul.mubr.bf16.gmra.mrb[0].mxu0 %v994
        %v1034 = vpop.f32.mrb[0].mxu0
        %v1035 = vadd.f32 0.0, %v1034
        %v1036 = vpop.f32.mrb[0].mxu0
        %v1037 = vpop.f32.mrb[0].mxu0
        %v1038 = vpop.f32.mrb[0].mxu0
        %1039 = vdwg.mxu0
        %v1040 = vpack.c.bf16 %v1035, %v1035
        %vm1041 = vcmask 60416
        %1042 = vst.msk [vmem:[#allocation5] sm:$0xf] %vm1041, %v1040
        %s1043 = sadd.s32 %s927, 1
        %s1044 = smul.addr %s1043, 4
        %s1045 = scalar_lea.vmem [#allocation2], %s1044
        %v1046 = vld [vmem:[%s1045] sm:$0xf]
        %s1047 = scalar_lea.vmem [#allocation3], 4
        %v1048 = vld [vmem:[%s1047] sm:$0xf]
        %s1049 = scalar_lea.vmem [#allocation4], 4
        %v1050 = vld [vmem:[%s1049] sm:$0xf]
        %v1052 = vsel %vm934, %v1046, 0
        %v1055 = vsel %vm934, %v1048, 0
        %1057 = vmatprep.subr.bf16.mxu0 0
        %1058 = vmatpush1.bf16.xpose.msra.mxu0 %v1055
        %1059 = vmatprep.subr.bf16.mxu0 0
        %1060 = vmatpush1.bf16.xpose.msra.mxu0 0
        %1061 = vmatprep.subr.bf16.mxu0 0
        %1062 = vmatpush1.bf16.xpose.msra.mxu0 0
        %1063 = vmatprep.subr.bf16.mxu0 0
        %1064 = vmatpush1.bf16.xpose.msra.mxu0 0
        %1065 = vmatprep.subr.bf16.mxu0 0
        %1066 = vmatpush1.bf16.xpose.msra.mxu0 0
        %1067 = vmatprep.subr.bf16.mxu0 0
        %1068 = vmatpush1.bf16.xpose.msra.mxu0 0
        %1069 = vmatprep.subr.bf16.mxu0 0
        %1070 = vmatpush1.bf16.xpose.msra.mxu0 0
        %1071 = vmatprep.subr.bf16.mxu0 0
        %1072 = vmatpush1.bf16.xpose.msra.mxu0 0
        %1073 = vmatprep.subr.bf16.mxu0 0
        %1074 = vmatpush1.bf16.xpose.msra.mxu0 0
        %1075 = vmatprep.subr.bf16.mxu0 0
        %1076 = vmatpush1.bf16.xpose.msra.mxu0 0
        %1077 = vmatprep.subr.bf16.mxu0 0
        %1078 = vmatpush1.bf16.xpose.msra.mxu0 0
        %1079 = vmatprep.subr.bf16.mxu0 0
        %1080 = vmatpush1.bf16.xpose.msra.mxu0 0
        %1081 = vmatprep.subr.bf16.mxu0 0
        %1082 = vmatpush1.bf16.xpose.msra.mxu0 0
        %1083 = vmatprep.subr.bf16.mxu0 0
        %1084 = vmatpush1.bf16.xpose.msra.mxu0 0
        %1085 = vmatprep.subr.bf16.mxu0 0
        %1086 = vmatpush1.bf16.xpose.msra.mxu0 0
        %1087 = vmatprep.subr.bf16.mxu0 0
        %1088 = vmatpush1.bf16.xpose.msra.mxu0 0
        %1089 = vmatprep.mubr.bf16.mxu0 0
        %1090 = vmatmul.mubr.bf16.gmra.mrb[0].mxu0 %v1052
        %v1091 = vpop.f32.mrb[0].mxu0
        %v1092 = vadd.f32 0.0, %v1091
        %v1093 = vpop.f32.mrb[0].mxu0
        %v1094 = vpop.f32.mrb[0].mxu0
        %v1095 = vpop.f32.mrb[0].mxu0
        %1096 = vdwg.mxu0
        %v1097 = vsel %vm934, %v1092, -inf
        %1098 = vmax.xlane.f32.xlu0 %v1097
        %v1099 = vpop.xlane.xlu0 %1098
        %v1100 = vsub.f32 %v1092, %v1099
        %v1101 = vmul.f32 %v1100, 1.442695
        %v1102 = vpow.pop %v1101
        %v1103 = vsel %vm934, %v1102, 0.0
        %1104 = vadd.xlane.f32.xlu0 %v1103
        %v1105 = vpop.xlane.xlu0 %1104
        %v1106 = vrcp.pop %v1105
        %v1107 = vmul.f32 %v1102, %v1106
        %v1108 = vpack.c.bf16 %v1107, %v1107
        %v1110 = vsel %vm934, %v1108, 0
        %v1113 = vsel %vm996, %v1050, 0
        %1115 = vmatprep.subr.bf16.mxu0 0
        %1116 = vmatpush1.bf16.msra.mxu0 %v1113
        %1117 = vmatprep.subr.bf16.mxu0 0
        %1118 = vmatpush1.bf16.msra.mxu0 0
        %1119 = vmatprep.subr.bf16.mxu0 0
        %1120 = vmatpush1.bf16.msra.mxu0 0
        %1121 = vmatprep.subr.bf16.mxu0 0
        %1122 = vmatpush1.bf16.msra.mxu0 0
        %1123 = vmatprep.subr.bf16.mxu0 0
        %1124 = vmatpush1.bf16.msra.mxu0 0
        %1125 = vmatprep.subr.bf16.mxu0 0
        %1126 = vmatpush1.bf16.msra.mxu0 0
        %1127 = vmatprep.subr.bf16.mxu0 0
        %1128 = vmatpush1.bf16.msra.mxu0 0
        %1129 = vmatprep.subr.bf16.mxu0 0
        %1130 = vmatpush1.bf16.msra.mxu0 0
        %1131 = vmatprep.subr.bf16.mxu0 0
        %1132 = vmatpush1.bf16.msra.mxu0 0
        %1133 = vmatprep.subr.bf16.mxu0 0
        %1134 = vmatpush1.bf16.msra.mxu0 0
        %1135 = vmatprep.subr.bf16.mxu0 0
        %1136 = vmatpush1.bf16.msra.mxu0 0
        %1137 = vmatprep.subr.bf16.mxu0 0
        %1138 = vmatpush1.bf16.msra.mxu0 0
        %1139 = vmatprep.subr.bf16.mxu0 0
        %1140 = vmatpush1.bf16.msra.mxu0 0
        %1141 = vmatprep.subr.bf16.mxu0 0
        %1142 = vmatpush1.bf16.msra.mxu0 0
        %1143 = vmatprep.subr.bf16.mxu0 0
        %1144 = vmatpush1.bf16.msra.mxu0 0
        %1145 = vmatprep.subr.bf16.mxu0 0
        %1146 = vmatpush1.bf16.msra.mxu0 0
        %1147 = vmatprep.mubr.bf16.mxu0 0
        %1148 = vmatmul.mubr.bf16.gmra.mrb[0].mxu0 %v1110
        %v1149 = vpop.f32.mrb[0].mxu0
        %v1150 = vadd.f32 0.0, %v1149
        %v1151 = vpop.f32.mrb[0].mxu0
        %v1152 = vpop.f32.mrb[0].mxu0
        %v1153 = vpop.f32.mrb[0].mxu0
        %1154 = vdwg.mxu0
        %v1155 = vpack.c.bf16 %v1150, %v1150
        %v1157 = vunpack.c.l.b16 %v1155
        %v1158 = vpack.c.b16 %v1157, %v1157
        %1159 = vrot.lane.b32.xlu0 %v1158, 8
        %v1160 = vpop.permute.xlu0 %1159
        %vm1162 = vcmask 126016
        %1163 = vst.msk [vmem:[#allocation5] sm:$0xf] %vm1162, %v1160
        %s1164 = sadd.s32 %s927, 2
        %s1165 = smul.addr %s1164, 4
        %s1166 = scalar_lea.vmem [#allocation2], %s1165
        %v1167 = vld [vmem:[%s1166] sm:$0xf]
        %s1168 = scalar_lea.vmem [#allocation3], 8
        %v1169 = vld [vmem:[%s1168] sm:$0xf]
        %s1170 = scalar_lea.vmem [#allocation4], 8
        %v1171 = vld [vmem:[%s1170] sm:$0xf]
        %v1173 = vsel %vm934, %v1167, 0
        %v1176 = vsel %vm934, %v1169, 0
        %1178 = vmatprep.subr.bf16.mxu0 0
        %1179 = vmatpush1.bf16.xpose.msra.mxu0 %v1176
        %1180 = vmatprep.subr.bf16.mxu0 0
        %1181 = vmatpush1.bf16.xpose.msra.mxu0 0
        %1182 = vmatprep.subr.bf16.mxu0 0
        %1183 = vmatpush1.bf16.xpose.msra.mxu0 0
        %1184 = vmatprep.subr.bf16.mxu0 0
        %1185 = vmatpush1.bf16.xpose.msra.mxu0 0
        %1186 = vmatprep.subr.bf16.mxu0 0
        %1187 = vmatpush1.bf16.xpose.msra.mxu0 0
        %1188 = vmatprep.subr.bf16.mxu0 0
        %1189 = vmatpush1.bf16.xpose.msra.mxu0 0
        %1190 = vmatprep.subr.bf16.mxu0 0
        %1191 = vmatpush1.bf16.xpose.msra.mxu0 0
        %1192 = vmatprep.subr.bf16.mxu0 0
        %1193 = vmatpush1.bf16.xpose.msra.mxu0 0
        %1194 = vmatprep.subr.bf16.mxu0 0
        %1195 = vmatpush1.bf16.xpose.msra.mxu0 0
        %1196 = vmatprep.subr.bf16.mxu0 0
        %1197 = vmatpush1.bf16.xpose.msra.mxu0 0
        %1198 = vmatprep.subr.bf16.mxu0 0
        %1199 = vmatpush1.bf16.xpose.msra.mxu0 0
        %1200 = vmatprep.subr.bf16.mxu0 0
        %1201 = vmatpush1.bf16.xpose.msra.mxu0 0
        %1202 = vmatprep.subr.bf16.mxu0 0
        %1203 = vmatpush1.bf16.xpose.msra.mxu0 0
        %1204 = vmatprep.subr.bf16.mxu0 0
        %1205 = vmatpush1.bf16.xpose.msra.mxu0 0
        %1206 = vmatprep.subr.bf16.mxu0 0
        %1207 = vmatpush1.bf16.xpose.msra.mxu0 0
        %1208 = vmatprep.subr.bf16.mxu0 0
        %1209 = vmatpush1.bf16.xpose.msra.mxu0 0
        %1210 = vmatprep.mubr.bf16.mxu0 0
        %1211 = vmatmul.mubr.bf16.gmra.mrb[0].mxu0 %v1173
        %v1212 = vpop.f32.mrb[0].mxu0
        %v1213 = vadd.f32 0.0, %v1212
        %v1214 = vpop.f32.mrb[0].mxu0
        %v1215 = vpop.f32.mrb[0].mxu0
        %v1216 = vpop.f32.mrb[0].mxu0
        %1217 = vdwg.mxu0
        %v1218 = vsel %vm934, %v1213, -inf
        %1219 = vmax.xlane.f32.xlu0 %v1218
        %v1220 = vpop.xlane.xlu0 %1219
        %v1221 = vsub.f32 %v1213, %v1220
        %v1222 = vmul.f32 %v1221, 1.442695
        %v1223 = vpow.pop %v1222
        %v1224 = vsel %vm934, %v1223, 0.0
        %1225 = vadd.xlane.f32.xlu0 %v1224
        %v1226 = vpop.xlane.xlu0 %1225
        %v1227 = vrcp.pop %v1226
        %v1228 = vmul.f32 %v1223, %v1227
        %v1229 = vpack.c.bf16 %v1228, %v1228
        %v1231 = vsel %vm934, %v1229, 0
        %v1234 = vsel %vm996, %v1171, 0
        %1236 = vmatprep.subr.bf16.mxu0 0
        %1237 = vmatpush1.bf16.msra.mxu0 %v1234
        %1238 = vmatprep.subr.bf16.mxu0 0
        %1239 = vmatpush1.bf16.msra.mxu0 0
        %1240 = vmatprep.subr.bf16.mxu0 0
        %1241 = vmatpush1.bf16.msra.mxu0 0
        %1242 = vmatprep.subr.bf16.mxu0 0
        %1243 = vmatpush1.bf16.msra.mxu0 0
        %1244 = vmatprep.subr.bf16.mxu0 0
        %1245 = vmatpush1.bf16.msra.mxu0 0
        %1246 = vmatprep.subr.bf16.mxu0 0
        %1247 = vmatpush1.bf16.msra.mxu0 0
        %1248 = vmatprep.subr.bf16.mxu0 0
        %1249 = vmatpush1.bf16.msra.mxu0 0
        %1250 = vmatprep.subr.bf16.mxu0 0
        %1251 = vmatpush1.bf16.msra.mxu0 0
        %1252 = vmatprep.subr.bf16.mxu0 0
        %1253 = vmatpush1.bf16.msra.mxu0 0
        %1254 = vmatprep.subr.bf16.mxu0 0
        %1255 = vmatpush1.bf16.msra.mxu0 0
        %1256 = vmatprep.subr.bf16.mxu0 0
        %1257 = vmatpush1.bf16.msra.mxu0 0
        %1258 = vmatprep.subr.bf16.mxu0 0
        %1259 = vmatpush1.bf16.msra.mxu0 0
        %1260 = vmatprep.subr.bf16.mxu0 0
        %1261 = vmatpush1.bf16.msra.mxu0 0
        %1262 = vmatprep.subr.bf16.mxu0 0
        %1263 = vmatpush1.bf16.msra.mxu0 0
        %1264 = vmatprep.subr.bf16.mxu0 0
        %1265 = vmatpush1.bf16.msra.mxu0 0
        %1266 = vmatprep.subr.bf16.mxu0 0
        %1267 = vmatpush1.bf16.msra.mxu0 0
        %1268 = vmatprep.mubr.bf16.mxu0 0
        %1269 = vmatmul.mubr.bf16.gmra.mrb[0].mxu0 %v1231
        %v1270 = vpop.f32.mrb[0].mxu0
        %v1271 = vadd.f32 0.0, %v1270
        %v1272 = vpop.f32.mrb[0].mxu0
        %v1273 = vpop.f32.mrb[0].mxu0
        %v1274 = vpop.f32.mrb[0].mxu0
        %1275 = vdwg.mxu0
        %v1276 = vpack.c.bf16 %v1271, %v1271
        %v1278 = vunpack.c.l.b16 %v1276
        %v1279 = vpack.c.b16 %v1278, %v1278
        %1280 = vrot.lane.b32.xlu0 %v1279, 16
        %v1281 = vpop.permute.xlu0 %1280
        %vm1283 = vcmask 191616
        %1284 = vst.msk [vmem:[#allocation5] sm:$0xf] %vm1283, %v1281
        %s1285 = sadd.s32 %s927, 3
        %s1286 = smul.addr %s1285, 4
        %s1287 = scalar_lea.vmem [#allocation2], %s1286
        %v1288 = vld [vmem:[%s1287] sm:$0xf]
        %s1289 = scalar_lea.vmem [#allocation3], 12
        %v1290 = vld [vmem:[%s1289] sm:$0xf]
        %s1291 = scalar_lea.vmem [#allocation4], 12
        %v1292 = vld [vmem:[%s1291] sm:$0xf]
        %v1294 = vsel %vm934, %v1288, 0
        %v1297 = vsel %vm934, %v1290, 0
        %1299 = vmatprep.subr.bf16.mxu0 0
        %1300 = vmatpush1.bf16.xpose.msra.mxu0 %v1297
        %1301 = vmatprep.subr.bf16.mxu0 0
        %1302 = vmatpush1.bf16.xpose.msra.mxu0 0
        %1303 = vmatprep.subr.bf16.mxu0 0
        %1304 = vmatpush1.bf16.xpose.msra.mxu0 0
        %1305 = vmatprep.subr.bf16.mxu0 0
        %1306 = vmatpush1.bf16.xpose.msra.mxu0 0
        %1307 = vmatprep.subr.bf16.mxu0 0
        %1308 = vmatpush1.bf16.xpose.msra.mxu0 0
        %1309 = vmatprep.subr.bf16.mxu0 0
        %1310 = vmatpush1.bf16.xpose.msra.mxu0 0
        %1311 = vmatprep.subr.bf16.mxu0 0
        %1312 = vmatpush1.bf16.xpose.msra.mxu0 0
        %1313 = vmatprep.subr.bf16.mxu0 0
        %1314 = vmatpush1.bf16.xpose.msra.mxu0 0
        %1315 = vmatprep.subr.bf16.mxu0 0
        %1316 = vmatpush1.bf16.xpose.msra.mxu0 0
        %1317 = vmatprep.subr.bf16.mxu0 0
        %1318 = vmatpush1.bf16.xpose.msra.mxu0 0
        %1319 = vmatprep.subr.bf16.mxu0 0
        %1320 = vmatpush1.bf16.xpose.msra.mxu0 0
        %1321 = vmatprep.subr.bf16.mxu0 0
        %1322 = vmatpush1.bf16.xpose.msra.mxu0 0
        %1323 = vmatprep.subr.bf16.mxu0 0
        %1324 = vmatpush1.bf16.xpose.msra.mxu0 0
        %1325 = vmatprep.subr.bf16.mxu0 0
        %1326 = vmatpush1.bf16.xpose.msra.mxu0 0
        %1327 = vmatprep.subr.bf16.mxu0 0
        %1328 = vmatpush1.bf16.xpose.msra.mxu0 0
        %1329 = vmatprep.subr.bf16.mxu0 0
        %1330 = vmatpush1.bf16.xpose.msra.mxu0 0
        %1331 = vmatprep.mubr.bf16.mxu0 0
        %1332 = vmatmul.mubr.bf16.gmra.mrb[0].mxu0 %v1294
        %v1333 = vpop.f32.mrb[0].mxu0
        %v1334 = vadd.f32 0.0, %v1333
        %v1335 = vpop.f32.mrb[0].mxu0
        %v1336 = vpop.f32.mrb[0].mxu0
        %v1337 = vpop.f32.mrb[0].mxu0
        %1338 = vdwg.mxu0
        %v1339 = vsel %vm934, %v1334, -inf
        %1340 = vmax.xlane.f32.xlu0 %v1339
        %v1341 = vpop.xlane.xlu0 %1340
        %v1342 = vsub.f32 %v1334, %v1341
        %v1343 = vmul.f32 %v1342, 1.442695
        %v1344 = vpow.pop %v1343
        %v1345 = vsel %vm934, %v1344, 0.0
        %1346 = vadd.xlane.f32.xlu0 %v1345
        %v1347 = vpop.xlane.xlu0 %1346
        %v1348 = vrcp.pop %v1347
        %v1349 = vmul.f32 %v1344, %v1348
        %v1350 = vpack.c.bf16 %v1349, %v1349
        %v1352 = vsel %vm934, %v1350, 0
        %v1355 = vsel %vm996, %v1292, 0
        %1357 = vmatprep.subr.bf16.mxu0 0
        %1358 = vmatpush1.bf16.msra.mxu0 %v1355
        %1359 = vmatprep.subr.bf16.mxu0 0
        %1360 = vmatpush1.bf16.msra.mxu0 0
        %1361 = vmatprep.subr.bf16.mxu0 0
        %1362 = vmatpush1.bf16.msra.mxu0 0
        %1363 = vmatprep.subr.bf16.mxu0 0
        %1364 = vmatpush1.bf16.msra.mxu0 0
        %1365 = vmatprep.subr.bf16.mxu0 0
        %1366 = vmatpush1.bf16.msra.mxu0 0
        %1367 = vmatprep.subr.bf16.mxu0 0
        %1368 = vmatpush1.bf16.msra.mxu0 0
        %1369 = vmatprep.subr.bf16.mxu0 0
        %1370 = vmatpush1.bf16.msra.mxu0 0
        %1371 = vmatprep.subr.bf16.mxu0 0
        %1372 = vmatpush1.bf16.msra.mxu0 0
        %1373 = vmatprep.subr.bf16.mxu0 0
        %1374 = vmatpush1.bf16.msra.mxu0 0
        %1375 = vmatprep.subr.bf16.mxu0 0
        %1376 = vmatpush1.bf16.msra.mxu0 0
        %1377 = vmatprep.subr.bf16.mxu0 0
        %1378 = vmatpush1.bf16.msra.mxu0 0
        %1379 = vmatprep.subr.bf16.mxu0 0
        %1380 = vmatpush1.bf16.msra.mxu0 0
        %1381 = vmatprep.subr.bf16.mxu0 0
        %1382 = vmatpush1.bf16.msra.mxu0 0
        %1383 = vmatprep.subr.bf16.mxu0 0
        %1384 = vmatpush1.bf16.msra.mxu0 0
        %1385 = vmatprep.subr.bf16.mxu0 0
        %1386 = vmatpush1.bf16.msra.mxu0 0
        %1387 = vmatprep.subr.bf16.mxu0 0
        %1388 = vmatpush1.bf16.msra.mxu0 0
        %1389 = vmatprep.mubr.bf16.mxu0 0
        %1390 = vmatmul.mubr.bf16.gmra.mrb[0].mxu0 %v1352
        %v1391 = vpop.f32.mrb[0].mxu0
        %v1392 = vadd.f32 0.0, %v1391
        %v1393 = vpop.f32.mrb[0].mxu0
        %v1394 = vpop.f32.mrb[0].mxu0
        %v1395 = vpop.f32.mrb[0].mxu0
        %1396 = vdwg.mxu0
        %v1397 = vpack.c.bf16 %v1392, %v1392
        %v1399 = vunpack.c.l.b16 %v1397
        %v1400 = vpack.c.b16 %v1399, %v1399
        %1401 = vrot.lane.b32.xlu0 %v1400, 24
        %v1402 = vpop.permute.xlu0 %1401
        %vm1404 = vcmask 257216
        %1405 = vst.msk [vmem:[#allocation5] sm:$0xf] %vm1404, %v1402
        %v1406 = vld [vmem:[#allocation5] sm:$0xf]
        %v1407 = vld [vmem:[#allocation17] sm:$0xf]
        %v1408 = vld [vmem:[#allocation17 + $0x4] sm:$0xf]
        %v1409 = vld [vmem:[#allocation17 + $0x8] sm:$0xf]
        %v1410 = vld [vmem:[#allocation17 + $0xc] sm:$0xf]
        %v1411 = vld [vmem:[#allocation18] sm:$0x1]
        %v1413 = vlaneseq
        %v1414 = vshrl.u32 %v1413, 7
        %v1415 = vsub.s32 0, %v1414
        %v1416 = vrot.slane %v1411, %v1415
        %v1422 = vunpack.c.l.b16 %v1407
        %v1423 = vunpack.c.l.b16 %v1408
        %v1424 = vunpack.c.l.b16 %v1409
        %v1425 = vunpack.c.l.b16 %v1410
        %v1426 = vpack.c.b16 %v1423, %v1422
        %v1427 = vpack.c.b16 %v1425, %v1424
        %vm1430 = vcmask 261120
        %v1432 = vsel %vm1430, %v1406, 0
        %1434 = vmatprep.subr.bf16.mxu0 0
        %1435 = vmatpush1.bf16.msra.mxu0 %v1426
        %1436 = vmatprep.subr.bf16.mxu0 0
        %1437 = vmatpush1.bf16.msra.mxu0 %v1427
        %1438 = vmatprep.subr.bf16.mxu0 0
        %1439 = vmatpush1.bf16.msra.mxu0 0
        %1440 = vmatprep.subr.bf16.mxu0 0
        %1441 = vmatpush1.bf16.msra.mxu0 0
        %1442 = vmatprep.subr.bf16.mxu0 0
        %1443 = vmatpush1.bf16.msra.mxu0 0
        %1444 = vmatprep.subr.bf16.mxu0 0
        %1445 = vmatpush1.bf16.msra.mxu0 0
        %1446 = vmatprep.subr.bf16.mxu0 0
        %1447 = vmatpush1.bf16.msra.mxu0 0
        %1448 = vmatprep.subr.bf16.mxu0 0
        %1449 = vmatpush1.bf16.msra.mxu0 0
        %1450 = vmatprep.subr.bf16.mxu0 0
        %1451 = vmatpush1.bf16.msra.mxu0 0
        %1452 = vmatprep.subr.bf16.mxu0 0
        %1453 = vmatpush1.bf16.msra.mxu0 0
        %1454 = vmatprep.subr.bf16.mxu0 0
        %1455 = vmatpush1.bf16.msra.mxu0 0
        %1456 = vmatprep.subr.bf16.mxu0 0
        %1457 = vmatpush1.bf16.msra.mxu0 0
        %1458 = vmatprep.subr.bf16.mxu0 0
        %1459 = vmatpush1.bf16.msra.mxu0 0
        %1460 = vmatprep.subr.bf16.mxu0 0
        %1461 = vmatpush1.bf16.msra.mxu0 0
        %1462 = vmatprep.subr.bf16.mxu0 0
        %1463 = vmatpush1.bf16.msra.mxu0 0
        %1464 = vmatprep.subr.bf16.mxu0 0
        %1465 = vmatpush1.bf16.msra.mxu0 0
        %1466 = vmatprep.mubr.bf16.mxu0 0
        %1467 = vmatmul.mubr.bf16.gmra.mrb[0].mxu0 %v1432
        %v1468 = vpop.f32.mrb[0].mxu0
        %v1469 = vadd.f32 %v1416, %v1468
        %v1470 = vpop.f32.mrb[0].mxu0
        %v1471 = vpop.f32.mrb[0].mxu0
        %v1472 = vpop.f32.mrb[0].mxu0
        %1473 = vdwg.mxu0
        %v1474 = vadd.f32 %v926, %v1469
        %v1475 = vld [vmem:[#allocation20] sm:$0x1]
        %v1476 = vld [vmem:[#allocation21] sm:$0x1]
        %v1477 = vsel %vm1430, %v1474, 0.0
        %1478 = vadd.xlane.f32.xlu0 %v1477
        %v1479 = vpop.xlane.xlu0 %1478
        %v1480 = vrcp.pop 32.0
        %v1481 = vmul.f32 %v1479, %v1480
        %v1482 = vsub.f32 %v1474, %v1481
        %v1483 = vmul.f32 %v1482, %v1482
        %v1484 = vsel %vm1430, %v1483, 0.0
        %1485 = vadd.xlane.f32.xlu0 %v1484
        %v1486 = vpop.xlane.xlu0 %1485
        %v1487 = vmul.f32 %v1486, %v1480
        %v1488 = vadd.f32 %v1487, 1e-05
        %v1489 = vrsqrt.pop %v1488
        %v1490 = vmul.f32 %v1482, %v1489
        %v1492 = vlaneseq
        %v1493 = vshrl.u32 %v1492, 7
        %v1494 = vsub.s32 0, %v1493
        %v1495 = vrot.slane %v1475, %v1494
        %v1497 = vmul.f32 %v1490, %v1495
        %v1499 = vlaneseq
        %v1500 = vshrl.u32 %v1499, 7
        %v1501 = vsub.s32 0, %v1500
        %v1502 = vrot.slane %v1476, %v1501
        %v1504 = vadd.f32 %v1497, %v1502
        %v1505 = vpack.c.bf16 %v1504, %v1504
        %v1506 = vld [vmem:[#allocation23] sm:$0xf]
        %v1507 = vld [vmem:[#allocation23 + $0x4] sm:$0xf]
        %v1508 = vld [vmem:[#allocation23 + $0x8] sm:$0xf]
        %v1509 = vld [vmem:[#allocation23 + $0xc] sm:$0xf]
        %v1510 = vld [vmem:[#allocation24] sm:$0x1]
        %v1512 = vlaneseq
        %v1513 = vshrl.u32 %v1512, 7
        %v1514 = vsub.s32 0, %v1513
        %v1515 = vrot.slane %v1510, %v1514
        %v1521 = vunpack.c.l.b16 %v1506
        %v1522 = vunpack.c.l.b16 %v1507
        %v1523 = vunpack.c.l.b16 %v1508
        %v1524 = vunpack.c.l.b16 %v1509
        %v1525 = vpack.c.b16 %v1522, %v1521
        %v1526 = vpack.c.b16 %v1524, %v1523
        %v1530 = vsel %vm1430, %v1505, 0
        %1532 = vmatprep.subr.bf16.mxu0 0
        %1533 = vmatpush1.bf16.msra.mxu0 %v1525
        %1534 = vmatprep.subr.bf16.mxu0 0
        %1535 = vmatpush1.bf16.msra.mxu0 %v1526
        %1536 = vmatprep.subr.bf16.mxu0 0
        %1537 = vmatpush1.bf16.msra.mxu0 0
        %1538 = vmatprep.subr.bf16.mxu0 0
        %1539 = vmatpush1.bf16.msra.mxu0 0
        %1540 = vmatprep.subr.bf16.mxu0 0
        %1541 = vmatpush1.bf16.msra.mxu0 0
        %1542 = vmatprep.subr.bf16.mxu0 0
        %1543 = vmatpush1.bf16.msra.mxu0 0
        %1544 = vmatprep.subr.bf16.mxu0 0
        %1545 = vmatpush1.bf16.msra.mxu0 0
        %1546 = vmatprep.subr.bf16.mxu0 0
        %1547 = vmatpush1.bf16.msra.mxu0 0
        %1548 = vmatprep.subr.bf16.mxu0 0
        %1549 = vmatpush1.bf16.msra.mxu0 0
        %1550 = vmatprep.subr.bf16.mxu0 0
        %1551 = vmatpush1.bf16.msra.mxu0 0
        %1552 = vmatprep.subr.bf16.mxu0 0
        %1553 = vmatpush1.bf16.msra.mxu0 0
        %1554 = vmatprep.subr.bf16.mxu0 0
        %1555 = vmatpush1.bf16.msra.mxu0 0
        %1556 = vmatprep.subr.bf16.mxu0 0
        %1557 = vmatpush1.bf16.msra.mxu0 0
        %1558 = vmatprep.subr.bf16.mxu0 0
        %1559 = vmatpush1.bf16.msra.mxu0 0
        %1560 = vmatprep.subr.bf16.mxu0 0
        %1561 = vmatpush1.bf16.msra.mxu0 0
        %1562 = vmatprep.subr.bf16.mxu0 0
        %1563 = vmatpush1.bf16.msra.mxu0 0
        %1564 = vmatprep.mubr.bf16.mxu0 0
        %1565 = vmatmul.mubr.bf16.gmra.mrb[0].mxu0 %v1530
        %v1566 = vpop.f32.mrb[0].mxu0
        %v1567 = vadd.f32 %v1515, %v1566
        %v1568 = vpop.f32.mrb[0].mxu0
        %v1569 = vpop.f32.mrb[0].mxu0
        %v1570 = vpop.f32.mrb[0].mxu0
        %1571 = vdwg.mxu0
        %v1572 = vmul.f32 %v1567, 0.5
        %v1573 = vmul.f32 %v1567, 0.70710677
        %v1574 = verf.f32.pop %v1573
        %v1575 = vadd.f32 %v1574, 1.0
        %v1576 = vmul.f32 %v1572, %v1575
        %v1577 = vpack.c.bf16 %v1576, %v1576
        %v1578 = vld [vmem:[#allocation26] sm:$0xf]
        %v1579 = vld [vmem:[#allocation26 + $0x4] sm:$0xf]
        %v1580 = vld [vmem:[#allocation26 + $0x8] sm:$0xf]
        %v1581 = vld [vmem:[#allocation26 + $0xc] sm:$0xf]
        %v1582 = vld [vmem:[#allocation26 + $0x10] sm:$0xf]
        %v1583 = vld [vmem:[#allocation26 + $0x14] sm:$0xf]
        %v1584 = vld [vmem:[#allocation26 + $0x18] sm:$0xf]
        %v1585 = vld [vmem:[#allocation26 + $0x1c] sm:$0xf]
        %v1586 = vld [vmem:[#allocation26 + $0x20] sm:$0xf]
        %v1587 = vld [vmem:[#allocation26 + $0x24] sm:$0xf]
        %v1588 = vld [vmem:[#allocation26 + $0x28] sm:$0xf]
        %v1589 = vld [vmem:[#allocation26 + $0x2c] sm:$0xf]
        %v1590 = vld [vmem:[#allocation26 + $0x30] sm:$0xf]
        %v1591 = vld [vmem:[#allocation26 + $0x34] sm:$0xf]
        %v1592 = vld [vmem:[#allocation26 + $0x38] sm:$0xf]
        %v1593 = vld [vmem:[#allocation26 + $0x3c] sm:$0xf]
        %v1594 = vld [vmem:[#allocation27] sm:$0x1]
        %v1596 = vlaneseq
        %v1597 = vshrl.u32 %v1596, 7
        %v1598 = vsub.s32 0, %v1597
        %v1599 = vrot.slane %v1594, %v1598
        %v1617 = vunpack.c.l.b16 %v1578
        %v1618 = vunpack.c.l.b16 %v1579
        %v1619 = vunpack.c.l.b16 %v1580
        %v1620 = vunpack.c.l.b16 %v1581
        %v1621 = vunpack.c.l.b16 %v1582
        %v1622 = vunpack.c.l.b16 %v1583
        %v1623 = vunpack.c.l.b16 %v1584
        %v1624 = vunpack.c.l.b16 %v1585
        %v1625 = vunpack.c.l.b16 %v1586
        %v1626 = vunpack.c.l.b16 %v1587
        %v1627 = vunpack.c.l.b16 %v1588
        %v1628 = vunpack.c.l.b16 %v1589
        %v1629 = vunpack.c.l.b16 %v1590
        %v1630 = vunpack.c.l.b16 %v1591
        %v1631 = vunpack.c.l.b16 %v1592
        %v1632 = vunpack.c.l.b16 %v1593
        %v1633 = vpack.c.b16 %v1618, %v1617
        %v1634 = vpack.c.b16 %v1620, %v1619
        %v1635 = vpack.c.b16 %v1622, %v1621
        %v1636 = vpack.c.b16 %v1624, %v1623
        %v1637 = vpack.c.b16 %v1626, %v1625
        %v1638 = vpack.c.b16 %v1628, %v1627
        %v1639 = vpack.c.b16 %v1630, %v1629
        %v1640 = vpack.c.b16 %v1632, %v1631
        %1649 = vmatprep.subr.bf16.mxu0 0
        %1650 = vmatpush1.bf16.msra.mxu0 %v1633
        %1651 = vmatprep.subr.bf16.mxu0 0
        %1652 = vmatpush1.bf16.msra.mxu0 %v1634
        %1653 = vmatprep.subr.bf16.mxu0 0
        %1654 = vmatpush1.bf16.msra.mxu0 %v1635
        %1655 = vmatprep.subr.bf16.mxu0 0
        %1656 = vmatpush1.bf16.msra.mxu0 %v1636
        %1657 = vmatprep.subr.bf16.mxu0 0
        %1658 = vmatpush1.bf16.msra.mxu0 %v1637
        %1659 = vmatprep.subr.bf16.mxu0 0
        %1660 = vmatpush1.bf16.msra.mxu0 %v1638
        %1661 = vmatprep.subr.bf16.mxu0 0
        %1662 = vmatpush1.bf16.msra.mxu0 %v1639
        %1663 = vmatprep.subr.bf16.mxu0 0
        %1664 = vmatpush1.bf16.msra.mxu0 %v1640
        %1665 = vmatprep.subr.bf16.mxu0 0
        %1666 = vmatpush1.bf16.msra.mxu0 0
        %1667 = vmatprep.subr.bf16.mxu0 0
        %1668 = vmatpush1.bf16.msra.mxu0 0
        %1669 = vmatprep.subr.bf16.mxu0 0
        %1670 = vmatpush1.bf16.msra.mxu0 0
        %1671 = vmatprep.subr.bf16.mxu0 0
        %1672 = vmatpush1.bf16.msra.mxu0 0
        %1673 = vmatprep.subr.bf16.mxu0 0
        %1674 = vmatpush1.bf16.msra.mxu0 0
        %1675 = vmatprep.subr.bf16.mxu0 0
        %1676 = vmatpush1.bf16.msra.mxu0 0
        %1677 = vmatprep.subr.bf16.mxu0 0
        %1678 = vmatpush1.bf16.msra.mxu0 0
        %1679 = vmatprep.subr.bf16.mxu0 0
        %1680 = vmatpush1.bf16.msra.mxu0 0
        %1681 = vmatprep.mubr.bf16.mxu0 0
        %1682 = vmatmul.mubr.bf16.gmra.mrb[0].mxu0 %v1577
        %v1683 = vpop.f32.mrb[0].mxu0
        %v1684 = vadd.f32 %v1599, %v1683
        %v1685 = vpop.f32.mrb[0].mxu0
        %v1686 = vpop.f32.mrb[0].mxu0
        %v1687 = vpop.f32.mrb[0].mxu0
        %1688 = vdwg.mxu0
        %v1689 = vadd.f32 %v1474, %v1684
        %v1690 = vld [vmem:[#allocation29] sm:$0x1]
        %v1691 = vld [vmem:[#allocation30] sm:$0x1]
        %v1692 = vsel %vm1430, %v1689, 0.0
        %1693 = vadd.xlane.f32.xlu0 %v1692
        %v1694 = vpop.xlane.xlu0 %1693
        %v1695 = vmul.f32 %v1694, %v1480
        %v1696 = vsub.f32 %v1689, %v1695
        %v1697 = vmul.f32 %v1696, %v1696
        %v1698 = vsel %vm1430, %v1697, 0.0
        %1699 = vadd.xlane.f32.xlu0 %v1698
        %v1700 = vpop.xlane.xlu0 %1699
        %v1701 = vmul.f32 %v1700, %v1480
        %v1702 = vadd.f32 %v1701, 1e-05
        %v1703 = vrsqrt.pop %v1702
        %v1704 = vmul.f32 %v1696, %v1703
        %v1706 = vlaneseq
        %v1707 = vshrl.u32 %v1706, 7
        %v1708 = vsub.s32 0, %v1707
        %v1709 = vrot.slane %v1690, %v1708
        %v1711 = vmul.f32 %v1704, %v1709
        %v1713 = vlaneseq
        %v1714 = vshrl.u32 %v1713, 7
        %v1715 = vsub.s32 0, %v1714
        %v1716 = vrot.slane %v1691, %v1715
        %v1718 = vadd.f32 %v1711, %v1716
        %1719 = vst.msk [vmem:[%s756] sm:$0xff] %vm1430, %v1718
        %s1720 = sand.u32 %s411, 1
        %s1721 = scalar_lea.sflag [#allocation8], %s1720
        %s1722 = sand.u32 %s411, 1
        %s1723 = smul.addr %s1722, 8
        %s1724 = scalar_lea.vmem [#allocation32], %s1723
        // Predicated region
        $region153: #{tpu_custom_call.1} parent=83 // pred_check
          %p1725 = pneg %p421
        $region154: #{tpu_custom_call.1} parent=83 // pred_check_branch
          %1727 = sbr.rel (%p1725) target = $region156
        $region155: #{tpu_custom_call.1} parent=83 // pred_region
          %s1729 = ssub.s32 128, 128
          %1730 = vsyncadd %s1721, %s1729
          %s1731 = sadd.s32 %s46, %s45
          %s1732 = smul.addr %s1731, 128
          %s1733 = scalar_lea.hbm %s16, %s1732
          %s1735 = sshll.u32 %s1724, 4
          %s1736 = int_to_ptr.vmem [resolvable:$true] %s1735
          %1738 = dma.vmem_to_hbm [thread:$0]  %s1736, 128, %s1733, %s1721
        $region156: #{tpu_custom_call.1} parent=83 // pred_fallthru
          _
      $region84: #{tpu_custom_call.1} parent=5 // pred_fallthru
        _
      %p1739 = scmp.le.s32.totalorder 2, %s36
      // Predicated region
      $region157: #{tpu_custom_call.1} parent=5 // pred_check
        %p1740 = pneg %p1739
      $region158: #{tpu_custom_call.1} parent=5 // pred_check_branch
        %1742 = sbr.rel (%p1740) target = $region160
      $region159: #{tpu_custom_call.1} parent=5 // pred_region
        %s1743 = ssub.s32 %s36, 2
        // Predicated region
        $region161: #{tpu_custom_call.1} parent=159 // pred_check
          %p1744 = pneg %p427
        $region162: #{tpu_custom_call.1} parent=159 // pred_check_branch
          %1746 = sbr.rel (%p1744) target = $region164
        $region163: #{tpu_custom_call.1} parent=159 // pred_region
          %s1747 = sand.u32 %s412, 1
          %s1748 = scalar_lea.sflag [#allocation8], %s1747
          %s1749 = sand.u32 %s412, 1
          %s1750 = smul.addr %s1749, 8
          %s1751 = scalar_lea.vmem [#allocation32], %s1750
          %1752 = dma.done %s1748, 128
        $region164: #{tpu_custom_call.1} parent=159 // pred_fallthru
          _
      $region160: #{tpu_custom_call.1} parent=5 // pred_fallthru
        _
    $region6: #{tpu_custom_call.1} parent=1 // loop_footer
      %s40 = sadd.s32 1, %s36
    $region7: #{tpu_custom_call.1} parent=1 // loop_footer_branch
      %35 = sbr.rel target = $region3
    $region8: #{tpu_custom_call.1} parent=1 // loop_exit
      _
    %1753 = vsyncpa [#allocation7], 1
    %s1754 = scalar_lea.sflag [#allocation7], 1
    %1755 = vsyncpa %s1754, 1
    %1756 = vsyncpa [#allocation10], 1
    %s1757 = scalar_lea.sflag [#allocation10], 1
    %1758 = vsyncpa %s1757, 1
    %1759 = vsyncpa [#allocation13], 1
    %1760 = vsyncpa [#allocation16], 1
    %1761 = vsyncpa [#allocation19], 1
    %1762 = vsyncpa [#allocation22], 1
    %1763 = vsyncpa [#allocation25], 1
    %1764 = vsyncpa [#allocation28], 1
    %1765 = vsyncpa [#allocation31], 1
    %1766 = vsyncpa [#allocation8], 1
    %s1767 = scalar_lea.sflag [#allocation8], 1
    %1768 = vsyncpa %s1767, 1

// kernel: tpu_custom_call.1
$region0: #{tpu_custom_call.1}
  #allocation0 [shape = 'u32[]', space=smem, size = 0x4, offset = 0x4, fixed_abs, tag = 'smem constant byte address 0x4 - core index']
  #allocation1 [shape = 'u32[144,128]{1,0:T(1,128)}', space=vmem, size = 0x12000, scoped, tag = 'internal scratch']
  #allocation2 [shape = 'bf16[4,8,8]{2,1,0:T(8,128)(2,1)}', space=vmem, size = 0x2000, scoped, tag = 'scratch operand']
  #allocation3 [shape = 'bf16[4,8,8]{2,1,0:T(8,128)(2,1)}', space=vmem, size = 0x2000, scoped, tag = 'scratch operand']
  #allocation4 [shape = 'bf16[4,8,8]{2,1,0:T(8,128)(2,1)}', space=vmem, size = 0x2000, scoped, tag = 'scratch operand']
  #allocation5 [shape = 'bf16[8,32]{1,0:T(8,128)(2,1)}', space=vmem, size = 0x800, scoped, tag = 'scratch operand']
  %s0 = inlined_call_operand.hbm [shape: f32[2,8,32], index: 0, kind: input, shape index: {}]
  %s1 = inlined_call_operand.hbm [shape: f32[2,8,32], index: 1, kind: input, shape index: {}]
  %s2 = inlined_call_operand.hbm [shape: f32[1,32], index: 2, kind: input, shape index: {}]
  %s3 = inlined_call_operand.hbm [shape: f32[1,32], index: 3, kind: input, shape index: {}]
  %s4 = inlined_call_operand.hbm [shape: bf16[32,96], index: 4, kind: input, shape index: {}]
  %s5 = inlined_call_operand.hbm [shape: f32[1,96], index: 5, kind: input, shape index: {}]
  %s6 = inlined_call_operand.hbm [shape: bf16[32,32], index: 6, kind: input, shape index: {}]
  %s7 = inlined_call_operand.hbm [shape: f32[1,32], index: 7, kind: input, shape index: {}]
  %s8 = inlined_call_operand.hbm [shape: f32[1,32], index: 8, kind: input, shape index: {}]
  %s9 = inlined_call_operand.hbm [shape: f32[1,32], index: 9, kind: input, shape index: {}]
  %s10 = inlined_call_operand.hbm [shape: bf16[32,128], index: 10, kind: input, shape index: {}]
  %s11 = inlined_call_operand.hbm [shape: f32[1,128], index: 11, kind: input, shape index: {}]
  %s12 = inlined_call_operand.hbm [shape: bf16[128,32], index: 12, kind: input, shape index: {}]
  %s13 = inlined_call_operand.hbm [shape: f32[1,32], index: 13, kind: input, shape index: {}]
  %s14 = inlined_call_operand.hbm [shape: f32[1,32], index: 14, kind: input, shape index: {}]
  %s15 = inlined_call_operand.hbm [shape: f32[1,32], index: 15, kind: input, shape index: {}]
  %s16 = inlined_call_operand.hbm [shape: f32[2,8,32], index: 16, kind: output, shape index: {}]
  %s17 = sld [smem:[#allocation0]]
  $region165: #{tpu_custom_call.1} parent=0
    _
  %s19 = ssub.s32 1, %s17
  %s20 = scalar_select 0, %s19, %s17
  $region1: #{tpu_custom_call.1} parent=0
    #allocation6 [shape = 'u8[8192]{0}', space=vmem, size = 0x2000, scoped, tag = 'input window, operand 0']
    #allocation7 [shape = 's32[2]{0}', space=sflag, size = 0x8, scoped, tag = 'scoped memory for tpu_custom_call.1']
    #allocation8 [shape = 's32[2]{0}', space=sflag, size = 0x8, scoped, tag = 'scoped memory for tpu_custom_call.1']
    #allocation9 [shape = 'u8[8192]{0}', space=vmem, size = 0x2000, scoped, tag = 'input window, operand 1']
    #allocation10 [shape = 's32[2]{0}', space=sflag, size = 0x8, scoped, tag = 'scoped memory for tpu_custom_call.1']
    #allocation11 [shape = 'u8[512]{0}', space=vmem, size = 0x400, scoped, tag = 'input window, operand 2, single buffered']
    #allocation12 [shape = 'u8[512]{0}', space=vmem, size = 0x400, scoped, tag = 'input window, operand 3, single buffered']
    #allocation13 [shape = 's32[1]{0}', space=sflag, size = 0x4, scoped, tag = 'scoped memory for tpu_custom_call.1']
    #allocation14 [shape = 'u8[8192]{0}', space=vmem, size = 0x2000, scoped, tag = 'input window, operand 4, single buffered']
    #allocation15 [shape = 'u8[512]{0}', space=vmem, size = 0x400, scoped, tag = 'input window, operand 5, single buffered']
    #allocation16 [shape = 's32[1]{0}', space=sflag, size = 0x4, scoped, tag = 'scoped memory for tpu_custom_call.1']
    #allocation17 [shape = 'u8[8192]{0}', space=vmem, size = 0x2000, scoped, tag = 'input window, operand 6, single buffered']
    #allocation18 [shape = 'u8[512]{0}', space=vmem, size = 0x400, scoped, tag = 'input window, operand 7, single buffered']
    #allocation19 [shape = 's32[1]{0}', space=sflag, size = 0x4, scoped, tag = 'scoped memory for tpu_custom_call.1']
    #allocation20 [shape = 'u8[512]{0}', space=vmem, size = 0x400, scoped, tag = 'input window, operand 8, single buffered']
    #allocation21 [shape = 'u8[512]{0}', space=vmem, size = 0x400, scoped, tag = 'input window, operand 9, single buffered']
    #allocation22 [shape = 's32[1]{0}', space=sflag, size = 0x4, scoped, tag = 'scoped memory for tpu_custom_call.1']
    #allocation23 [shape = 'u8[8192]{0}', space=vmem, size = 0x2000, scoped, tag = 'input window, operand 10, single buffered']
    #allocation24 [shape = 'u8[512]{0}', space=vmem, size = 0x400, scoped, tag = 'input window, operand 11, single buffered']
    #allocation25 [shape = 's32[1]{0}', space=sflag, size = 0x4, scoped, tag = 'scoped memory for tpu_custom_call.1']
    #allocation26 [shape = 'u8[32768]{0}', space=vmem, size = 0x8000, scoped, tag = 'input window, operand 12, single buffered']
    #allocation27 [shape = 'u8[512]{0}', space=vmem, size = 0x400, scoped, tag = 'input window, operand 13, single buffered']
    #allocation28 [shape = 's32[1]{0}', space=sflag, size = 0x4, scoped, tag = 'scoped memory for tpu_custom_call.1']
    #allocation29 [shape = 'u8[512]{0}', space=vmem, size = 0x400, scoped, tag = 'input window, operand 14, single buffered']
    #allocation30 [shape = 'u8[512]{0}', space=vmem, size = 0x400, scoped, tag = 'input window, operand 15, single buffered']
    #allocation31 [shape = 's32[1]{0}', space=sflag, size = 0x4, scoped, tag = 'scoped memory for tpu_custom_call.1']
    #allocation32 [shape = 'u8[8192]{0}', space=vmem, size = 0x2000, scoped, tag = 'output window, operand 0']
    %21 = vsyncpa [#allocation7], 0
    %s22 = scalar_lea.sflag [#allocation7], 1
    %23 = vsyncpa %s22, 0
    %24 = vsyncpa [#allocation10], 0
    %s25 = scalar_lea.sflag [#allocation10], 1
    %26 = vsyncpa %s25, 0
    %27 = vsyncpa [#allocation13], 0
    %28 = vsyncpa [#allocation16], 0
    %29 = vsyncpa [#allocation19], 0
    %30 = vsyncpa [#allocation22], 0
    %31 = vsyncpa [#allocation25], 0
    %32 = vsyncpa [#allocation28], 0
    %33 = vsyncpa [#allocation31], 0
    %34 = vsyncpa [#allocation8], 0
    %s35 = scalar_lea.sflag [#allocation8], 1
    %36 = vsyncpa %s35, 0
    loop: start=0, step=1, limit=4
    $region2: #{tpu_custom_call.1} parent=1 // loop_pre_header
      _
    $region3: #{tpu_custom_call.1} parent=1 // loop_header
      %s38 = sphi 0, %s42
      %p39 = scmp.ge.s32.totalorder %s38, 4
      %s45 = sphi 0, %s57
      %s46 = sphi 0, %s53
      %s47 = sphi 0, %s45
      %s48 = sphi 0, %s46
      %s49 = sphi 0, %s47
      %s50 = sphi 0, %s48
      %s60 = sphi 0, %s62
      %s63 = sphi 0, %s60
      %s64 = sphi 0, %s63
      %s80 = sphi 0, %s64
      %s88 = sphi 0, %s90
      %s91 = sphi 0, %s88
      %s92 = sphi 0, %s91
      %s108 = sphi 0, %s92
      %s112 = sphi 0, %s112
      %s114 = sphi 0, %s112
      %s115 = sphi 0, %s114
      %s129 = sphi 0, %s115
      %s133 = sphi 0, %s133
      %s135 = sphi 0, %s133
      %s136 = sphi 0, %s135
      %s150 = sphi 0, %s136
      %s154 = sphi 0, %s154
      %s156 = sphi 0, %s154
      %s157 = sphi 0, %s156
      %s171 = sphi 0, %s157
      %s175 = sphi 0, %s175
      %s177 = sphi 0, %s175
      %s178 = sphi 0, %s177
      %s192 = sphi 0, %s178
      %s196 = sphi 0, %s196
      %s198 = sphi 0, %s196
      %s199 = sphi 0, %s198
      %s213 = sphi 0, %s199
      %s217 = sphi 0, %s217
      %s219 = sphi 0, %s217
      %s220 = sphi 0, %s219
      %s234 = sphi 0, %s220
      %s238 = sphi 0, %s238
      %s240 = sphi 0, %s238
      %s241 = sphi 0, %s240
      %s255 = sphi 0, %s241
      %s259 = sphi 0, %s259
      %s261 = sphi 0, %s259
      %s262 = sphi 0, %s261
      %s276 = sphi 0, %s262
      %s280 = sphi 0, %s280
      %s282 = sphi 0, %s280
      %s283 = sphi 0, %s282
      %s297 = sphi 0, %s283
      %s301 = sphi 0, %s301
      %s303 = sphi 0, %s301
      %s304 = sphi 0, %s303
      %s318 = sphi 0, %s304
      %s322 = sphi 0, %s322
      %s324 = sphi 0, %s322
      %s325 = sphi 0, %s324
      %s339 = sphi 0, %s325
      %s343 = sphi 0, %s343
      %s345 = sphi 0, %s343
      %s346 = sphi 0, %s345
      %s360 = sphi 0, %s346
      %s364 = sphi 0, %s364
      %s366 = sphi 0, %s364
      %s367 = sphi 0, %s366
      %s381 = sphi 0, %s367
      %s385 = sphi 0, %s385
      %s387 = sphi 0, %s385
      %s388 = sphi 0, %s387
      %s402 = sphi 0, %s388
      %s410 = sphi 0, %s412
      %s413 = sphi 0, %s410
      %s414 = sphi 0, %s413
      %s430 = sphi 0, %s414
    $region4: #{tpu_custom_call.1} parent=1 // loop_header_branch
      %41 = sbr.rel (%p39) target = $region8
    $region5: #{tpu_custom_call.1} parent=1 // loop_body
      %s43 = ssub.s32 %s38, 1
      %s44 = ssub.s32 %s38, 2
      %s51 = sadd.s32 1, %s46
      %p52 = scmp.ge.s32.totalorder %s51, 1
      %s53 = scalar_select %p52, 0, %s51
      %s54 = sadd.s32 1, %s45
      %s55 = scalar_select %p52, %s54, %s45
      %p56 = scmp.ge.s32.totalorder %s55, 2
      %s57 = scalar_select %p56, 0, %s55
      %s58 = ssub.s32 %s45, %s57
      %p59 = scmp.eq.s32.totalorder %s58, 0
      %s61 = sadd.s32 %s60, 1
      %s62 = scalar_select %p59, %s60, %s61
      %p65 = pneg %p59
      %p66 = scmp.eq.s32.totalorder %s38, 1
      %p67 = por %p65, %p66
      %p68 = scmp.ne.s32.totalorder %s60, %s63
      %p69 = scmp.eq.s32.totalorder %s38, 0
      %p70 = por %p68, %p69
      %p71 = scmp.ne.s32.totalorder %s60, %s63
      %p72 = scmp.eq.s32.totalorder %s43, 1
      %p73 = por %p71, %p72
      %p74 = scmp.ne.s32.totalorder %s63, %s64
      %p75 = scmp.eq.s32.totalorder %s43, 0
      %p76 = por %p74, %p75
      %p77 = scmp.ne.s32.totalorder %s63, %s64
      %p78 = scmp.eq.s32.totalorder %s44, 1
      %p79 = por %p77, %p78
      %p81 = scmp.ne.s32.totalorder %s64, %s80
      %p82 = scmp.eq.s32.totalorder %s44, 0
      %p83 = por %p81, %p82
      %s84 = ssub.s32 %s45, %s57
      %s85 = ssub.s32 %s46, %s53
      %s86 = sor.u32 %s84, %s85
      %p87 = scmp.eq.s32.totalorder %s86, 0
      %s89 = sadd.s32 %s88, 1
      %s90 = scalar_select %p87, %s88, %s89
      %p93 = pneg %p87
      %p94 = scmp.eq.s32.totalorder %s38, 1
      %p95 = por %p93, %p94
      %p96 = scmp.ne.s32.totalorder %s88, %s91
      %p97 = scmp.eq.s32.totalorder %s38, 0
      %p98 = por %p96, %p97
      %p99 = scmp.ne.s32.totalorder %s88, %s91
      %p100 = scmp.eq.s32.totalorder %s43, 1
      %p101 = por %p99, %p100
      %p102 = scmp.ne.s32.totalorder %s91, %s92
      %p103 = scmp.eq.s32.totalorder %s43, 0
      %p104 = por %p102, %p103
      %p105 = scmp.ne.s32.totalorder %s91, %s92
      %p106 = scmp.eq.s32.totalorder %s44, 1
      %p107 = por %p105, %p106
      %p109 = scmp.ne.s32.totalorder %s92, %s108
      %p110 = scmp.eq.s32.totalorder %s44, 0
      %p111 = por %p109, %p110
      %s113 = sadd.s32 %s112, 1
      %p116 = scmp.eq.s32.totalorder %s38, 1
      %p117 = scmp.ne.s32.totalorder %s112, %s114
      %p118 = scmp.eq.s32.totalorder %s38, 0
      %p119 = por %p117, %p118
      %p120 = scmp.ne.s32.totalorder %s112, %s114
      %p121 = scmp.eq.s32.totalorder %s43, 1
      %p122 = por %p120, %p121
      %p123 = scmp.ne.s32.totalorder %s114, %s115
      %p124 = scmp.eq.s32.totalorder %s43, 0
      %p125 = por %p123, %p124
      %p126 = scmp.ne.s32.totalorder %s114, %s115
      %p127 = scmp.eq.s32.totalorder %s44, 1
      %p128 = por %p126, %p127
      %p130 = scmp.ne.s32.totalorder %s115, %s129
      %p131 = scmp.eq.s32.totalorder %s44, 0
      %p132 = por %p130, %p131
      %s134 = sadd.s32 %s133, 1
      %p137 = scmp.eq.s32.totalorder %s38, 1
      %p138 = scmp.ne.s32.totalorder %s133, %s135
      %p139 = scmp.eq.s32.totalorder %s38, 0
      %p140 = por %p138, %p139
      %p141 = scmp.ne.s32.totalorder %s133, %s135
      %p142 = scmp.eq.s32.totalorder %s43, 1
      %p143 = por %p141, %p142
      %p144 = scmp.ne.s32.totalorder %s135, %s136
      %p145 = scmp.eq.s32.totalorder %s43, 0
      %p146 = por %p144, %p145
      %p147 = scmp.ne.s32.totalorder %s135, %s136
      %p148 = scmp.eq.s32.totalorder %s44, 1
      %p149 = por %p147, %p148
      %p151 = scmp.ne.s32.totalorder %s136, %s150
      %p152 = scmp.eq.s32.totalorder %s44, 0
      %p153 = por %p151, %p152
      %s155 = sadd.s32 %s154, 1
      %p158 = scmp.eq.s32.totalorder %s38, 1
      %p159 = scmp.ne.s32.totalorder %s154, %s156
      %p160 = scmp.eq.s32.totalorder %s38, 0
      %p161 = por %p159, %p160
      %p162 = scmp.ne.s32.totalorder %s154, %s156
      %p163 = scmp.eq.s32.totalorder %s43, 1
      %p164 = por %p162, %p163
      %p165 = scmp.ne.s32.totalorder %s156, %s157
      %p166 = scmp.eq.s32.totalorder %s43, 0
      %p167 = por %p165, %p166
      %p168 = scmp.ne.s32.totalorder %s156, %s157
      %p169 = scmp.eq.s32.totalorder %s44, 1
      %p170 = por %p168, %p169
      %p172 = scmp.ne.s32.totalorder %s157, %s171
      %p173 = scmp.eq.s32.totalorder %s44, 0
      %p174 = por %p172, %p173
      %s176 = sadd.s32 %s175, 1
      %p179 = scmp.eq.s32.totalorder %s38, 1
      %p180 = scmp.ne.s32.totalorder %s175, %s177
      %p181 = scmp.eq.s32.totalorder %s38, 0
      %p182 = por %p180, %p181
      %p183 = scmp.ne.s32.totalorder %s175, %s177
      %p184 = scmp.eq.s32.totalorder %s43, 1
      %p185 = por %p183, %p184
      %p186 = scmp.ne.s32.totalorder %s177, %s178
      %p187 = scmp.eq.s32.totalorder %s43, 0
      %p188 = por %p186, %p187
      %p189 = scmp.ne.s32.totalorder %s177, %s178
      %p190 = scmp.eq.s32.totalorder %s44, 1
      %p191 = por %p189, %p190
      %p193 = scmp.ne.s32.totalorder %s178, %s192
      %p194 = scmp.eq.s32.totalorder %s44, 0
      %p195 = por %p193, %p194
      %s197 = sadd.s32 %s196, 1
      %p200 = scmp.eq.s32.totalorder %s38, 1
      %p201 = scmp.ne.s32.totalorder %s196, %s198
      %p202 = scmp.eq.s32.totalorder %s38, 0
      %p203 = por %p201, %p202
      %p204 = scmp.ne.s32.totalorder %s196, %s198
      %p205 = scmp.eq.s32.totalorder %s43, 1
      %p206 = por %p204, %p205
      %p207 = scmp.ne.s32.totalorder %s198, %s199
      %p208 = scmp.eq.s32.totalorder %s43, 0
      %p209 = por %p207, %p208
      %p210 = scmp.ne.s32.totalorder %s198, %s199
      %p211 = scmp.eq.s32.totalorder %s44, 1
      %p212 = por %p210, %p211
      %p214 = scmp.ne.s32.totalorder %s199, %s213
      %p215 = scmp.eq.s32.totalorder %s44, 0
      %p216 = por %p214, %p215
      %s218 = sadd.s32 %s217, 1
      %p221 = scmp.eq.s32.totalorder %s38, 1
      %p222 = scmp.ne.s32.totalorder %s217, %s219
      %p223 = scmp.eq.s32.totalorder %s38, 0
      %p224 = por %p222, %p223
      %p225 = scmp.ne.s32.totalorder %s217, %s219
      %p226 = scmp.eq.s32.totalorder %s43, 1
      %p227 = por %p225, %p226
      %p228 = scmp.ne.s32.totalorder %s219, %s220
      %p229 = scmp.eq.s32.totalorder %s43, 0
      %p230 = por %p228, %p229
      %p231 = scmp.ne.s32.totalorder %s219, %s220
      %p232 = scmp.eq.s32.totalorder %s44, 1
      %p233 = por %p231, %p232
      %p235 = scmp.ne.s32.totalorder %s220, %s234
      %p236 = scmp.eq.s32.totalorder %s44, 0
      %p237 = por %p235, %p236
      %s239 = sadd.s32 %s238, 1
      %p242 = scmp.eq.s32.totalorder %s38, 1
      %p243 = scmp.ne.s32.totalorder %s238, %s240
      %p244 = scmp.eq.s32.totalorder %s38, 0
      %p245 = por %p243, %p244
      %p246 = scmp.ne.s32.totalorder %s238, %s240
      %p247 = scmp.eq.s32.totalorder %s43, 1
      %p248 = por %p246, %p247
      %p249 = scmp.ne.s32.totalorder %s240, %s241
      %p250 = scmp.eq.s32.totalorder %s43, 0
      %p251 = por %p249, %p250
      %p252 = scmp.ne.s32.totalorder %s240, %s241
      %p253 = scmp.eq.s32.totalorder %s44, 1
      %p254 = por %p252, %p253
      %p256 = scmp.ne.s32.totalorder %s241, %s255
      %p257 = scmp.eq.s32.totalorder %s44, 0
      %p258 = por %p256, %p257
      %s260 = sadd.s32 %s259, 1
      %p263 = scmp.eq.s32.totalorder %s38, 1
      %p264 = scmp.ne.s32.totalorder %s259, %s261
      %p265 = scmp.eq.s32.totalorder %s38, 0
      %p266 = por %p264, %p265
      %p267 = scmp.ne.s32.totalorder %s259, %s261
      %p268 = scmp.eq.s32.totalorder %s43, 1
      %p269 = por %p267, %p268
      %p270 = scmp.ne.s32.totalorder %s261, %s262
      %p271 = scmp.eq.s32.totalorder %s43, 0
      %p272 = por %p270, %p271
      %p273 = scmp.ne.s32.totalorder %s261, %s262
      %p274 = scmp.eq.s32.totalorder %s44, 1
      %p275 = por %p273, %p274
      %p277 = scmp.ne.s32.totalorder %s262, %s276
      %p278 = scmp.eq.s32.totalorder %s44, 0
      %p279 = por %p277, %p278
      %s281 = sadd.s32 %s280, 1
      %p284 = scmp.eq.s32.totalorder %s38, 1
      %p285 = scmp.ne.s32.totalorder %s280, %s282
      %p286 = scmp.eq.s32.totalorder %s38, 0
      %p287 = por %p285, %p286
      %p288 = scmp.ne.s32.totalorder %s280, %s282
      %p289 = scmp.eq.s32.totalorder %s43, 1
      %p290 = por %p288, %p289
      %p291 = scmp.ne.s32.totalorder %s282, %s283
      %p292 = scmp.eq.s32.totalorder %s43, 0
      %p293 = por %p291, %p292
      %p294 = scmp.ne.s32.totalorder %s282, %s283
      %p295 = scmp.eq.s32.totalorder %s44, 1
      %p296 = por %p294, %p295
      %p298 = scmp.ne.s32.totalorder %s283, %s297
      %p299 = scmp.eq.s32.totalorder %s44, 0
      %p300 = por %p298, %p299
      %s302 = sadd.s32 %s301, 1
      %p305 = scmp.eq.s32.totalorder %s38, 1
      %p306 = scmp.ne.s32.totalorder %s301, %s303
      %p307 = scmp.eq.s32.totalorder %s38, 0
      %p308 = por %p306, %p307
      %p309 = scmp.ne.s32.totalorder %s301, %s303
      %p310 = scmp.eq.s32.totalorder %s43, 1
      %p311 = por %p309, %p310
      %p312 = scmp.ne.s32.totalorder %s303, %s304
      %p313 = scmp.eq.s32.totalorder %s43, 0
      %p314 = por %p312, %p313
      %p315 = scmp.ne.s32.totalorder %s303, %s304
      %p316 = scmp.eq.s32.totalorder %s44, 1
      %p317 = por %p315, %p316
      %p319 = scmp.ne.s32.totalorder %s304, %s318
      %p320 = scmp.eq.s32.totalorder %s44, 0
      %p321 = por %p319, %p320
      %s323 = sadd.s32 %s322, 1
      %p326 = scmp.eq.s32.totalorder %s38, 1
      %p327 = scmp.ne.s32.totalorder %s322, %s324
      %p328 = scmp.eq.s32.totalorder %s38, 0
      %p329 = por %p327, %p328
      %p330 = scmp.ne.s32.totalorder %s322, %s324
      %p331 = scmp.eq.s32.totalorder %s43, 1
      %p332 = por %p330, %p331
      %p333 = scmp.ne.s32.totalorder %s324, %s325
      %p334 = scmp.eq.s32.totalorder %s43, 0
      %p335 = por %p333, %p334
      %p336 = scmp.ne.s32.totalorder %s324, %s325
      %p337 = scmp.eq.s32.totalorder %s44, 1
      %p338 = por %p336, %p337
      %p340 = scmp.ne.s32.totalorder %s325, %s339
      %p341 = scmp.eq.s32.totalorder %s44, 0
      %p342 = por %p340, %p341
      %s344 = sadd.s32 %s343, 1
      %p347 = scmp.eq.s32.totalorder %s38, 1
      %p348 = scmp.ne.s32.totalorder %s343, %s345
      %p349 = scmp.eq.s32.totalorder %s38, 0
      %p350 = por %p348, %p349
      %p351 = scmp.ne.s32.totalorder %s343, %s345
      %p352 = scmp.eq.s32.totalorder %s43, 1
      %p353 = por %p351, %p352
      %p354 = scmp.ne.s32.totalorder %s345, %s346
      %p355 = scmp.eq.s32.totalorder %s43, 0
      %p356 = por %p354, %p355
      %p357 = scmp.ne.s32.totalorder %s345, %s346
      %p358 = scmp.eq.s32.totalorder %s44, 1
      %p359 = por %p357, %p358
      %p361 = scmp.ne.s32.totalorder %s346, %s360
      %p362 = scmp.eq.s32.totalorder %s44, 0
      %p363 = por %p361, %p362
      %s365 = sadd.s32 %s364, 1
      %p368 = scmp.eq.s32.totalorder %s38, 1
      %p369 = scmp.ne.s32.totalorder %s364, %s366
      %p370 = scmp.eq.s32.totalorder %s38, 0
      %p371 = por %p369, %p370
      %p372 = scmp.ne.s32.totalorder %s364, %s366
      %p373 = scmp.eq.s32.totalorder %s43, 1
      %p374 = por %p372, %p373
      %p375 = scmp.ne.s32.totalorder %s366, %s367
      %p376 = scmp.eq.s32.totalorder %s43, 0
      %p377 = por %p375, %p376
      %p378 = scmp.ne.s32.totalorder %s366, %s367
      %p379 = scmp.eq.s32.totalorder %s44, 1
      %p380 = por %p378, %p379
      %p382 = scmp.ne.s32.totalorder %s367, %s381
      %p383 = scmp.eq.s32.totalorder %s44, 0
      %p384 = por %p382, %p383
      %s386 = sadd.s32 %s385, 1
      %p389 = scmp.eq.s32.totalorder %s38, 1
      %p390 = scmp.ne.s32.totalorder %s385, %s387
      %p391 = scmp.eq.s32.totalorder %s38, 0
      %p392 = por %p390, %p391
      %p393 = scmp.ne.s32.totalorder %s385, %s387
      %p394 = scmp.eq.s32.totalorder %s43, 1
      %p395 = por %p393, %p394
      %p396 = scmp.ne.s32.totalorder %s387, %s388
      %p397 = scmp.eq.s32.totalorder %s43, 0
      %p398 = por %p396, %p397
      %p399 = scmp.ne.s32.totalorder %s387, %s388
      %p400 = scmp.eq.s32.totalorder %s44, 1
      %p401 = por %p399, %p400
      %p403 = scmp.ne.s32.totalorder %s388, %s402
      %p404 = scmp.eq.s32.totalorder %s44, 0
      %p405 = por %p403, %p404
      %s406 = ssub.s32 %s45, %s57
      %s407 = ssub.s32 %s46, %s53
      %s408 = sor.u32 %s406, %s407
      %p409 = scmp.eq.s32.totalorder %s408, 0
      %s411 = sadd.s32 %s410, 1
      %s412 = scalar_select %p409, %s410, %s411
      %p415 = pneg %p409
      %p416 = scmp.eq.s32.totalorder %s38, 1
      %p417 = por %p415, %p416
      %p418 = scmp.ne.s32.totalorder %s410, %s413
      %p419 = scmp.eq.s32.totalorder %s38, 0
      %p420 = por %p418, %p419
      %p421 = scmp.ne.s32.totalorder %s410, %s413
      %p422 = scmp.eq.s32.totalorder %s43, 1
      %p423 = por %p421, %p422
      %p424 = scmp.ne.s32.totalorder %s413, %s414
      %p425 = scmp.eq.s32.totalorder %s43, 0
      %p426 = por %p424, %p425
      %p427 = scmp.ne.s32.totalorder %s413, %s414
      %p428 = scmp.eq.s32.totalorder %s44, 1
      %p429 = por %p427, %p428
      %p431 = scmp.ne.s32.totalorder %s414, %s430
      %p432 = scmp.eq.s32.totalorder %s44, 0
      %p433 = por %p431, %p432
      %p434 = scmp.le.s32.totalorder 1, %s38
      %p435 = scmp.lt.s32.totalorder %s38, 3
      %p436 = pnand %p434, %p435
      %p437 = pneg %p436
      // Predicated region
      $region9: #{tpu_custom_call.1} parent=5 // pred_check
        _
      $region10: #{tpu_custom_call.1} parent=5 // pred_check_branch
        %439 = sbr.rel (%p436) target = $region12
      $region11: #{tpu_custom_call.1} parent=5 // pred_region
        %s440 = ssub.s32 %s38, 1
        // Predicated region
        $region13: #{tpu_custom_call.1} parent=11 // pred_check
          %p441 = pneg %p125
        $region14: #{tpu_custom_call.1} parent=11 // pred_check_branch
          %443 = sbr.rel (%p441) target = $region16
        $region15: #{tpu_custom_call.1} parent=11 // pred_region
          %s445 = ssub.s32 16, 16
          %446 = vsyncadd [#allocation10], %s445
          %s448 = sshll.u32 [#allocation11], 4
          %s449 = int_to_ptr.vmem [resolvable:$true] %s448
          %451 = dma.hbm_to_vmem [thread:$0]  %s2, 16, %s449, [#allocation10]
        $region16: #{tpu_custom_call.1} parent=11 // pred_fallthru
          _
        // Predicated region
        $region17: #{tpu_custom_call.1} parent=11 // pred_check
          %p452 = pneg %p146
        $region18: #{tpu_custom_call.1} parent=11 // pred_check_branch
          %454 = sbr.rel (%p452) target = $region20
        $region19: #{tpu_custom_call.1} parent=11 // pred_region
          %s456 = ssub.s32 16, 16
          %457 = vsyncadd [#allocation13], %s456
          %s459 = sshll.u32 [#allocation12], 4
          %s460 = int_to_ptr.vmem [resolvable:$true] %s459
          %462 = dma.hbm_to_vmem [thread:$0]  %s3, 16, %s460, [#allocation13]
        $region20: #{tpu_custom_call.1} parent=11 // pred_fallthru
          _
        // Predicated region
        $region21: #{tpu_custom_call.1} parent=11 // pred_check
          %p463 = pneg %p167
        $region22: #{tpu_custom_call.1} parent=11 // pred_check_branch
          %465 = sbr.rel (%p463) target = $region24
        $region23: #{tpu_custom_call.1} parent=11 // pred_region
          %s467 = ssub.s32 256, 256
          %468 = vsyncadd [#allocation13], %s467
          %s469 = sshll.u32 [#allocation14], 4
          %s470 = int_to_ptr.vmem [resolvable:$true] %s469
          %475 = dma.hbm_to_vmem [thread:$0]  %s4, 256, %s470, [#allocation13], 64, 64, 4
        $region24: #{tpu_custom_call.1} parent=11 // pred_fallthru
          _
        // Predicated region
        $region25: #{tpu_custom_call.1} parent=11 // pred_check
          %p476 = pneg %p188
        $region26: #{tpu_custom_call.1} parent=11 // pred_check_branch
          %478 = sbr.rel (%p476) target = $region28
        $region27: #{tpu_custom_call.1} parent=11 // pred_region
          %s480 = ssub.s32 16, 16
          %481 = vsyncadd [#allocation16], %s480
          %s483 = sshll.u32 [#allocation15], 4
          %s484 = int_to_ptr.vmem [resolvable:$true] %s483
          %486 = dma.hbm_to_vmem [thread:$0]  %s5, 16, %s484, [#allocation16]
        $region28: #{tpu_custom_call.1} parent=11 // pred_fallthru
          _
        // Predicated region
        $region29: #{tpu_custom_call.1} parent=11 // pred_check
          %p487 = pneg %p209
        $region30: #{tpu_custom_call.1} parent=11 // pred_check_branch
          %489 = sbr.rel (%p487) target = $region32
        $region31: #{tpu_custom_call.1} parent=11 // pred_region
          %s491 = ssub.s32 256, 256
          %492 = vsyncadd [#allocation16], %s491
          %s493 = sshll.u32 [#allocation17], 4
          %s494 = int_to_ptr.vmem [resolvable:$true] %s493
          %499 = dma.hbm_to_vmem [thread:$0]  %s6, 256, %s494, [#allocation16], 64, 64, 4
        $region32: #{tpu_custom_call.1} parent=11 // pred_fallthru
          _
        // Predicated region
        $region33: #{tpu_custom_call.1} parent=11 // pred_check
          %p500 = pneg %p230
        $region34: #{tpu_custom_call.1} parent=11 // pred_check_branch
          %502 = sbr.rel (%p500) target = $region36
        $region35: #{tpu_custom_call.1} parent=11 // pred_region
          %s504 = ssub.s32 16, 16
          %505 = vsyncadd [#allocation19], %s504
          %s507 = sshll.u32 [#allocation18], 4
          %s508 = int_to_ptr.vmem [resolvable:$true] %s507
          %510 = dma.hbm_to_vmem [thread:$0]  %s7, 16, %s508, [#allocation19]
        $region36: #{tpu_custom_call.1} parent=11 // pred_fallthru
          _
        // Predicated region
        $region37: #{tpu_custom_call.1} parent=11 // pred_check
          %p511 = pneg %p251
        $region38: #{tpu_custom_call.1} parent=11 // pred_check_branch
          %513 = sbr.rel (%p511) target = $region40
        $region39: #{tpu_custom_call.1} parent=11 // pred_region
          %s515 = ssub.s32 16, 16
          %516 = vsyncadd [#allocation19], %s515
          %s518 = sshll.u32 [#allocation20], 4
          %s519 = int_to_ptr.vmem [resolvable:$true] %s518
          %521 = dma.hbm_to_vmem [thread:$0]  %s8, 16, %s519, [#allocation19]
        $region40: #{tpu_custom_call.1} parent=11 // pred_fallthru
          _
        // Predicated region
        $region41: #{tpu_custom_call.1} parent=11 // pred_check
          %p522 = pneg %p272
        $region42: #{tpu_custom_call.1} parent=11 // pred_check_branch
          %524 = sbr.rel (%p522) target = $region44
        $region43: #{tpu_custom_call.1} parent=11 // pred_region
          %s526 = ssub.s32 16, 16
          %527 = vsyncadd [#allocation22], %s526
          %s529 = sshll.u32 [#allocation21], 4
          %s530 = int_to_ptr.vmem [resolvable:$true] %s529
          %532 = dma.hbm_to_vmem [thread:$0]  %s9, 16, %s530, [#allocation22]
        $region44: #{tpu_custom_call.1} parent=11 // pred_fallthru
          _
        // Predicated region
        $region45: #{tpu_custom_call.1} parent=11 // pred_check
          %p533 = pneg %p293
        $region46: #{tpu_custom_call.1} parent=11 // pred_check_branch
          %535 = sbr.rel (%p533) target = $region48
        $region47: #{tpu_custom_call.1} parent=11 // pred_region
          %s537 = ssub.s32 256, 256
          %538 = vsyncadd [#allocation22], %s537
          %s539 = sshll.u32 [#allocation23], 4
          %s540 = int_to_ptr.vmem [resolvable:$true] %s539
          %545 = dma.hbm_to_vmem [thread:$0]  %s10, 256, %s540, [#allocation22], 64, 64, 4
        $region48: #{tpu_custom_call.1} parent=11 // pred_fallthru
          _
        // Predicated region
        $region49: #{tpu_custom_call.1} parent=11 // pred_check
          %p546 = pneg %p314
        $region50: #{tpu_custom_call.1} parent=11 // pred_check_branch
          %548 = sbr.rel (%p546) target = $region52
        $region51: #{tpu_custom_call.1} parent=11 // pred_region
          %s550 = ssub.s32 16, 16
          %551 = vsyncadd [#allocation25], %s550
          %s553 = sshll.u32 [#allocation24], 4
          %s554 = int_to_ptr.vmem [resolvable:$true] %s553
          %556 = dma.hbm_to_vmem [thread:$0]  %s11, 16, %s554, [#allocation25]
        $region52: #{tpu_custom_call.1} parent=11 // pred_fallthru
          _
        // Predicated region
        $region53: #{tpu_custom_call.1} parent=11 // pred_check
          %p557 = pneg %p335
        $region54: #{tpu_custom_call.1} parent=11 // pred_check_branch
          %559 = sbr.rel (%p557) target = $region56
        $region55: #{tpu_custom_call.1} parent=11 // pred_region
          %s561 = ssub.s32 1024, 1024
          %562 = vsyncadd [#allocation25], %s561
          %s563 = sshll.u32 [#allocation26], 4
          %s564 = int_to_ptr.vmem [resolvable:$true] %s563
          %569 = dma.hbm_to_vmem [thread:$0]  %s12, 1024, %s564, [#allocation25], 64, 64, 4
        $region56: #{tpu_custom_call.1} parent=11 // pred_fallthru
          _
        // Predicated region
        $region57: #{tpu_custom_call.1} parent=11 // pred_check
          %p570 = pneg %p356
        $region58: #{tpu_custom_call.1} parent=11 // pred_check_branch
          %572 = sbr.rel (%p570) target = $region60
        $region59: #{tpu_custom_call.1} parent=11 // pred_region
          %s574 = ssub.s32 16, 16
          %575 = vsyncadd [#allocation28], %s574
          %s577 = sshll.u32 [#allocation27], 4
          %s578 = int_to_ptr.vmem [resolvable:$true] %s577
          %580 = dma.hbm_to_vmem [thread:$0]  %s13, 16, %s578, [#allocation28]
        $region60: #{tpu_custom_call.1} parent=11 // pred_fallthru
          _
        // Predicated region
        $region61: #{tpu_custom_call.1} parent=11 // pred_check
          %p581 = pneg %p377
        $region62: #{tpu_custom_call.1} parent=11 // pred_check_branch
          %583 = sbr.rel (%p581) target = $region64
        $region63: #{tpu_custom_call.1} parent=11 // pred_region
          %s585 = ssub.s32 16, 16
          %586 = vsyncadd [#allocation28], %s585
          %s588 = sshll.u32 [#allocation29], 4
          %s589 = int_to_ptr.vmem [resolvable:$true] %s588
          %591 = dma.hbm_to_vmem [thread:$0]  %s14, 16, %s589, [#allocation28]
        $region64: #{tpu_custom_call.1} parent=11 // pred_fallthru
          _
        // Predicated region
        $region65: #{tpu_custom_call.1} parent=11 // pred_check
          %p592 = pneg %p398
        $region66: #{tpu_custom_call.1} parent=11 // pred_check_branch
          %594 = sbr.rel (%p592) target = $region68
        $region67: #{tpu_custom_call.1} parent=11 // pred_region
          %s596 = ssub.s32 16, 16
          %597 = vsyncadd [#allocation31], %s596
          %s599 = sshll.u32 [#allocation30], 4
          %s600 = int_to_ptr.vmem [resolvable:$true] %s599
          %602 = dma.hbm_to_vmem [thread:$0]  %s15, 16, %s600, [#allocation31]
        $region68: #{tpu_custom_call.1} parent=11 // pred_fallthru
          _
      $region12: #{tpu_custom_call.1} parent=5 // pred_fallthru
        _
      %p603 = scmp.lt.s32.totalorder %s38, 2
      // Predicated region
      $region69: #{tpu_custom_call.1} parent=5 // pred_check
        %p604 = pneg %p603
      $region70: #{tpu_custom_call.1} parent=5 // pred_check_branch
        %606 = sbr.rel (%p604) target = $region72
      $region71: #{tpu_custom_call.1} parent=5 // pred_region
        // Predicated region
        $region73: #{tpu_custom_call.1} parent=71 // pred_check
          %p607 = pneg %p70
        $region74: #{tpu_custom_call.1} parent=71 // pred_check_branch
          %609 = sbr.rel (%p607) target = $region76
        $region75: #{tpu_custom_call.1} parent=71 // pred_region
          %s610 = sand.u32 %s60, 1
          %s611 = scalar_lea.sflag [#allocation7], %s610
          %s612 = sand.u32 %s60, 1
          %s613 = smul.addr %s612, 8
          %s614 = scalar_lea.vmem [#allocation6], %s613
          %s616 = ssub.s32 128, 128
          %617 = vsyncadd %s611, %s616
          %s618 = smul.addr %s45, 128
          %s619 = scalar_lea.hbm %s0, %s618
          %s621 = sshll.u32 %s614, 4
          %s622 = int_to_ptr.vmem [resolvable:$true] %s621
          %624 = dma.hbm_to_vmem [thread:$0]  %s619, 128, %s622, %s611
        $region76: #{tpu_custom_call.1} parent=71 // pred_fallthru
          _
        // Predicated region
        $region77: #{tpu_custom_call.1} parent=71 // pred_check
          %p625 = pneg %p98
        $region78: #{tpu_custom_call.1} parent=71 // pred_check_branch
          %627 = sbr.rel (%p625) target = $region80
        $region79: #{tpu_custom_call.1} parent=71 // pred_region
          %s628 = sand.u32 %s38, 1
          %s629 = scalar_lea.sflag [#allocation10], %s628
          %s630 = sand.u32 %s88, 1
          %s631 = smul.addr %s630, 8
          %s632 = scalar_lea.vmem [#allocation9], %s631
          %s634 = ssub.s32 128, 128
          %635 = vsyncadd %s629, %s634
          %s636 = sadd.s32 %s46, %s45
          %s637 = smul.addr %s636, 128
          %s638 = scalar_lea.hbm %s1, %s637
          %s640 = sshll.u32 %s632, 4
          %s641 = int_to_ptr.vmem [resolvable:$true] %s640
          %643 = dma.hbm_to_vmem [thread:$0]  %s638, 128, %s641, %s629
        $region80: #{tpu_custom_call.1} parent=71 // pred_fallthru
          _
      $region72: #{tpu_custom_call.1} parent=5 // pred_fallthru
        _
      %p644 = scmp.le.s32.totalorder 1, %s38
      %p645 = scmp.lt.s32.totalorder %s38, 3
      %p646 = pnand %p644, %p645
      %p647 = pneg %p646
      // Predicated region
      $region81: #{tpu_custom_call.1} parent=5 // pred_check
        _
      $region82: #{tpu_custom_call.1} parent=5 // pred_check_branch
        %649 = sbr.rel (%p646) target = $region84
      $region83: #{tpu_custom_call.1} parent=5 // pred_region
        %s650 = ssub.s32 %s38, 1
        %s651 = sand.u32 %s63, 1
        %s652 = scalar_lea.sflag [#allocation7], %s651
        %s653 = sand.u32 %s63, 1
        %s654 = smul.addr %s653, 8
        %s655 = scalar_lea.vmem [#allocation6], %s654
        // Predicated region
        $region85: #{tpu_custom_call.1} parent=83 // pred_check
          %p656 = pneg %p76
        $region86: #{tpu_custom_call.1} parent=83 // pred_check_branch
          %658 = sbr.rel (%p656) target = $region88
        $region87: #{tpu_custom_call.1} parent=83 // pred_region
          %659 = dma.done %s652, 128
        $region88: #{tpu_custom_call.1} parent=83 // pred_fallthru
          _
        %s660 = sand.u32 %s43, 1
        %s661 = scalar_lea.sflag [#allocation10], %s660
        %s662 = sand.u32 %s91, 1
        %s663 = smul.addr %s662, 8
        %s664 = scalar_lea.vmem [#allocation9], %s663
        // Predicated region
        $region89: #{tpu_custom_call.1} parent=83 // pred_check
          %p665 = pneg %p104
        $region90: #{tpu_custom_call.1} parent=83 // pred_check_branch
          %667 = sbr.rel (%p665) target = $region92
        $region91: #{tpu_custom_call.1} parent=83 // pred_region
          %668 = dma.done %s661, 128
        $region92: #{tpu_custom_call.1} parent=83 // pred_fallthru
          _
        // Predicated region
        $region93: #{tpu_custom_call.1} parent=83 // pred_check
          %p669 = pneg %p125
        $region94: #{tpu_custom_call.1} parent=83 // pred_check_branch
          %671 = sbr.rel (%p669) target = $region96
        $region95: #{tpu_custom_call.1} parent=83 // pred_region
          %672 = dma.done [#allocation10], 16
        $region96: #{tpu_custom_call.1} parent=83 // pred_fallthru
          _
        // Predicated region
        $region97: #{tpu_custom_call.1} parent=83 // pred_check
          %p673 = pneg %p146
        $region98: #{tpu_custom_call.1} parent=83 // pred_check_branch
          %675 = sbr.rel (%p673) target = $region100
        $region99: #{tpu_custom_call.1} parent=83 // pred_region
          %676 = dma.done [#allocation13], 16
        $region100: #{tpu_custom_call.1} parent=83 // pred_fallthru
          _
        // Predicated region
        $region101: #{tpu_custom_call.1} parent=83 // pred_check
          %p677 = pneg %p167
        $region102: #{tpu_custom_call.1} parent=83 // pred_check_branch
          %679 = sbr.rel (%p677) target = $region104
        $region103: #{tpu_custom_call.1} parent=83 // pred_region
          %680 = dma.done [#allocation13], 256
        $region104: #{tpu_custom_call.1} parent=83 // pred_fallthru
          _
        // Predicated region
        $region105: #{tpu_custom_call.1} parent=83 // pred_check
          %p681 = pneg %p188
        $region106: #{tpu_custom_call.1} parent=83 // pred_check_branch
          %683 = sbr.rel (%p681) target = $region108
        $region107: #{tpu_custom_call.1} parent=83 // pred_region
          %684 = dma.done [#allocation16], 16
        $region108: #{tpu_custom_call.1} parent=83 // pred_fallthru
          _
        // Predicated region
        $region109: #{tpu_custom_call.1} parent=83 // pred_check
          %p685 = pneg %p209
        $region110: #{tpu_custom_call.1} parent=83 // pred_check_branch
          %687 = sbr.rel (%p685) target = $region112
        $region111: #{tpu_custom_call.1} parent=83 // pred_region
          %688 = dma.done [#allocation16], 256
        $region112: #{tpu_custom_call.1} parent=83 // pred_fallthru
          _
        // Predicated region
        $region113: #{tpu_custom_call.1} parent=83 // pred_check
          %p689 = pneg %p230
        $region114: #{tpu_custom_call.1} parent=83 // pred_check_branch
          %691 = sbr.rel (%p689) target = $region116
        $region115: #{tpu_custom_call.1} parent=83 // pred_region
          %692 = dma.done [#allocation19], 16
        $region116: #{tpu_custom_call.1} parent=83 // pred_fallthru
          _
        // Predicated region
        $region117: #{tpu_custom_call.1} parent=83 // pred_check
          %p693 = pneg %p251
        $region118: #{tpu_custom_call.1} parent=83 // pred_check_branch
          %695 = sbr.rel (%p693) target = $region120
        $region119: #{tpu_custom_call.1} parent=83 // pred_region
          %696 = dma.done [#allocation19], 16
        $region120: #{tpu_custom_call.1} parent=83 // pred_fallthru
          _
        // Predicated region
        $region121: #{tpu_custom_call.1} parent=83 // pred_check
          %p697 = pneg %p272
        $region122: #{tpu_custom_call.1} parent=83 // pred_check_branch
          %699 = sbr.rel (%p697) target = $region124
        $region123: #{tpu_custom_call.1} parent=83 // pred_region
          %700 = dma.done [#allocation22], 16
        $region124: #{tpu_custom_call.1} parent=83 // pred_fallthru
          _
        // Predicated region
        $region125: #{tpu_custom_call.1} parent=83 // pred_check
          %p701 = pneg %p293
        $region126: #{tpu_custom_call.1} parent=83 // pred_check_branch
          %703 = sbr.rel (%p701) target = $region128
        $region127: #{tpu_custom_call.1} parent=83 // pred_region
          %704 = dma.done [#allocation22], 256
        $region128: #{tpu_custom_call.1} parent=83 // pred_fallthru
          _
        // Predicated region
        $region129: #{tpu_custom_call.1} parent=83 // pred_check
          %p705 = pneg %p314
        $region130: #{tpu_custom_call.1} parent=83 // pred_check_branch
          %707 = sbr.rel (%p705) target = $region132
        $region131: #{tpu_custom_call.1} parent=83 // pred_region
          %708 = dma.done [#allocation25], 16
        $region132: #{tpu_custom_call.1} parent=83 // pred_fallthru
          _
        // Predicated region
        $region133: #{tpu_custom_call.1} parent=83 // pred_check
          %p709 = pneg %p335
        $region134: #{tpu_custom_call.1} parent=83 // pred_check_branch
          %711 = sbr.rel (%p709) target = $region136
        $region135: #{tpu_custom_call.1} parent=83 // pred_region
          %712 = dma.done [#allocation25], 1024
        $region136: #{tpu_custom_call.1} parent=83 // pred_fallthru
          _
        // Predicated region
        $region137: #{tpu_custom_call.1} parent=83 // pred_check
          %p713 = pneg %p356
        $region138: #{tpu_custom_call.1} parent=83 // pred_check_branch
          %715 = sbr.rel (%p713) target = $region140
        $region139: #{tpu_custom_call.1} parent=83 // pred_region
          %716 = dma.done [#allocation28], 16
        $region140: #{tpu_custom_call.1} parent=83 // pred_fallthru
          _
        // Predicated region
        $region141: #{tpu_custom_call.1} parent=83 // pred_check
          %p717 = pneg %p377
        $region142: #{tpu_custom_call.1} parent=83 // pred_check_branch
          %719 = sbr.rel (%p717) target = $region144
        $region143: #{tpu_custom_call.1} parent=83 // pred_region
          %720 = dma.done [#allocation28], 16
        $region144: #{tpu_custom_call.1} parent=83 // pred_fallthru
          _
        // Predicated region
        $region145: #{tpu_custom_call.1} parent=83 // pred_check
          %p721 = pneg %p398
        $region146: #{tpu_custom_call.1} parent=83 // pred_check_branch
          %723 = sbr.rel (%p721) target = $region148
        $region147: #{tpu_custom_call.1} parent=83 // pred_region
          %724 = dma.done [#allocation31], 16
        $region148: #{tpu_custom_call.1} parent=83 // pred_fallthru
          _
        %s725 = sand.u32 %s63, 1
        %s726 = scalar_lea.sflag [#allocation7], %s725
        %s727 = sand.u32 %s63, 1
        %s728 = smul.addr %s727, 8
        %s729 = scalar_lea.vmem [#allocation6], %s728
        %p730 = pneg %p76
        %p731 = pneg %p73
        %s732 = sand.u32 %s43, 1
        %s733 = scalar_lea.sflag [#allocation10], %s732
        %s734 = sand.u32 %s91, 1
        %s735 = smul.addr %s734, 8
        %s736 = scalar_lea.vmem [#allocation9], %s735
        %p737 = pneg %p104
        %p738 = pneg %p101
        %p739 = pneg %p125
        %p740 = pneg %p122
        %p741 = pneg %p146
        %p742 = pneg %p143
        %p743 = pneg %p167
        %p744 = pneg %p164
        %p745 = pneg %p188
        %p746 = pneg %p185
        %p747 = pneg %p209
        %p748 = pneg %p206
        %p749 = pneg %p230
        %p750 = pneg %p227
        %p751 = pneg %p251
        %p752 = pneg %p248
        %p753 = pneg %p272
        %p754 = pneg %p269
        %p755 = pneg %p293
        %p756 = pneg %p290
        %p757 = pneg %p314
        %p758 = pneg %p311
        %p759 = pneg %p335
        %p760 = pneg %p332
        %p761 = pneg %p356
        %p762 = pneg %p353
        %p763 = pneg %p377
        %p764 = pneg %p374
        %p765 = pneg %p398
        %p766 = pneg %p395
        %p767 = pneg %p426
        %p768 = pneg %p423
        %s769 = sand.u32 %s413, 1
        %s770 = scalar_lea.sflag [#allocation8], %s769
        %s771 = sand.u32 %s413, 1
        %s772 = smul.addr %s771, 8
        %s773 = scalar_lea.vmem [#allocation32], %s772
        %p775 = scmp.eq.s32.totalorder %s48, 0
        // Predicated region
        $region149: #{tpu_custom_call.1} parent=83 // pred_check
          %p776 = pneg %p775
        $region150: #{tpu_custom_call.1} parent=83 // pred_check_branch
          %778 = sbr.rel (%p776) target = $region152
        $region151: #{tpu_custom_call.1} parent=83 // pred_region
          %v779 = vld [vmem:[%s655] sm:$0xff]
          %v780 = vld [vmem:[#allocation11] sm:$0x1]
          %v781 = vld [vmem:[#allocation12] sm:$0x1]
          %vm782 = vcmask 261120
          %v783 = vsel %vm782, %v779, 0.0
          %784 = vadd.xlane.f32.xlu0 %v783
          %v785 = vpop.xlane.xlu0 %784
          %v786 = vrcp.pop 32.0
          %v787 = vmul.f32 %v785, %v786
          %v788 = vsub.f32 %v779, %v787
          %v789 = vmul.f32 %v788, %v788
          %v790 = vsel %vm782, %v789, 0.0
          %791 = vadd.xlane.f32.xlu0 %v790
          %v792 = vpop.xlane.xlu0 %791
          %v793 = vmul.f32 %v792, %v786
          %v794 = vadd.f32 %v793, 1e-05
          %v795 = vrsqrt.pop %v794
          %v796 = vmul.f32 %v788, %v795
          %v798 = vlaneseq
          %v799 = vshrl.u32 %v798, 7
          %v800 = vsub.s32 0, %v799
          %v801 = vrot.slane %v780, %v800
          %v803 = vmul.f32 %v796, %v801
          %v805 = vlaneseq
          %v806 = vshrl.u32 %v805, 7
          %v807 = vsub.s32 0, %v806
          %v808 = vrot.slane %v781, %v807
          %v810 = vadd.f32 %v803, %v808
          %v811 = vpack.c.bf16 %v810, %v810
          %v812 = vld [vmem:[#allocation14] sm:$0xf]
          %v813 = vld [vmem:[#allocation14 + $0x4] sm:$0xf]
          %v814 = vld [vmem:[#allocation14 + $0x8] sm:$0xf]
          %v815 = vld [vmem:[#allocation14 + $0xc] sm:$0xf]
          %v816 = vld [vmem:[#allocation15] sm:$0x1]
          %v818 = vlaneseq
          %v819 = vshrl.u32 %v818, 7
          %v820 = vsub.s32 0, %v819
          %v821 = vrot.slane %v816, %v820
          %v827 = vunpack.c.l.b16 %v812
          %v828 = vunpack.c.l.b16 %v813
          %v829 = vunpack.c.l.b16 %v814
          %v830 = vunpack.c.l.b16 %v815
          %v831 = vpack.c.b16 %v828, %v827
          %v832 = vpack.c.b16 %v830, %v829
          %v836 = vsel %vm782, %v811, 0
          %838 = vmatprep.subr.bf16.mxu0 0
          %839 = vmatpush1.bf16.msra.mxu0 %v831
          %840 = vmatprep.subr.bf16.mxu0 0
          %841 = vmatpush1.bf16.msra.mxu0 %v832
          %842 = vmatprep.subr.bf16.mxu0 0
          %843 = vmatpush1.bf16.msra.mxu0 0
          %844 = vmatprep.subr.bf16.mxu0 0
          %845 = vmatpush1.bf16.msra.mxu0 0
          %846 = vmatprep.subr.bf16.mxu0 0
          %847 = vmatpush1.bf16.msra.mxu0 0
          %848 = vmatprep.subr.bf16.mxu0 0
          %849 = vmatpush1.bf16.msra.mxu0 0
          %850 = vmatprep.subr.bf16.mxu0 0
          %851 = vmatpush1.bf16.msra.mxu0 0
          %852 = vmatprep.subr.bf16.mxu0 0
          %853 = vmatpush1.bf16.msra.mxu0 0
          %854 = vmatprep.subr.bf16.mxu0 0
          %855 = vmatpush1.bf16.msra.mxu0 0
          %856 = vmatprep.subr.bf16.mxu0 0
          %857 = vmatpush1.bf16.msra.mxu0 0
          %858 = vmatprep.subr.bf16.mxu0 0
          %859 = vmatpush1.bf16.msra.mxu0 0
          %860 = vmatprep.subr.bf16.mxu0 0
          %861 = vmatpush1.bf16.msra.mxu0 0
          %862 = vmatprep.subr.bf16.mxu0 0
          %863 = vmatpush1.bf16.msra.mxu0 0
          %864 = vmatprep.subr.bf16.mxu0 0
          %865 = vmatpush1.bf16.msra.mxu0 0
          %866 = vmatprep.subr.bf16.mxu0 0
          %867 = vmatpush1.bf16.msra.mxu0 0
          %868 = vmatprep.subr.bf16.mxu0 0
          %869 = vmatpush1.bf16.msra.mxu0 0
          %870 = vmatprep.mubr.bf16.mxu0 0
          %871 = vmatmul.mubr.bf16.gmra.mrb[0].mxu0 %v836
          %v872 = vpop.f32.mrb[0].mxu0
          %v873 = vadd.f32 %v821, %v872
          %v874 = vpop.f32.mrb[0].mxu0
          %v875 = vpop.f32.mrb[0].mxu0
          %v876 = vpop.f32.mrb[0].mxu0
          %877 = vdwg.mxu0
          %v878 = vmul.f32 %v873, 0.35355338
          %v879 = vpack.c.bf16 %v878, %v878
          %vm880 = vcmask 60416
          %881 = vst.msk [vmem:[#allocation2] sm:$0xf] %vm880, %v879
          %v882 = vpack.c.bf16 %v873, %v873
          %v884 = vunpack.c.l.b16 %v882
          %v885 = vpack.c.b16 %v884, %v884
          %886 = vrot.lane.b32.xlu0 %v885, 96
          %v887 = vpop.permute.xlu0 %886
          %889 = vst.msk [vmem:[#allocation3] sm:$0xf] %vm880, %v887
          %890 = vrot.lane.b32.xlu0 %v885, 64
          %v891 = vpop.permute.xlu0 %890
          %893 = vst.msk [vmem:[#allocation4] sm:$0xf] %vm880, %v891
          %v895 = vunpack.c.l.b16 %v879
          %v896 = vpack.c.b16 %v895, %v895
          %897 = vrot.lane.b32.xlu0 %v896, 120
          %v898 = vpop.permute.xlu0 %897
          %s900 = scalar_lea.vmem [#allocation2], 4
          %901 = vst.msk [vmem:[%s900] sm:$0xf] %vm880, %v898
          %902 = vrot.lane.b32.xlu0 %v885, 88
          %v903 = vpop.permute.xlu0 %902
          %s905 = scalar_lea.vmem [#allocation3], 4
          %906 = vst.msk [vmem:[%s905] sm:$0xf] %vm880, %v903
          %907 = vrot.lane.b32.xlu0 %v885, 56
          %v908 = vpop.permute.xlu0 %907
          %s910 = scalar_lea.vmem [#allocation4], 4
          %911 = vst.msk [vmem:[%s910] sm:$0xf] %vm880, %v908
          %912 = vrot.lane.b32.xlu0 %v896, 112
          %v913 = vpop.permute.xlu0 %912
          %s915 = scalar_lea.vmem [#allocation2], 8
          %916 = vst.msk [vmem:[%s915] sm:$0xf] %vm880, %v913
          %917 = vrot.lane.b32.xlu0 %v885, 80
          %v918 = vpop.permute.xlu0 %917
          %s920 = scalar_lea.vmem [#allocation3], 8
          %921 = vst.msk [vmem:[%s920] sm:$0xf] %vm880, %v918
          %922 = vrot.lane.b32.xlu0 %v885, 48
          %v923 = vpop.permute.xlu0 %922
          %s925 = scalar_lea.vmem [#allocation4], 8
          %926 = vst.msk [vmem:[%s925] sm:$0xf] %vm880, %v923
          %927 = vrot.lane.b32.xlu0 %v896, 104
          %v928 = vpop.permute.xlu0 %927
          %s930 = scalar_lea.vmem [#allocation2], 12
          %931 = vst.msk [vmem:[%s930] sm:$0xf] %vm880, %v928
          %932 = vrot.lane.b32.xlu0 %v885, 72
          %v933 = vpop.permute.xlu0 %932
          %s935 = scalar_lea.vmem [#allocation3], 12
          %936 = vst.msk [vmem:[%s935] sm:$0xf] %vm880, %v933
          %937 = vrot.lane.b32.xlu0 %v885, 40
          %v938 = vpop.permute.xlu0 %937
          %s940 = scalar_lea.vmem [#allocation4], 12
          %941 = vst.msk [vmem:[%s940] sm:$0xf] %vm880, %v938
        $region152: #{tpu_custom_call.1} parent=83 // pred_fallthru
          _
        %s942 = smul.u32 %s48, 8
        %v943 = vld [vmem:[%s664] sm:$0xff]
        %s944 = sshra.s32 %s942, 3
        %s945 = sand.u32 %s942, 7
        %s946 = smul.addr %s944, 4
        %s947 = scalar_lea.vmem [#allocation2], %s946
        %v948 = vld [vmem:[%s947] sm:$0xf]
        %v949 = vld [vmem:[#allocation3] sm:$0xf]
        %v950 = vld [vmem:[#allocation4] sm:$0xf]
        %vm951 = vcmask 64512
        %v953 = vsel %vm951, %v948, 0
        %v956 = vsel %vm951, %v949, 0
        %958 = vmatprep.subr.bf16.mxu0 0
        %959 = vmatpush1.bf16.xpose.msra.mxu0 %v956
        %960 = vmatprep.subr.bf16.mxu0 0
        %961 = vmatpush1.bf16.xpose.msra.mxu0 0
        %962 = vmatprep.subr.bf16.mxu0 0
        %963 = vmatpush1.bf16.xpose.msra.mxu0 0
        %964 = vmatprep.subr.bf16.mxu0 0
        %965 = vmatpush1.bf16.xpose.msra.mxu0 0
        %966 = vmatprep.subr.bf16.mxu0 0
        %967 = vmatpush1.bf16.xpose.msra.mxu0 0
        %968 = vmatprep.subr.bf16.mxu0 0
        %969 = vmatpush1.bf16.xpose.msra.mxu0 0
        %970 = vmatprep.subr.bf16.mxu0 0
        %971 = vmatpush1.bf16.xpose.msra.mxu0 0
        %972 = vmatprep.subr.bf16.mxu0 0
        %973 = vmatpush1.bf16.xpose.msra.mxu0 0
        %974 = vmatprep.subr.bf16.mxu0 0
        %975 = vmatpush1.bf16.xpose.msra.mxu0 0
        %976 = vmatprep.subr.bf16.mxu0 0
        %977 = vmatpush1.bf16.xpose.msra.mxu0 0
        %978 = vmatprep.subr.bf16.mxu0 0
        %979 = vmatpush1.bf16.xpose.msra.mxu0 0
        %980 = vmatprep.subr.bf16.mxu0 0
        %981 = vmatpush1.bf16.xpose.msra.mxu0 0
        %982 = vmatprep.subr.bf16.mxu0 0
        %983 = vmatpush1.bf16.xpose.msra.mxu0 0
        %984 = vmatprep.subr.bf16.mxu0 0
        %985 = vmatpush1.bf16.xpose.msra.mxu0 0
        %986 = vmatprep.subr.bf16.mxu0 0
        %987 = vmatpush1.bf16.xpose.msra.mxu0 0
        %988 = vmatprep.subr.bf16.mxu0 0
        %989 = vmatpush1.bf16.xpose.msra.mxu0 0
        %990 = vmatprep.mubr.bf16.mxu0 0
        %991 = vmatmul.mubr.bf16.gmra.mrb[0].mxu0 %v953
        %v992 = vpop.f32.mrb[0].mxu0
        %v993 = vadd.f32 0.0, %v992
        %v994 = vpop.f32.mrb[0].mxu0
        %v995 = vpop.f32.mrb[0].mxu0
        %v996 = vpop.f32.mrb[0].mxu0
        %997 = vdwg.mxu0
        %v998 = vsel %vm951, %v993, -inf
        %999 = vmax.xlane.f32.xlu0 %v998
        %v1000 = vpop.xlane.xlu0 %999
        %v1001 = vsub.f32 %v993, %v1000
        %v1002 = vmul.f32 %v1001, 1.442695
        %v1003 = vpow.pop %v1002
        %v1004 = vsel %vm951, %v1003, 0.0
        %1005 = vadd.xlane.f32.xlu0 %v1004
        %v1006 = vpop.xlane.xlu0 %1005
        %v1007 = vrcp.pop %v1006
        %v1008 = vmul.f32 %v1003, %v1007
        %v1009 = vpack.c.bf16 %v1008, %v1008
        %v1011 = vsel %vm951, %v1009, 0
        %vm1013 = vcmask 1043456
        %v1015 = vsel %vm1013, %v950, 0
        %1017 = vmatprep.subr.bf16.mxu0 0
        %1018 = vmatpush1.bf16.msra.mxu0 %v1015
        %1019 = vmatprep.subr.bf16.mxu0 0
        %1020 = vmatpush1.bf16.msra.mxu0 0
        %1021 = vmatprep.subr.bf16.mxu0 0
        %1022 = vmatpush1.bf16.msra.mxu0 0
        %1023 = vmatprep.subr.bf16.mxu0 0
        %1024 = vmatpush1.bf16.msra.mxu0 0
        %1025 = vmatprep.subr.bf16.mxu0 0
        %1026 = vmatpush1.bf16.msra.mxu0 0
        %1027 = vmatprep.subr.bf16.mxu0 0
        %1028 = vmatpush1.bf16.msra.mxu0 0
        %1029 = vmatprep.subr.bf16.mxu0 0
        %1030 = vmatpush1.bf16.msra.mxu0 0
        %1031 = vmatprep.subr.bf16.mxu0 0
        %1032 = vmatpush1.bf16.msra.mxu0 0
        %1033 = vmatprep.subr.bf16.mxu0 0
        %1034 = vmatpush1.bf16.msra.mxu0 0
        %1035 = vmatprep.subr.bf16.mxu0 0
        %1036 = vmatpush1.bf16.msra.mxu0 0
        %1037 = vmatprep.subr.bf16.mxu0 0
        %1038 = vmatpush1.bf16.msra.mxu0 0
        %1039 = vmatprep.subr.bf16.mxu0 0
        %1040 = vmatpush1.bf16.msra.mxu0 0
        %1041 = vmatprep.subr.bf16.mxu0 0
        %1042 = vmatpush1.bf16.msra.mxu0 0
        %1043 = vmatprep.subr.bf16.mxu0 0
        %1044 = vmatpush1.bf16.msra.mxu0 0
        %1045 = vmatprep.subr.bf16.mxu0 0
        %1046 = vmatpush1.bf16.msra.mxu0 0
        %1047 = vmatprep.subr.bf16.mxu0 0
        %1048 = vmatpush1.bf16.msra.mxu0 0
        %1049 = vmatprep.mubr.bf16.mxu0 0
        %1050 = vmatmul.mubr.bf16.gmra.mrb[0].mxu0 %v1011
        %v1051 = vpop.f32.mrb[0].mxu0
        %v1052 = vadd.f32 0.0, %v1051
        %v1053 = vpop.f32.mrb[0].mxu0
        %v1054 = vpop.f32.mrb[0].mxu0
        %v1055 = vpop.f32.mrb[0].mxu0
        %1056 = vdwg.mxu0
        %v1057 = vpack.c.bf16 %v1052, %v1052
        %vm1058 = vcmask 60416
        %1059 = vst.msk [vmem:[#allocation5] sm:$0xf] %vm1058, %v1057
        %s1060 = sadd.s32 %s944, 1
        %s1061 = smul.addr %s1060, 4
        %s1062 = scalar_lea.vmem [#allocation2], %s1061
        %v1063 = vld [vmem:[%s1062] sm:$0xf]
        %s1064 = scalar_lea.vmem [#allocation3], 4
        %v1065 = vld [vmem:[%s1064] sm:$0xf]
        %s1066 = scalar_lea.vmem [#allocation4], 4
        %v1067 = vld [vmem:[%s1066] sm:$0xf]
        %v1069 = vsel %vm951, %v1063, 0
        %v1072 = vsel %vm951, %v1065, 0
        %1074 = vmatprep.subr.bf16.mxu0 0
        %1075 = vmatpush1.bf16.xpose.msra.mxu0 %v1072
        %1076 = vmatprep.subr.bf16.mxu0 0
        %1077 = vmatpush1.bf16.xpose.msra.mxu0 0
        %1078 = vmatprep.subr.bf16.mxu0 0
        %1079 = vmatpush1.bf16.xpose.msra.mxu0 0
        %1080 = vmatprep.subr.bf16.mxu0 0
        %1081 = vmatpush1.bf16.xpose.msra.mxu0 0
        %1082 = vmatprep.subr.bf16.mxu0 0
        %1083 = vmatpush1.bf16.xpose.msra.mxu0 0
        %1084 = vmatprep.subr.bf16.mxu0 0
        %1085 = vmatpush1.bf16.xpose.msra.mxu0 0
        %1086 = vmatprep.subr.bf16.mxu0 0
        %1087 = vmatpush1.bf16.xpose.msra.mxu0 0
        %1088 = vmatprep.subr.bf16.mxu0 0
        %1089 = vmatpush1.bf16.xpose.msra.mxu0 0
        %1090 = vmatprep.subr.bf16.mxu0 0
        %1091 = vmatpush1.bf16.xpose.msra.mxu0 0
        %1092 = vmatprep.subr.bf16.mxu0 0
        %1093 = vmatpush1.bf16.xpose.msra.mxu0 0
        %1094 = vmatprep.subr.bf16.mxu0 0
        %1095 = vmatpush1.bf16.xpose.msra.mxu0 0
        %1096 = vmatprep.subr.bf16.mxu0 0
        %1097 = vmatpush1.bf16.xpose.msra.mxu0 0
        %1098 = vmatprep.subr.bf16.mxu0 0
        %1099 = vmatpush1.bf16.xpose.msra.mxu0 0
        %1100 = vmatprep.subr.bf16.mxu0 0
        %1101 = vmatpush1.bf16.xpose.msra.mxu0 0
        %1102 = vmatprep.subr.bf16.mxu0 0
        %1103 = vmatpush1.bf16.xpose.msra.mxu0 0
        %1104 = vmatprep.subr.bf16.mxu0 0
        %1105 = vmatpush1.bf16.xpose.msra.mxu0 0
        %1106 = vmatprep.mubr.bf16.mxu0 0
        %1107 = vmatmul.mubr.bf16.gmra.mrb[0].mxu0 %v1069
        %v1108 = vpop.f32.mrb[0].mxu0
        %v1109 = vadd.f32 0.0, %v1108
        %v1110 = vpop.f32.mrb[0].mxu0
        %v1111 = vpop.f32.mrb[0].mxu0
        %v1112 = vpop.f32.mrb[0].mxu0
        %1113 = vdwg.mxu0
        %v1114 = vsel %vm951, %v1109, -inf
        %1115 = vmax.xlane.f32.xlu0 %v1114
        %v1116 = vpop.xlane.xlu0 %1115
        %v1117 = vsub.f32 %v1109, %v1116
        %v1118 = vmul.f32 %v1117, 1.442695
        %v1119 = vpow.pop %v1118
        %v1120 = vsel %vm951, %v1119, 0.0
        %1121 = vadd.xlane.f32.xlu0 %v1120
        %v1122 = vpop.xlane.xlu0 %1121
        %v1123 = vrcp.pop %v1122
        %v1124 = vmul.f32 %v1119, %v1123
        %v1125 = vpack.c.bf16 %v1124, %v1124
        %v1127 = vsel %vm951, %v1125, 0
        %v1130 = vsel %vm1013, %v1067, 0
        %1132 = vmatprep.subr.bf16.mxu0 0
        %1133 = vmatpush1.bf16.msra.mxu0 %v1130
        %1134 = vmatprep.subr.bf16.mxu0 0
        %1135 = vmatpush1.bf16.msra.mxu0 0
        %1136 = vmatprep.subr.bf16.mxu0 0
        %1137 = vmatpush1.bf16.msra.mxu0 0
        %1138 = vmatprep.subr.bf16.mxu0 0
        %1139 = vmatpush1.bf16.msra.mxu0 0
        %1140 = vmatprep.subr.bf16.mxu0 0
        %1141 = vmatpush1.bf16.msra.mxu0 0
        %1142 = vmatprep.subr.bf16.mxu0 0
        %1143 = vmatpush1.bf16.msra.mxu0 0
        %1144 = vmatprep.subr.bf16.mxu0 0
        %1145 = vmatpush1.bf16.msra.mxu0 0
        %1146 = vmatprep.subr.bf16.mxu0 0
        %1147 = vmatpush1.bf16.msra.mxu0 0
        %1148 = vmatprep.subr.bf16.mxu0 0
        %1149 = vmatpush1.bf16.msra.mxu0 0
        %1150 = vmatprep.subr.bf16.mxu0 0
        %1151 = vmatpush1.bf16.msra.mxu0 0
        %1152 = vmatprep.subr.bf16.mxu0 0
        %1153 = vmatpush1.bf16.msra.mxu0 0
        %1154 = vmatprep.subr.bf16.mxu0 0
        %1155 = vmatpush1.bf16.msra.mxu0 0
        %1156 = vmatprep.subr.bf16.mxu0 0
        %1157 = vmatpush1.bf16.msra.mxu0 0
        %1158 = vmatprep.subr.bf16.mxu0 0
        %1159 = vmatpush1.bf16.msra.mxu0 0
        %1160 = vmatprep.subr.bf16.mxu0 0
        %1161 = vmatpush1.bf16.msra.mxu0 0
        %1162 = vmatprep.subr.bf16.mxu0 0
        %1163 = vmatpush1.bf16.msra.mxu0 0
        %1164 = vmatprep.mubr.bf16.mxu0 0
        %1165 = vmatmul.mubr.bf16.gmra.mrb[0].mxu0 %v1127
        %v1166 = vpop.f32.mrb[0].mxu0
        %v1167 = vadd.f32 0.0, %v1166
        %v1168 = vpop.f32.mrb[0].mxu0
        %v1169 = vpop.f32.mrb[0].mxu0
        %v1170 = vpop.f32.mrb[0].mxu0
        %1171 = vdwg.mxu0
        %v1172 = vpack.c.bf16 %v1167, %v1167
        %v1174 = vunpack.c.l.b16 %v1172
        %v1175 = vpack.c.b16 %v1174, %v1174
        %1176 = vrot.lane.b32.xlu0 %v1175, 8
        %v1177 = vpop.permute.xlu0 %1176
        %vm1179 = vcmask 126016
        %1180 = vst.msk [vmem:[#allocation5] sm:$0xf] %vm1179, %v1177
        %s1181 = sadd.s32 %s944, 2
        %s1182 = smul.addr %s1181, 4
        %s1183 = scalar_lea.vmem [#allocation2], %s1182
        %v1184 = vld [vmem:[%s1183] sm:$0xf]
        %s1185 = scalar_lea.vmem [#allocation3], 8
        %v1186 = vld [vmem:[%s1185] sm:$0xf]
        %s1187 = scalar_lea.vmem [#allocation4], 8
        %v1188 = vld [vmem:[%s1187] sm:$0xf]
        %v1190 = vsel %vm951, %v1184, 0
        %v1193 = vsel %vm951, %v1186, 0
        %1195 = vmatprep.subr.bf16.mxu0 0
        %1196 = vmatpush1.bf16.xpose.msra.mxu0 %v1193
        %1197 = vmatprep.subr.bf16.mxu0 0
        %1198 = vmatpush1.bf16.xpose.msra.mxu0 0
        %1199 = vmatprep.subr.bf16.mxu0 0
        %1200 = vmatpush1.bf16.xpose.msra.mxu0 0
        %1201 = vmatprep.subr.bf16.mxu0 0
        %1202 = vmatpush1.bf16.xpose.msra.mxu0 0
        %1203 = vmatprep.subr.bf16.mxu0 0
        %1204 = vmatpush1.bf16.xpose.msra.mxu0 0
        %1205 = vmatprep.subr.bf16.mxu0 0
        %1206 = vmatpush1.bf16.xpose.msra.mxu0 0
        %1207 = vmatprep.subr.bf16.mxu0 0
        %1208 = vmatpush1.bf16.xpose.msra.mxu0 0
        %1209 = vmatprep.subr.bf16.mxu0 0
        %1210 = vmatpush1.bf16.xpose.msra.mxu0 0
        %1211 = vmatprep.subr.bf16.mxu0 0
        %1212 = vmatpush1.bf16.xpose.msra.mxu0 0
        %1213 = vmatprep.subr.bf16.mxu0 0
        %1214 = vmatpush1.bf16.xpose.msra.mxu0 0
        %1215 = vmatprep.subr.bf16.mxu0 0
        %1216 = vmatpush1.bf16.xpose.msra.mxu0 0
        %1217 = vmatprep.subr.bf16.mxu0 0
        %1218 = vmatpush1.bf16.xpose.msra.mxu0 0
        %1219 = vmatprep.subr.bf16.mxu0 0
        %1220 = vmatpush1.bf16.xpose.msra.mxu0 0
        %1221 = vmatprep.subr.bf16.mxu0 0
        %1222 = vmatpush1.bf16.xpose.msra.mxu0 0
        %1223 = vmatprep.subr.bf16.mxu0 0
        %1224 = vmatpush1.bf16.xpose.msra.mxu0 0
        %1225 = vmatprep.subr.bf16.mxu0 0
        %1226 = vmatpush1.bf16.xpose.msra.mxu0 0
        %1227 = vmatprep.mubr.bf16.mxu0 0
        %1228 = vmatmul.mubr.bf16.gmra.mrb[0].mxu0 %v1190
        %v1229 = vpop.f32.mrb[0].mxu0
        %v1230 = vadd.f32 0.0, %v1229
        %v1231 = vpop.f32.mrb[0].mxu0
        %v1232 = vpop.f32.mrb[0].mxu0
        %v1233 = vpop.f32.mrb[0].mxu0
        %1234 = vdwg.mxu0
        %v1235 = vsel %vm951, %v1230, -inf
        %1236 = vmax.xlane.f32.xlu0 %v1235
        %v1237 = vpop.xlane.xlu0 %1236
        %v1238 = vsub.f32 %v1230, %v1237
        %v1239 = vmul.f32 %v1238, 1.442695
        %v1240 = vpow.pop %v1239
        %v1241 = vsel %vm951, %v1240, 0.0
        %1242 = vadd.xlane.f32.xlu0 %v1241
        %v1243 = vpop.xlane.xlu0 %1242
        %v1244 = vrcp.pop %v1243
        %v1245 = vmul.f32 %v1240, %v1244
        %v1246 = vpack.c.bf16 %v1245, %v1245
        %v1248 = vsel %vm951, %v1246, 0
        %v1251 = vsel %vm1013, %v1188, 0
        %1253 = vmatprep.subr.bf16.mxu0 0
        %1254 = vmatpush1.bf16.msra.mxu0 %v1251
        %1255 = vmatprep.subr.bf16.mxu0 0
        %1256 = vmatpush1.bf16.msra.mxu0 0
        %1257 = vmatprep.subr.bf16.mxu0 0
        %1258 = vmatpush1.bf16.msra.mxu0 0
        %1259 = vmatprep.subr.bf16.mxu0 0
        %1260 = vmatpush1.bf16.msra.mxu0 0
        %1261 = vmatprep.subr.bf16.mxu0 0
        %1262 = vmatpush1.bf16.msra.mxu0 0
        %1263 = vmatprep.subr.bf16.mxu0 0
        %1264 = vmatpush1.bf16.msra.mxu0 0
        %1265 = vmatprep.subr.bf16.mxu0 0
        %1266 = vmatpush1.bf16.msra.mxu0 0
        %1267 = vmatprep.subr.bf16.mxu0 0
        %1268 = vmatpush1.bf16.msra.mxu0 0
        %1269 = vmatprep.subr.bf16.mxu0 0
        %1270 = vmatpush1.bf16.msra.mxu0 0
        %1271 = vmatprep.subr.bf16.mxu0 0
        %1272 = vmatpush1.bf16.msra.mxu0 0
        %1273 = vmatprep.subr.bf16.mxu0 0
        %1274 = vmatpush1.bf16.msra.mxu0 0
        %1275 = vmatprep.subr.bf16.mxu0 0
        %1276 = vmatpush1.bf16.msra.mxu0 0
        %1277 = vmatprep.subr.bf16.mxu0 0
        %1278 = vmatpush1.bf16.msra.mxu0 0
        %1279 = vmatprep.subr.bf16.mxu0 0
        %1280 = vmatpush1.bf16.msra.mxu0 0
        %1281 = vmatprep.subr.bf16.mxu0 0
        %1282 = vmatpush1.bf16.msra.mxu0 0
        %1283 = vmatprep.subr.bf16.mxu0 0
        %1284 = vmatpush1.bf16.msra.mxu0 0
        %1285 = vmatprep.mubr.bf16.mxu0 0
        %1286 = vmatmul.mubr.bf16.gmra.mrb[0].mxu0 %v1248
        %v1287 = vpop.f32.mrb[0].mxu0
        %v1288 = vadd.f32 0.0, %v1287
        %v1289 = vpop.f32.mrb[0].mxu0
        %v1290 = vpop.f32.mrb[0].mxu0
        %v1291 = vpop.f32.mrb[0].mxu0
        %1292 = vdwg.mxu0
        %v1293 = vpack.c.bf16 %v1288, %v1288
        %v1295 = vunpack.c.l.b16 %v1293
        %v1296 = vpack.c.b16 %v1295, %v1295
        %1297 = vrot.lane.b32.xlu0 %v1296, 16
        %v1298 = vpop.permute.xlu0 %1297
        %vm1300 = vcmask 191616
        %1301 = vst.msk [vmem:[#allocation5] sm:$0xf] %vm1300, %v1298
        %s1302 = sadd.s32 %s944, 3
        %s1303 = smul.addr %s1302, 4
        %s1304 = scalar_lea.vmem [#allocation2], %s1303
        %v1305 = vld [vmem:[%s1304] sm:$0xf]
        %s1306 = scalar_lea.vmem [#allocation3], 12
        %v1307 = vld [vmem:[%s1306] sm:$0xf]
        %s1308 = scalar_lea.vmem [#allocation4], 12
        %v1309 = vld [vmem:[%s1308] sm:$0xf]
        %v1311 = vsel %vm951, %v1305, 0
        %v1314 = vsel %vm951, %v1307, 0
        %1316 = vmatprep.subr.bf16.mxu0 0
        %1317 = vmatpush1.bf16.xpose.msra.mxu0 %v1314
        %1318 = vmatprep.subr.bf16.mxu0 0
        %1319 = vmatpush1.bf16.xpose.msra.mxu0 0
        %1320 = vmatprep.subr.bf16.mxu0 0
        %1321 = vmatpush1.bf16.xpose.msra.mxu0 0
        %1322 = vmatprep.subr.bf16.mxu0 0
        %1323 = vmatpush1.bf16.xpose.msra.mxu0 0
        %1324 = vmatprep.subr.bf16.mxu0 0
        %1325 = vmatpush1.bf16.xpose.msra.mxu0 0
        %1326 = vmatprep.subr.bf16.mxu0 0
        %1327 = vmatpush1.bf16.xpose.msra.mxu0 0
        %1328 = vmatprep.subr.bf16.mxu0 0
        %1329 = vmatpush1.bf16.xpose.msra.mxu0 0
        %1330 = vmatprep.subr.bf16.mxu0 0
        %1331 = vmatpush1.bf16.xpose.msra.mxu0 0
        %1332 = vmatprep.subr.bf16.mxu0 0
        %1333 = vmatpush1.bf16.xpose.msra.mxu0 0
        %1334 = vmatprep.subr.bf16.mxu0 0
        %1335 = vmatpush1.bf16.xpose.msra.mxu0 0
        %1336 = vmatprep.subr.bf16.mxu0 0
        %1337 = vmatpush1.bf16.xpose.msra.mxu0 0
        %1338 = vmatprep.subr.bf16.mxu0 0
        %1339 = vmatpush1.bf16.xpose.msra.mxu0 0
        %1340 = vmatprep.subr.bf16.mxu0 0
        %1341 = vmatpush1.bf16.xpose.msra.mxu0 0
        %1342 = vmatprep.subr.bf16.mxu0 0
        %1343 = vmatpush1.bf16.xpose.msra.mxu0 0
        %1344 = vmatprep.subr.bf16.mxu0 0
        %1345 = vmatpush1.bf16.xpose.msra.mxu0 0
        %1346 = vmatprep.subr.bf16.mxu0 0
        %1347 = vmatpush1.bf16.xpose.msra.mxu0 0
        %1348 = vmatprep.mubr.bf16.mxu0 0
        %1349 = vmatmul.mubr.bf16.gmra.mrb[0].mxu0 %v1311
        %v1350 = vpop.f32.mrb[0].mxu0
        %v1351 = vadd.f32 0.0, %v1350
        %v1352 = vpop.f32.mrb[0].mxu0
        %v1353 = vpop.f32.mrb[0].mxu0
        %v1354 = vpop.f32.mrb[0].mxu0
        %1355 = vdwg.mxu0
        %v1356 = vsel %vm951, %v1351, -inf
        %1357 = vmax.xlane.f32.xlu0 %v1356
        %v1358 = vpop.xlane.xlu0 %1357
        %v1359 = vsub.f32 %v1351, %v1358
        %v1360 = vmul.f32 %v1359, 1.442695
        %v1361 = vpow.pop %v1360
        %v1362 = vsel %vm951, %v1361, 0.0
        %1363 = vadd.xlane.f32.xlu0 %v1362
        %v1364 = vpop.xlane.xlu0 %1363
        %v1365 = vrcp.pop %v1364
        %v1366 = vmul.f32 %v1361, %v1365
        %v1367 = vpack.c.bf16 %v1366, %v1366
        %v1369 = vsel %vm951, %v1367, 0
        %v1372 = vsel %vm1013, %v1309, 0
        %1374 = vmatprep.subr.bf16.mxu0 0
        %1375 = vmatpush1.bf16.msra.mxu0 %v1372
        %1376 = vmatprep.subr.bf16.mxu0 0
        %1377 = vmatpush1.bf16.msra.mxu0 0
        %1378 = vmatprep.subr.bf16.mxu0 0
        %1379 = vmatpush1.bf16.msra.mxu0 0
        %1380 = vmatprep.subr.bf16.mxu0 0
        %1381 = vmatpush1.bf16.msra.mxu0 0
        %1382 = vmatprep.subr.bf16.mxu0 0
        %1383 = vmatpush1.bf16.msra.mxu0 0
        %1384 = vmatprep.subr.bf16.mxu0 0
        %1385 = vmatpush1.bf16.msra.mxu0 0
        %1386 = vmatprep.subr.bf16.mxu0 0
        %1387 = vmatpush1.bf16.msra.mxu0 0
        %1388 = vmatprep.subr.bf16.mxu0 0
        %1389 = vmatpush1.bf16.msra.mxu0 0
        %1390 = vmatprep.subr.bf16.mxu0 0
        %1391 = vmatpush1.bf16.msra.mxu0 0
        %1392 = vmatprep.subr.bf16.mxu0 0
        %1393 = vmatpush1.bf16.msra.mxu0 0
        %1394 = vmatprep.subr.bf16.mxu0 0
        %1395 = vmatpush1.bf16.msra.mxu0 0
        %1396 = vmatprep.subr.bf16.mxu0 0
        %1397 = vmatpush1.bf16.msra.mxu0 0
        %1398 = vmatprep.subr.bf16.mxu0 0
        %1399 = vmatpush1.bf16.msra.mxu0 0
        %1400 = vmatprep.subr.bf16.mxu0 0
        %1401 = vmatpush1.bf16.msra.mxu0 0
        %1402 = vmatprep.subr.bf16.mxu0 0
        %1403 = vmatpush1.bf16.msra.mxu0 0
        %1404 = vmatprep.subr.bf16.mxu0 0
        %1405 = vmatpush1.bf16.msra.mxu0 0
        %1406 = vmatprep.mubr.bf16.mxu0 0
        %1407 = vmatmul.mubr.bf16.gmra.mrb[0].mxu0 %v1369
        %v1408 = vpop.f32.mrb[0].mxu0
        %v1409 = vadd.f32 0.0, %v1408
        %v1410 = vpop.f32.mrb[0].mxu0
        %v1411 = vpop.f32.mrb[0].mxu0
        %v1412 = vpop.f32.mrb[0].mxu0
        %1413 = vdwg.mxu0
        %v1414 = vpack.c.bf16 %v1409, %v1409
        %v1416 = vunpack.c.l.b16 %v1414
        %v1417 = vpack.c.b16 %v1416, %v1416
        %1418 = vrot.lane.b32.xlu0 %v1417, 24
        %v1419 = vpop.permute.xlu0 %1418
        %vm1421 = vcmask 257216
        %1422 = vst.msk [vmem:[#allocation5] sm:$0xf] %vm1421, %v1419
        %v1423 = vld [vmem:[#allocation5] sm:$0xf]
        %v1424 = vld [vmem:[#allocation17] sm:$0xf]
        %v1425 = vld [vmem:[#allocation17 + $0x4] sm:$0xf]
        %v1426 = vld [vmem:[#allocation17 + $0x8] sm:$0xf]
        %v1427 = vld [vmem:[#allocation17 + $0xc] sm:$0xf]
        %v1428 = vld [vmem:[#allocation18] sm:$0x1]
        %v1430 = vlaneseq
        %v1431 = vshrl.u32 %v1430, 7
        %v1432 = vsub.s32 0, %v1431
        %v1433 = vrot.slane %v1428, %v1432
        %v1439 = vunpack.c.l.b16 %v1424
        %v1440 = vunpack.c.l.b16 %v1425
        %v1441 = vunpack.c.l.b16 %v1426
        %v1442 = vunpack.c.l.b16 %v1427
        %v1443 = vpack.c.b16 %v1440, %v1439
        %v1444 = vpack.c.b16 %v1442, %v1441
        %vm1447 = vcmask 261120
        %v1449 = vsel %vm1447, %v1423, 0
        %1451 = vmatprep.subr.bf16.mxu0 0
        %1452 = vmatpush1.bf16.msra.mxu0 %v1443
        %1453 = vmatprep.subr.bf16.mxu0 0
        %1454 = vmatpush1.bf16.msra.mxu0 %v1444
        %1455 = vmatprep.subr.bf16.mxu0 0
        %1456 = vmatpush1.bf16.msra.mxu0 0
        %1457 = vmatprep.subr.bf16.mxu0 0
        %1458 = vmatpush1.bf16.msra.mxu0 0
        %1459 = vmatprep.subr.bf16.mxu0 0
        %1460 = vmatpush1.bf16.msra.mxu0 0
        %1461 = vmatprep.subr.bf16.mxu0 0
        %1462 = vmatpush1.bf16.msra.mxu0 0
        %1463 = vmatprep.subr.bf16.mxu0 0
        %1464 = vmatpush1.bf16.msra.mxu0 0
        %1465 = vmatprep.subr.bf16.mxu0 0
        %1466 = vmatpush1.bf16.msra.mxu0 0
        %1467 = vmatprep.subr.bf16.mxu0 0
        %1468 = vmatpush1.bf16.msra.mxu0 0
        %1469 = vmatprep.subr.bf16.mxu0 0
        %1470 = vmatpush1.bf16.msra.mxu0 0
        %1471 = vmatprep.subr.bf16.mxu0 0
        %1472 = vmatpush1.bf16.msra.mxu0 0
        %1473 = vmatprep.subr.bf16.mxu0 0
        %1474 = vmatpush1.bf16.msra.mxu0 0
        %1475 = vmatprep.subr.bf16.mxu0 0
        %1476 = vmatpush1.bf16.msra.mxu0 0
        %1477 = vmatprep.subr.bf16.mxu0 0
        %1478 = vmatpush1.bf16.msra.mxu0 0
        %1479 = vmatprep.subr.bf16.mxu0 0
        %1480 = vmatpush1.bf16.msra.mxu0 0
        %1481 = vmatprep.subr.bf16.mxu0 0
        %1482 = vmatpush1.bf16.msra.mxu0 0
        %1483 = vmatprep.mubr.bf16.mxu0 0
        %1484 = vmatmul.mubr.bf16.gmra.mrb[0].mxu0 %v1449
        %v1485 = vpop.f32.mrb[0].mxu0
        %v1486 = vadd.f32 %v1433, %v1485
        %v1487 = vpop.f32.mrb[0].mxu0
        %v1488 = vpop.f32.mrb[0].mxu0
        %v1489 = vpop.f32.mrb[0].mxu0
        %1490 = vdwg.mxu0
        %v1491 = vadd.f32 %v943, %v1486
        %v1492 = vld [vmem:[#allocation20] sm:$0x1]
        %v1493 = vld [vmem:[#allocation21] sm:$0x1]
        %v1494 = vsel %vm1447, %v1491, 0.0
        %1495 = vadd.xlane.f32.xlu0 %v1494
        %v1496 = vpop.xlane.xlu0 %1495
        %v1497 = vrcp.pop 32.0
        %v1498 = vmul.f32 %v1496, %v1497
        %v1499 = vsub.f32 %v1491, %v1498
        %v1500 = vmul.f32 %v1499, %v1499
        %v1501 = vsel %vm1447, %v1500, 0.0
        %1502 = vadd.xlane.f32.xlu0 %v1501
        %v1503 = vpop.xlane.xlu0 %1502
        %v1504 = vmul.f32 %v1503, %v1497
        %v1505 = vadd.f32 %v1504, 1e-05
        %v1506 = vrsqrt.pop %v1505
        %v1507 = vmul.f32 %v1499, %v1506
        %v1509 = vlaneseq
        %v1510 = vshrl.u32 %v1509, 7
        %v1511 = vsub.s32 0, %v1510
        %v1512 = vrot.slane %v1492, %v1511
        %v1514 = vmul.f32 %v1507, %v1512
        %v1516 = vlaneseq
        %v1517 = vshrl.u32 %v1516, 7
        %v1518 = vsub.s32 0, %v1517
        %v1519 = vrot.slane %v1493, %v1518
        %v1521 = vadd.f32 %v1514, %v1519
        %v1522 = vpack.c.bf16 %v1521, %v1521
        %v1523 = vld [vmem:[#allocation23] sm:$0xf]
        %v1524 = vld [vmem:[#allocation23 + $0x4] sm:$0xf]
        %v1525 = vld [vmem:[#allocation23 + $0x8] sm:$0xf]
        %v1526 = vld [vmem:[#allocation23 + $0xc] sm:$0xf]
        %v1527 = vld [vmem:[#allocation24] sm:$0x1]
        %v1529 = vlaneseq
        %v1530 = vshrl.u32 %v1529, 7
        %v1531 = vsub.s32 0, %v1530
        %v1532 = vrot.slane %v1527, %v1531
        %v1538 = vunpack.c.l.b16 %v1523
        %v1539 = vunpack.c.l.b16 %v1524
        %v1540 = vunpack.c.l.b16 %v1525
        %v1541 = vunpack.c.l.b16 %v1526
        %v1542 = vpack.c.b16 %v1539, %v1538
        %v1543 = vpack.c.b16 %v1541, %v1540
        %v1547 = vsel %vm1447, %v1522, 0
        %1549 = vmatprep.subr.bf16.mxu0 0
        %1550 = vmatpush1.bf16.msra.mxu0 %v1542
        %1551 = vmatprep.subr.bf16.mxu0 0
        %1552 = vmatpush1.bf16.msra.mxu0 %v1543
        %1553 = vmatprep.subr.bf16.mxu0 0
        %1554 = vmatpush1.bf16.msra.mxu0 0
        %1555 = vmatprep.subr.bf16.mxu0 0
        %1556 = vmatpush1.bf16.msra.mxu0 0
        %1557 = vmatprep.subr.bf16.mxu0 0
        %1558 = vmatpush1.bf16.msra.mxu0 0
        %1559 = vmatprep.subr.bf16.mxu0 0
        %1560 = vmatpush1.bf16.msra.mxu0 0
        %1561 = vmatprep.subr.bf16.mxu0 0
        %1562 = vmatpush1.bf16.msra.mxu0 0
        %1563 = vmatprep.subr.bf16.mxu0 0
        %1564 = vmatpush1.bf16.msra.mxu0 0
        %1565 = vmatprep.subr.bf16.mxu0 0
        %1566 = vmatpush1.bf16.msra.mxu0 0
        %1567 = vmatprep.subr.bf16.mxu0 0
        %1568 = vmatpush1.bf16.msra.mxu0 0
        %1569 = vmatprep.subr.bf16.mxu0 0
        %1570 = vmatpush1.bf16.msra.mxu0 0
        %1571 = vmatprep.subr.bf16.mxu0 0
        %1572 = vmatpush1.bf16.msra.mxu0 0
        %1573 = vmatprep.subr.bf16.mxu0 0
        %1574 = vmatpush1.bf16.msra.mxu0 0
        %1575 = vmatprep.subr.bf16.mxu0 0
        %1576 = vmatpush1.bf16.msra.mxu0 0
        %1577 = vmatprep.subr.bf16.mxu0 0
        %1578 = vmatpush1.bf16.msra.mxu0 0
        %1579 = vmatprep.subr.bf16.mxu0 0
        %1580 = vmatpush1.bf16.msra.mxu0 0
        %1581 = vmatprep.mubr.bf16.mxu0 0
        %1582 = vmatmul.mubr.bf16.gmra.mrb[0].mxu0 %v1547
        %v1583 = vpop.f32.mrb[0].mxu0
        %v1584 = vadd.f32 %v1532, %v1583
        %v1585 = vpop.f32.mrb[0].mxu0
        %v1586 = vpop.f32.mrb[0].mxu0
        %v1587 = vpop.f32.mrb[0].mxu0
        %1588 = vdwg.mxu0
        %v1589 = vmul.f32 %v1584, 0.5
        %v1590 = vmul.f32 %v1584, 0.70710677
        %v1591 = verf.f32.pop %v1590
        %v1592 = vadd.f32 %v1591, 1.0
        %v1593 = vmul.f32 %v1589, %v1592
        %v1594 = vpack.c.bf16 %v1593, %v1593
        %v1595 = vld [vmem:[#allocation26] sm:$0xf]
        %v1596 = vld [vmem:[#allocation26 + $0x4] sm:$0xf]
        %v1597 = vld [vmem:[#allocation26 + $0x8] sm:$0xf]
        %v1598 = vld [vmem:[#allocation26 + $0xc] sm:$0xf]
        %v1599 = vld [vmem:[#allocation26 + $0x10] sm:$0xf]
        %v1600 = vld [vmem:[#allocation26 + $0x14] sm:$0xf]
        %v1601 = vld [vmem:[#allocation26 + $0x18] sm:$0xf]
        %v1602 = vld [vmem:[#allocation26 + $0x1c] sm:$0xf]
        %v1603 = vld [vmem:[#allocation26 + $0x20] sm:$0xf]
        %v1604 = vld [vmem:[#allocation26 + $0x24] sm:$0xf]
        %v1605 = vld [vmem:[#allocation26 + $0x28] sm:$0xf]
        %v1606 = vld [vmem:[#allocation26 + $0x2c] sm:$0xf]
        %v1607 = vld [vmem:[#allocation26 + $0x30] sm:$0xf]
        %v1608 = vld [vmem:[#allocation26 + $0x34] sm:$0xf]
        %v1609 = vld [vmem:[#allocation26 + $0x38] sm:$0xf]
        %v1610 = vld [vmem:[#allocation26 + $0x3c] sm:$0xf]
        %v1611 = vld [vmem:[#allocation27] sm:$0x1]
        %v1613 = vlaneseq
        %v1614 = vshrl.u32 %v1613, 7
        %v1615 = vsub.s32 0, %v1614
        %v1616 = vrot.slane %v1611, %v1615
        %v1634 = vunpack.c.l.b16 %v1595
        %v1635 = vunpack.c.l.b16 %v1596
        %v1636 = vunpack.c.l.b16 %v1597
        %v1637 = vunpack.c.l.b16 %v1598
        %v1638 = vunpack.c.l.b16 %v1599
        %v1639 = vunpack.c.l.b16 %v1600
        %v1640 = vunpack.c.l.b16 %v1601
        %v1641 = vunpack.c.l.b16 %v1602
        %v1642 = vunpack.c.l.b16 %v1603
        %v1643 = vunpack.c.l.b16 %v1604
        %v1644 = vunpack.c.l.b16 %v1605
        %v1645 = vunpack.c.l.b16 %v1606
        %v1646 = vunpack.c.l.b16 %v1607
        %v1647 = vunpack.c.l.b16 %v1608
        %v1648 = vunpack.c.l.b16 %v1609
        %v1649 = vunpack.c.l.b16 %v1610
        %v1650 = vpack.c.b16 %v1635, %v1634
        %v1651 = vpack.c.b16 %v1637, %v1636
        %v1652 = vpack.c.b16 %v1639, %v1638
        %v1653 = vpack.c.b16 %v1641, %v1640
        %v1654 = vpack.c.b16 %v1643, %v1642
        %v1655 = vpack.c.b16 %v1645, %v1644
        %v1656 = vpack.c.b16 %v1647, %v1646
        %v1657 = vpack.c.b16 %v1649, %v1648
        %1666 = vmatprep.subr.bf16.mxu0 0
        %1667 = vmatpush1.bf16.msra.mxu0 %v1650
        %1668 = vmatprep.subr.bf16.mxu0 0
        %1669 = vmatpush1.bf16.msra.mxu0 %v1651
        %1670 = vmatprep.subr.bf16.mxu0 0
        %1671 = vmatpush1.bf16.msra.mxu0 %v1652
        %1672 = vmatprep.subr.bf16.mxu0 0
        %1673 = vmatpush1.bf16.msra.mxu0 %v1653
        %1674 = vmatprep.subr.bf16.mxu0 0
        %1675 = vmatpush1.bf16.msra.mxu0 %v1654
        %1676 = vmatprep.subr.bf16.mxu0 0
        %1677 = vmatpush1.bf16.msra.mxu0 %v1655
        %1678 = vmatprep.subr.bf16.mxu0 0
        %1679 = vmatpush1.bf16.msra.mxu0 %v1656
        %1680 = vmatprep.subr.bf16.mxu0 0
        %1681 = vmatpush1.bf16.msra.mxu0 %v1657
        %1682 = vmatprep.subr.bf16.mxu0 0
        %1683 = vmatpush1.bf16.msra.mxu0 0
        %1684 = vmatprep.subr.bf16.mxu0 0
        %1685 = vmatpush1.bf16.msra.mxu0 0
        %1686 = vmatprep.subr.bf16.mxu0 0
        %1687 = vmatpush1.bf16.msra.mxu0 0
        %1688 = vmatprep.subr.bf16.mxu0 0
        %1689 = vmatpush1.bf16.msra.mxu0 0
        %1690 = vmatprep.subr.bf16.mxu0 0
        %1691 = vmatpush1.bf16.msra.mxu0 0
        %1692 = vmatprep.subr.bf16.mxu0 0
        %1693 = vmatpush1.bf16.msra.mxu0 0
        %1694 = vmatprep.subr.bf16.mxu0 0
        %1695 = vmatpush1.bf16.msra.mxu0 0
        %1696 = vmatprep.subr.bf16.mxu0 0
        %1697 = vmatpush1.bf16.msra.mxu0 0
        %1698 = vmatprep.mubr.bf16.mxu0 0
        %1699 = vmatmul.mubr.bf16.gmra.mrb[0].mxu0 %v1594
        %v1700 = vpop.f32.mrb[0].mxu0
        %v1701 = vadd.f32 %v1616, %v1700
        %v1702 = vpop.f32.mrb[0].mxu0
        %v1703 = vpop.f32.mrb[0].mxu0
        %v1704 = vpop.f32.mrb[0].mxu0
        %1705 = vdwg.mxu0
        %v1706 = vadd.f32 %v1491, %v1701
        %v1707 = vld [vmem:[#allocation29] sm:$0x1]
        %v1708 = vld [vmem:[#allocation30] sm:$0x1]
        %v1709 = vsel %vm1447, %v1706, 0.0
        %1710 = vadd.xlane.f32.xlu0 %v1709
        %v1711 = vpop.xlane.xlu0 %1710
        %v1712 = vmul.f32 %v1711, %v1497
        %v1713 = vsub.f32 %v1706, %v1712
        %v1714 = vmul.f32 %v1713, %v1713
        %v1715 = vsel %vm1447, %v1714, 0.0
        %1716 = vadd.xlane.f32.xlu0 %v1715
        %v1717 = vpop.xlane.xlu0 %1716
        %v1718 = vmul.f32 %v1717, %v1497
        %v1719 = vadd.f32 %v1718, 1e-05
        %v1720 = vrsqrt.pop %v1719
        %v1721 = vmul.f32 %v1713, %v1720
        %v1723 = vlaneseq
        %v1724 = vshrl.u32 %v1723, 7
        %v1725 = vsub.s32 0, %v1724
        %v1726 = vrot.slane %v1707, %v1725
        %v1728 = vmul.f32 %v1721, %v1726
        %v1730 = vlaneseq
        %v1731 = vshrl.u32 %v1730, 7
        %v1732 = vsub.s32 0, %v1731
        %v1733 = vrot.slane %v1708, %v1732
        %v1735 = vadd.f32 %v1728, %v1733
        %1736 = vst.msk [vmem:[%s773] sm:$0xff] %vm1447, %v1735
        %s1737 = sand.u32 %s413, 1
        %s1738 = scalar_lea.sflag [#allocation8], %s1737
        %s1739 = sand.u32 %s413, 1
        %s1740 = smul.addr %s1739, 8
        %s1741 = scalar_lea.vmem [#allocation32], %s1740
        // Predicated region
        $region153: #{tpu_custom_call.1} parent=83 // pred_check
          %p1742 = pneg %p423
        $region154: #{tpu_custom_call.1} parent=83 // pred_check_branch
          %1744 = sbr.rel (%p1742) target = $region156
        $region155: #{tpu_custom_call.1} parent=83 // pred_region
          %s1746 = ssub.s32 128, 128
          %1747 = vsyncadd %s1738, %s1746
          %s1748 = sadd.s32 %s48, %s47
          %s1749 = smul.addr %s1748, 128
          %s1750 = scalar_lea.hbm %s16, %s1749
          %s1752 = sshll.u32 %s1741, 4
          %s1753 = int_to_ptr.vmem [resolvable:$true] %s1752
          %1755 = dma.vmem_to_hbm [thread:$0]  %s1753, 128, %s1750, %s1738
        $region156: #{tpu_custom_call.1} parent=83 // pred_fallthru
          _
      $region84: #{tpu_custom_call.1} parent=5 // pred_fallthru
        _
      %p1756 = scmp.le.s32.totalorder 2, %s38
      // Predicated region
      $region157: #{tpu_custom_call.1} parent=5 // pred_check
        %p1757 = pneg %p1756
      $region158: #{tpu_custom_call.1} parent=5 // pred_check_branch
        %1759 = sbr.rel (%p1757) target = $region160
      $region159: #{tpu_custom_call.1} parent=5 // pred_region
        %s1760 = ssub.s32 %s38, 2
        // Predicated region
        $region161: #{tpu_custom_call.1} parent=159 // pred_check
          %p1761 = pneg %p429
        $region162: #{tpu_custom_call.1} parent=159 // pred_check_branch
          %1763 = sbr.rel (%p1761) target = $region164
        $region163: #{tpu_custom_call.1} parent=159 // pred_region
          %s1764 = sand.u32 %s414, 1
          %s1765 = scalar_lea.sflag [#allocation8], %s1764
          %s1766 = sand.u32 %s414, 1
          %s1767 = smul.addr %s1766, 8
          %s1768 = scalar_lea.vmem [#allocation32], %s1767
          %1769 = dma.done %s1765, 128
        $region164: #{tpu_custom_call.1} parent=159 // pred_fallthru
          _
      $region160: #{tpu_custom_call.1} parent=5 // pred_fallthru
        _
    $region6: #{tpu_custom_call.1} parent=1 // loop_footer
      %s42 = sadd.s32 1, %s38
    $region7: #{tpu_custom_call.1} parent=1 // loop_footer_branch
      %37 = sbr.rel target = $region3
    $region8: #{tpu_custom_call.1} parent=1 // loop_exit
      _
    %1770 = vsyncpa [#allocation7], 1
    %s1771 = scalar_lea.sflag [#allocation7], 1
    %1772 = vsyncpa %s1771, 1
    %1773 = vsyncpa [#allocation10], 1
    %s1774 = scalar_lea.sflag [#allocation10], 1
    %1775 = vsyncpa %s1774, 1
    %1776 = vsyncpa [#allocation13], 1
    %1777 = vsyncpa [#allocation16], 1
    %1778 = vsyncpa [#allocation19], 1
    %1779 = vsyncpa [#allocation22], 1
    %1780 = vsyncpa [#allocation25], 1
    %1781 = vsyncpa [#allocation28], 1
    %1782 = vsyncpa [#allocation31], 1
    %1783 = vsyncpa [#allocation8], 1
    %s1784 = scalar_lea.sflag [#allocation8], 1
    %1785 = vsyncpa %s1784, 1

</llo_original>
